<compile_context>
chip_gen: v7x
topology: tpu7x:2x2x1
jax: 0.10.0
libtpu: 0.0.40
codegen_flags: <defaults>
</compile_context>

<pallas_src>
import functools

import jax
import jax.numpy as jnp
import numpy as np
from jax.experimental import pallas as pl
from jax.experimental.pallas import tpu as pltpu


_MXU_DTYPE = jnp.bfloat16          # MXU operand dtype (accumulate in f32)
_VMEM = pl.BlockSpec(memory_space=pltpu.MemorySpace.VMEM)


# ---------------------------------------------------------------------------
# Pallas kernels
# ---------------------------------------------------------------------------
def _lstm_cell(gates, c_prev, H):
    """gates: [B, 4H] f32 pre-activations, PyTorch gate order (i, f, g, o)."""
    i_g = jax.nn.sigmoid(gates[:, 0 * H:1 * H])
    f_g = jax.nn.sigmoid(gates[:, 1 * H:2 * H])
    g_g = jnp.tanh(gates[:, 2 * H:3 * H])
    o_g = jax.nn.sigmoid(gates[:, 3 * H:4 * H])
    c_new = f_g * c_prev + i_g * g_g
    h_new = o_g * jnp.tanh(c_new)
    return h_new, c_new


def bidir_lstm_kernel(x0_ref, x1_ref, wih_ref, whh_ref, b_ref, out_ref, *, S, B, H):
    """Two independent LSTM directions fused in one kernel.

    Direction 0 scans its input forward in time; direction 1 scans its input in
    reverse (implements `.flip(dims=[1])` of the reference without an extra HBM
    pass).  Outputs are written in *processing* order, matching the reference code
    (which never flips backward outputs back).

    x0_ref/x1_ref: [S*B, D]   time-major flattened inputs (bf16)
    wih_ref:       [2, D, 4H] (bf16)   whh_ref: [2, H, 4H] (bf16)
    b_ref:         [2, 1, 4H] (f32, bias_ih + bias_hh)
    out_ref:       [S*B, 2H]  lanes [:H] = dir0 h(t), lanes [H:] = dir1 h(step t)
    """
    # Hoisted input projection: ONE matmul per direction over the whole sequence,
    # bias added once (both removed from the recurrence critical path).
    gin0 = jnp.dot(x0_ref[...], wih_ref[0], preferred_element_type=jnp.float32) + b_ref[0]
    gin1 = jnp.dot(x1_ref[...], wih_ref[1], preferred_element_type=jnp.float32) + b_ref[1]
    whh0 = whh_ref[0]
    whh1 = whh_ref[1]

    h0 = jnp.zeros((B, H), jnp.float32)
    c0 = jnp.zeros((B, H), jnp.float32)
    h1 = jnp.zeros((B, H), jnp.float32)
    c1 = jnp.zeros((B, H), jnp.float32)

    # S is small & static -> fully unrolled; h/c stay in vregs (no scratch traffic).
    for t in range(S):
        r = S - 1 - t                                        # reversed index for dir 1
        g0 = gin0[t * B:(t + 1) * B, :] + jnp.dot(
            h0.astype(whh0.dtype), whh0, preferred_element_type=jnp.float32)
        g1 = gin1[r * B:(r + 1) * B, :] + jnp.dot(
            h1.astype(whh1.dtype), whh1, preferred_element_type=jnp.float32)
        h0, c0 = _lstm_cell(g0, c0, H)
        h1, c1 = _lstm_cell(g1, c1, H)
        out_ref[t * B:(t + 1) * B, 0:H] = h0
        out_ref[t * B:(t + 1) * B, H:2 * H] = h1


def classifier_kernel(xp_ref, wproj_ref, bproj_ref, wih_ref, whh_ref, b_ref,
                      wfc_ref, bfc_ref, logits_ref, *, S, B, H):
    """Fused classifier head: projection mix -> BiLSTM -> last-hidden concat -> fc.

    xp_ref:    [S*B, 4H+D] = [layer_output1 | layer_output2 | embeddings] (bf16)
    wproj_ref: [4H+D, D]   = [W_cf; W_cb; W_ie] (bf16);  bproj_ref: [1, D] (f32, summed)
    wih/whh/b: stacked classifier-LSTM weights (as in bidir_lstm_kernel)
    wfc_ref:   [2H, O] (f32);  bfc_ref: [1, O] (f32);  logits_ref: [B, O]
    """
    # final_embeddings = lo1@Wcf + lo2@Wcb + emb@Wie + (bcf+bcb+bie)  — ONE matmul.
    fe = jnp.dot(xp_ref[...], wproj_ref[...], preferred_element_type=jnp.float32) + bproj_ref[...]
    fe = fe.astype(_MXU_DTYPE)

    # Hoisted input projections for both directions of the classifier BiLSTM.
    gin0 = jnp.dot(fe, wih_ref[0], preferred_element_type=jnp.float32) + b_ref[0]
    gin1 = jnp.dot(fe, wih_ref[1], preferred_element_type=jnp.float32) + b_ref[1]
    whh0 = whh_ref[0]
    whh1 = whh_ref[1]

    h0 = jnp.zeros((B, H), jnp.float32)
    c0 = jnp.zeros((B, H), jnp.float32)
    h1 = jnp.zeros((B, H), jnp.float32)
    c1 = jnp.zeros((B, H), jnp.float32)

    for t in range(S):
        r = S - 1 - t
        g0 = gin0[t * B:(t + 1) * B, :] + jnp.dot(
            h0.astype(whh0.dtype), whh0, preferred_element_type=jnp.float32)
        g1 = gin1[r * B:(r + 1) * B, :] + jnp.dot(
            h1.astype(whh1.dtype), whh1, preferred_element_type=jnp.float32)
        h0, c0 = _lstm_cell(g0, c0, H)
        h1, c1 = _lstm_cell(g1, c1, H)

    # last_hidden_state = cat(lstm_out[:, -1, :H], lstm_out[:, 0, H:]) == cat(h0_final, h1_final)
    # fc folded into the epilogue (no dedicated pallas_call for a [B,2H]x[2H,O] matmul).
    logits_ref[...] = (
        jnp.dot(h0, wfc_ref[0:H, :], preferred_element_type=jnp.float32)
        + jnp.dot(h1, wfc_ref[H:2 * H, :], preferred_element_type=jnp.float32)
        + bfc_ref[...]
    )


# ---------------------------------------------------------------------------
# Pallas wrappers
# ---------------------------------------------------------------------------
def bidir_lstm(x0_tm, x1_tm, lstm_params):
    """x0_tm/x1_tm: [S, B, D] time-major inputs for direction 0 (forward scan) and
    direction 1 (reverse scan).  Returns [S, B, 2H] (dir0 | dir1, processing order)."""
    S, B, D = x0_tm.shape
    wih, whh, b = lstm_params["wih"], lstm_params["whh"], lstm_params["b"]
    H = whh.shape[1]
    x0f = x0_tm.reshape(S * B, D).astype(_MXU_DTYPE)
    x1f = x1_tm.reshape(S * B, D).astype(_MXU_DTYPE)
    out = pl.pallas_call(
        functools.partial(bidir_lstm_kernel, S=S, B=B, H=H),
        out_shape=jax.ShapeDtypeStruct((S * B, 2 * H), jnp.float32),
        in_specs=[_VMEM] * 5,
        out_specs=_VMEM,
    )(x0f, x1f, wih, whh, b)
    return out.reshape(S, B, 2 * H)


def classifier_head(xp_flat, params, S, B, H):
    out_dim = params["w_fc"].shape[1]
    return pl.pallas_call(
        functools.partial(classifier_kernel, S=S, B=B, H=H),
        out_shape=jax.ShapeDtypeStruct((B, out_dim), jnp.float32),
        in_specs=[_VMEM] * 8,
        out_specs=_VMEM,
    )(xp_flat, params["w_proj"], params["b_proj"],
      params["cls"]["wih"], params["cls"]["whh"], params["cls"]["b"],
      params["w_fc"], params["b_fc"])


# ---------------------------------------------------------------------------
# Parameter construction (deterministic, PyTorch-style uniform init)
# ---------------------------------------------------------------------------
def init_lstm_dir_pair(key, in_dim, hid):
    """Two independent LSTM directions stacked on a leading axis, kernel layout:
       wih [2, in_dim, 4H] (bf16), whh [2, hid, 4H] (bf16), b [2, 1, 4H] (f32)."""
    k = 1.0 / np.sqrt(hid)
    keys = jax.random.split(key, 8)

    def one(ks):
        w_ih = jax.random.uniform(ks[0], (4 * hid, in_dim), jnp.float32, -k, k)  # PyTorch layout
        w_hh = jax.random.uniform(ks[1], (4 * hid, hid), jnp.float32, -k, k)
        b_ih = jax.random.uniform(ks[2], (4 * hid,), jnp.float32, -k, k)
        b_hh = jax.random.uniform(ks[3], (4 * hid,), jnp.float32, -k, k)
        return w_ih.T, w_hh.T, (b_ih + b_hh)[None, :]

    w0, u0, b0 = one(keys[:4])
    w1, u1, b1 = one(keys[4:])
    return dict(
        wih=jnp.stack([w0, w1]).astype(_MXU_DTYPE),
        whh=jnp.stack([u0, u1]).astype(_MXU_DTYPE),
        b=jnp.stack([b0, b1]),
    )


def init_linear_params(key, in_dim, out_dim):
    k = 1.0 / np.sqrt(in_dim)
    k1, k2 = jax.random.split(key)
    w = jax.random.uniform(k1, (out_dim, in_dim), jnp.float32, -k, k)  # PyTorch layout
    b = jax.random.uniform(k2, (out_dim,), jnp.float32, -k, k)
    return w.T, b[None, :]                                             # kernel layout


def build_params(key, vocab, input_size, hidden_size, output_size):
    keys = jax.random.split(key, 8)
    p = {}
    p["embedding"] = jax.random.normal(keys[0], (vocab, input_size), jnp.float32) * 0.1
    # ELMo internals: layer-1 (fwd1,bwd1), layer-2 (fwd2,bwd2); classifier BiLSTM
    p["l1"] = init_lstm_dir_pair(keys[1], input_size, hidden_size)
    p["l2"] = init_lstm_dir_pair(keys[2], hidden_size, hidden_size)
    p["cls"] = init_lstm_dir_pair(keys[3], input_size, hidden_size)
    # the three mixing linears, fused into a single [4H+D, D] matmul + one bias
    w_cf, b_cf = init_linear_params(keys[4], 2 * hidden_size, input_size)
    w_cb, b_cb = init_linear_params(keys[5], 2 * hidden_size, input_size)
    w_ie, b_ie = init_linear_params(keys[6], input_size, input_size)
    p["w_proj"] = jnp.concatenate([w_cf, w_cb, w_ie], axis=0).astype(_MXU_DTYPE)
    p["b_proj"] = b_cf + b_cb + b_ie
    # final fc layer (folded into the classifier kernel epilogue)
    p["w_fc"], p["b_fc"] = init_linear_params(keys[7], 2 * hidden_size, output_size)
    return p


# ---------------------------------------------------------------------------
# Full forward pass (mirrors Model_lrnfn.forward)
# ---------------------------------------------------------------------------
def model_lrnfn_forward(params, input_seq, hidden_size):
    B, S = input_seq.shape
    H = hidden_size

    # embeddings = elmo.module.embedding(input_seq)
    emb = jnp.take(params["embedding"], input_seq, axis=0)          # [B, S, D]
    emb_tm = jnp.transpose(emb, (1, 0, 2))                          # time-major [S, B, D]
    D = emb_tm.shape[-1]

    # ELMo layer 1: forward_lstm1(emb) + backward_lstm1(flip(emb)) in ONE fused call.
    out1 = bidir_lstm(emb_tm, emb_tm, params["l1"])                 # [S, B, 2H] == layer_output1
    # ELMo layer 2: forward_lstm2(fwd1) + backward_lstm2(flip(bwd1)); the flip is
    # realized by the kernel's reversed scan of direction 1 (no jnp.flip).
    out2 = bidir_lstm(out1[..., :H], out1[..., H:], params["l2"])   # [S, B, 2H] == layer_output2

    # Fused classifier head: projection mix + BiLSTM + last-hidden concat + fc_layer.
    xp = jnp.concatenate([out1, out2, emb_tm], axis=-1)             # [S, B, 4H+D]
    xp = xp.reshape(S * B, 4 * H + D).astype(_MXU_DTYPE)
    logits = classifier_head(xp, params, S, B, H)                   # [B, output_size]
    return logits


# ---------------------------------------------------------------------------
if __name__ == "__main__":
    batch = 2
    seq = 8
    vocab = 50
    input_size = 32      # embd_size == input_size (required by linear_input_embedded)
    hidden_size = 32
    output_size = 4      # num_classes

    key = jax.random.PRNGKey(0)
    k_param, k_tok = jax.random.split(key)
    params = build_params(k_param, vocab, input_size, hidden_size, output_size)
    input_seq = jax.random.randint(k_tok, (batch, seq), 0, vocab, dtype=jnp.int32)

    forward = jax.jit(lambda p, x: model_lrnfn_forward(p, x, hidden_size))
    logits = forward(params, input_seq)
    jax.block_until_ready(logits)
    assert logits.shape == (batch, output_size)
    assert bool(jnp.all(jnp.isfinite(logits)))
    # predict() equivalent (argmax over classes) — plain JAX glue
    _ = jax.block_until_ready(jnp.argmax(logits, axis=1))
    print("KERNEL_OK")
</pallas_src>

<mosaic_0001>
module attributes {stable_mosaic.version = 11 : i64} {
  func.func @bidir_lstm_kernel(%arg0: memref<16x32xbf16, #tpu.memory_space<vmem>>, %arg1: memref<16x32xbf16, #tpu.memory_space<vmem>>, %arg2: memref<2x32x128xbf16, #tpu.memory_space<vmem>>, %arg3: memref<2x32x128xbf16, #tpu.memory_space<vmem>>, %arg4: memref<2x1x128xf32, #tpu.memory_space<vmem>>, %arg5: memref<16x64xf32, #tpu.memory_space<vmem>>) attributes {dimension_semantics = [], scalar_prefetch = 0 : i64, scratch_operands = 0 : i64, tpu.core_type = #tpu.core_type<tc>} {
    %c0 = arith.constant 0 : index
    %c0_0 = arith.constant 0 : index
    %0 = vector.load %arg0[%c0, %c0_0] : memref<16x32xbf16, #tpu.memory_space<vmem>>, vector<16x32xbf16>
    %c0_1 = arith.constant 0 : index
    %c0_2 = arith.constant 0 : index
    %c0_3 = arith.constant 0 : index
    %1 = vector.load %arg2[%c0_1, %c0_2, %c0_3] : memref<2x32x128xbf16, #tpu.memory_space<vmem>>, vector<1x32x128xbf16>
    %2 = vector.shape_cast %1 : vector<1x32x128xbf16> to vector<32x128xbf16>
    %cst = arith.constant dense<0.000000e+00> : vector<16x128xf32>
    %3 = tpu.matmul %0, %2, %cst {dimension_numbers = #tpu.dot_dimension_numbers<[1], [0], [0], [1], [0, 0, 1, 1], [], []>} : vector<16x32xbf16>, vector<32x128xbf16>, vector<16x128xf32> -> vector<16x128xf32>
    %c0_4 = arith.constant 0 : index
    %c0_5 = arith.constant 0 : index
    %c0_6 = arith.constant 0 : index
    %4 = vector.load %arg4[%c0_4, %c0_5, %c0_6] : memref<2x1x128xf32, #tpu.memory_space<vmem>>, vector<1x1x128xf32>
    %5 = vector.shape_cast %4 : vector<1x1x128xf32> to vector<1x128xf32>
    %6 = vector.broadcast %5 : vector<1x128xf32> to vector<16x128xf32>
    %7 = arith.addf %3, %6 : vector<16x128xf32>
    %c0_7 = arith.constant 0 : index
    %c0_8 = arith.constant 0 : index
    %8 = vector.load %arg1[%c0_7, %c0_8] : memref<16x32xbf16, #tpu.memory_space<vmem>>, vector<16x32xbf16>
    %c1 = arith.constant 1 : index
    %c0_9 = arith.constant 0 : index
    %c0_10 = arith.constant 0 : index
    %9 = vector.load %arg2[%c1, %c0_9, %c0_10] : memref<2x32x128xbf16, #tpu.memory_space<vmem>>, vector<1x32x128xbf16>
    %10 = vector.shape_cast %9 : vector<1x32x128xbf16> to vector<32x128xbf16>
    %cst_11 = arith.constant dense<0.000000e+00> : vector<16x128xf32>
    %11 = tpu.matmul %8, %10, %cst_11 {dimension_numbers = #tpu.dot_dimension_numbers<[1], [0], [0], [1], [0, 0, 1, 1], [], []>} : vector<16x32xbf16>, vector<32x128xbf16>, vector<16x128xf32> -> vector<16x128xf32>
    %c1_12 = arith.constant 1 : index
    %c0_13 = arith.constant 0 : index
    %c0_14 = arith.constant 0 : index
    %12 = vector.load %arg4[%c1_12, %c0_13, %c0_14] : memref<2x1x128xf32, #tpu.memory_space<vmem>>, vector<1x1x128xf32>
    %13 = vector.shape_cast %12 : vector<1x1x128xf32> to vector<1x128xf32>
    %14 = vector.broadcast %13 : vector<1x128xf32> to vector<16x128xf32>
    %15 = arith.addf %11, %14 : vector<16x128xf32>
    %c0_15 = arith.constant 0 : index
    %c0_16 = arith.constant 0 : index
    %c0_17 = arith.constant 0 : index
    %16 = vector.load %arg3[%c0_15, %c0_16, %c0_17] : memref<2x32x128xbf16, #tpu.memory_space<vmem>>, vector<1x32x128xbf16>
    %17 = vector.shape_cast %16 : vector<1x32x128xbf16> to vector<32x128xbf16>
    %c1_18 = arith.constant 1 : index
    %c0_19 = arith.constant 0 : index
    %c0_20 = arith.constant 0 : index
    %18 = vector.load %arg3[%c1_18, %c0_19, %c0_20] : memref<2x32x128xbf16, #tpu.memory_space<vmem>>, vector<1x32x128xbf16>
    %19 = vector.shape_cast %18 : vector<1x32x128xbf16> to vector<32x128xbf16>
    %cst_21 = arith.constant 0.000000e+00 : f32
    %20 = vector.broadcast %cst_21 : f32 to vector<2x32xf32>
    %cst_22 = arith.constant 0.000000e+00 : f32
    %21 = vector.broadcast %cst_22 : f32 to vector<2x32xf32>
    %cst_23 = arith.constant 0.000000e+00 : f32
    %22 = vector.broadcast %cst_23 : f32 to vector<2x32xf32>
    %cst_24 = arith.constant 0.000000e+00 : f32
    %23 = vector.broadcast %cst_24 : f32 to vector<2x32xf32>
    %24 = vector.extract_strided_slice %7 {offsets = [0, 0], sizes = [2, 128], strides = [1, 1]} : vector<16x128xf32> to vector<2x128xf32>
    %25 = arith.truncf %20 : vector<2x32xf32> to vector<2x32xbf16>
    %cst_25 = arith.constant dense<0.000000e+00> : vector<2x128xf32>
    %26 = tpu.matmul %25, %17, %cst_25 {dimension_numbers = #tpu.dot_dimension_numbers<[1], [0], [0], [1], [0, 0, 1, 1], [], []>} : vector<2x32xbf16>, vector<32x128xbf16>, vector<2x128xf32> -> vector<2x128xf32>
    %27 = arith.addf %24, %26 : vector<2x128xf32>
    %28 = vector.extract_strided_slice %15 {offsets = [14, 0], sizes = [2, 128], strides = [1, 1]} : vector<16x128xf32> to vector<2x128xf32>
    %29 = arith.truncf %22 : vector<2x32xf32> to vector<2x32xbf16>
    %cst_26 = arith.constant dense<0.000000e+00> : vector<2x128xf32>
    %30 = tpu.matmul %29, %19, %cst_26 {dimension_numbers = #tpu.dot_dimension_numbers<[1], [0], [0], [1], [0, 0, 1, 1], [], []>} : vector<2x32xbf16>, vector<32x128xbf16>, vector<2x128xf32> -> vector<2x128xf32>
    %31 = arith.addf %28, %30 : vector<2x128xf32>
    %32 = vector.extract_strided_slice %27 {offsets = [0, 0], sizes = [2, 32], strides = [1, 1]} : vector<2x128xf32> to vector<2x32xf32>
    %33 = arith.negf %32 : vector<2x32xf32>
    %34 = math.exp %33 : vector<2x32xf32>
    %cst_27 = arith.constant 1.000000e+00 : f32
    %35 = vector.broadcast %cst_27 : f32 to vector<2x32xf32>
    %36 = arith.addf %35, %34 : vector<2x32xf32>
    %37 = arith.divf %35, %36 : vector<2x32xf32>
    %38 = vector.extract_strided_slice %27 {offsets = [0, 32], sizes = [2, 32], strides = [1, 1]} : vector<2x128xf32> to vector<2x32xf32>
    %39 = arith.negf %38 : vector<2x32xf32>
    %40 = math.exp %39 : vector<2x32xf32>
    %cst_28 = arith.constant 1.000000e+00 : f32
    %41 = vector.broadcast %cst_28 : f32 to vector<2x32xf32>
    %42 = arith.addf %41, %40 : vector<2x32xf32>
    %43 = arith.divf %41, %42 : vector<2x32xf32>
    %44 = vector.extract_strided_slice %27 {offsets = [0, 64], sizes = [2, 32], strides = [1, 1]} : vector<2x128xf32> to vector<2x32xf32>
    %45 = math.tanh %44 : vector<2x32xf32>
    %46 = vector.extract_strided_slice %27 {offsets = [0, 96], sizes = [2, 32], strides = [1, 1]} : vector<2x128xf32> to vector<2x32xf32>
    %47 = arith.negf %46 : vector<2x32xf32>
    %48 = math.exp %47 : vector<2x32xf32>
    %cst_29 = arith.constant 1.000000e+00 : f32
    %49 = vector.broadcast %cst_29 : f32 to vector<2x32xf32>
    %50 = arith.addf %49, %48 : vector<2x32xf32>
    %51 = arith.divf %49, %50 : vector<2x32xf32>
    %52 = arith.mulf %43, %21 : vector<2x32xf32>
    %53 = arith.mulf %37, %45 : vector<2x32xf32>
    %54 = arith.addf %52, %53 : vector<2x32xf32>
    %55 = math.tanh %54 : vector<2x32xf32>
    %56 = arith.mulf %51, %55 : vector<2x32xf32>
    %57 = vector.extract_strided_slice %31 {offsets = [0, 0], sizes = [2, 32], strides = [1, 1]} : vector<2x128xf32> to vector<2x32xf32>
    %58 = arith.negf %57 : vector<2x32xf32>
    %59 = math.exp %58 : vector<2x32xf32>
    %cst_30 = arith.constant 1.000000e+00 : f32
    %60 = vector.broadcast %cst_30 : f32 to vector<2x32xf32>
    %61 = arith.addf %60, %59 : vector<2x32xf32>
    %62 = arith.divf %60, %61 : vector<2x32xf32>
    %63 = vector.extract_strided_slice %31 {offsets = [0, 32], sizes = [2, 32], strides = [1, 1]} : vector<2x128xf32> to vector<2x32xf32>
    %64 = arith.negf %63 : vector<2x32xf32>
    %65 = math.exp %64 : vector<2x32xf32>
    %cst_31 = arith.constant 1.000000e+00 : f32
    %66 = vector.broadcast %cst_31 : f32 to vector<2x32xf32>
    %67 = arith.addf %66, %65 : vector<2x32xf32>
    %68 = arith.divf %66, %67 : vector<2x32xf32>
    %69 = vector.extract_strided_slice %31 {offsets = [0, 64], sizes = [2, 32], strides = [1, 1]} : vector<2x128xf32> to vector<2x32xf32>
    %70 = math.tanh %69 : vector<2x32xf32>
    %71 = vector.extract_strided_slice %31 {offsets = [0, 96], sizes = [2, 32], strides = [1, 1]} : vector<2x128xf32> to vector<2x32xf32>
    %72 = arith.negf %71 : vector<2x32xf32>
    %73 = math.exp %72 : vector<2x32xf32>
    %cst_32 = arith.constant 1.000000e+00 : f32
    %74 = vector.broadcast %cst_32 : f32 to vector<2x32xf32>
    %75 = arith.addf %74, %73 : vector<2x32xf32>
    %76 = arith.divf %74, %75 : vector<2x32xf32>
    %77 = arith.mulf %68, %23 : vector<2x32xf32>
    %78 = arith.mulf %62, %70 : vector<2x32xf32>
    %79 = arith.addf %77, %78 : vector<2x32xf32>
    %80 = math.tanh %79 : vector<2x32xf32>
    %81 = arith.mulf %76, %80 : vector<2x32xf32>
    %c0_33 = arith.constant 0 : index
    %c0_34 = arith.constant 0 : index
    %82 = vector.load %arg5[%c0_33, %c0_34] : memref<16x64xf32, #tpu.memory_space<vmem>>, vector<2x32xf32>
    tpu.vector_store %arg5[%c0_33, %c0_34], %56 {strides = array<i32>} : memref<16x64xf32, #tpu.memory_space<vmem>>, vector<2x32xf32>,
    %c0_35 = arith.constant 0 : index
    %c32 = arith.constant 32 : index
    %83 = vector.load %arg5[%c0_35, %c32] : memref<16x64xf32, #tpu.memory_space<vmem>>, vector<2x32xf32>
    tpu.vector_store %arg5[%c0_35, %c32], %81 {strides = array<i32>} : memref<16x64xf32, #tpu.memory_space<vmem>>, vector<2x32xf32>,
    %84 = vector.extract_strided_slice %7 {offsets = [2, 0], sizes = [2, 128], strides = [1, 1]} : vector<16x128xf32> to vector<2x128xf32>
    %85 = arith.truncf %56 : vector<2x32xf32> to vector<2x32xbf16>
    %cst_36 = arith.constant dense<0.000000e+00> : vector<2x128xf32>
    %86 = tpu.matmul %85, %17, %cst_36 {dimension_numbers = #tpu.dot_dimension_numbers<[1], [0], [0], [1], [0, 0, 1, 1], [], []>} : vector<2x32xbf16>, vector<32x128xbf16>, vector<2x128xf32> -> vector<2x128xf32>
    %87 = arith.addf %84, %86 : vector<2x128xf32>
    %88 = vector.extract_strided_slice %15 {offsets = [12, 0], sizes = [2, 128], strides = [1, 1]} : vector<16x128xf32> to vector<2x128xf32>
    %89 = arith.truncf %81 : vector<2x32xf32> to vector<2x32xbf16>
    %cst_37 = arith.constant dense<0.000000e+00> : vector<2x128xf32>
    %90 = tpu.matmul %89, %19, %cst_37 {dimension_numbers = #tpu.dot_dimension_numbers<[1], [0], [0], [1], [0, 0, 1, 1], [], []>} : vector<2x32xbf16>, vector<32x128xbf16>, vector<2x128xf32> -> vector<2x128xf32>
    %91 = arith.addf %88, %90 : vector<2x128xf32>
    %92 = vector.extract_strided_slice %87 {offsets = [0, 0], sizes = [2, 32], strides = [1, 1]} : vector<2x128xf32> to vector<2x32xf32>
    %93 = arith.negf %92 : vector<2x32xf32>
    %94 = math.exp %93 : vector<2x32xf32>
    %cst_38 = arith.constant 1.000000e+00 : f32
    %95 = vector.broadcast %cst_38 : f32 to vector<2x32xf32>
    %96 = arith.addf %95, %94 : vector<2x32xf32>
    %97 = arith.divf %95, %96 : vector<2x32xf32>
    %98 = vector.extract_strided_slice %87 {offsets = [0, 32], sizes = [2, 32], strides = [1, 1]} : vector<2x128xf32> to vector<2x32xf32>
    %99 = arith.negf %98 : vector<2x32xf32>
    %100 = math.exp %99 : vector<2x32xf32>
    %cst_39 = arith.constant 1.000000e+00 : f32
    %101 = vector.broadcast %cst_39 : f32 to vector<2x32xf32>
    %102 = arith.addf %101, %100 : vector<2x32xf32>
    %103 = arith.divf %101, %102 : vector<2x32xf32>
    %104 = vector.extract_strided_slice %87 {offsets = [0, 64], sizes = [2, 32], strides = [1, 1]} : vector<2x128xf32> to vector<2x32xf32>
    %105 = math.tanh %104 : vector<2x32xf32>
    %106 = vector.extract_strided_slice %87 {offsets = [0, 96], sizes = [2, 32], strides = [1, 1]} : vector<2x128xf32> to vector<2x32xf32>
    %107 = arith.negf %106 : vector<2x32xf32>
    %108 = math.exp %107 : vector<2x32xf32>
    %cst_40 = arith.constant 1.000000e+00 : f32
    %109 = vector.broadcast %cst_40 : f32 to vector<2x32xf32>
    %110 = arith.addf %109, %108 : vector<2x32xf32>
    %111 = arith.divf %109, %110 : vector<2x32xf32>
    %112 = arith.mulf %103, %54 : vector<2x32xf32>
    %113 = arith.mulf %97, %105 : vector<2x32xf32>
    %114 = arith.addf %112, %113 : vector<2x32xf32>
    %115 = math.tanh %114 : vector<2x32xf32>
    %116 = arith.mulf %111, %115 : vector<2x32xf32>
    %117 = vector.extract_strided_slice %91 {offsets = [0, 0], sizes = [2, 32], strides = [1, 1]} : vector<2x128xf32> to vector<2x32xf32>
    %118 = arith.negf %117 : vector<2x32xf32>
    %119 = math.exp %118 : vector<2x32xf32>
    %cst_41 = arith.constant 1.000000e+00 : f32
    %120 = vector.broadcast %cst_41 : f32 to vector<2x32xf32>
    %121 = arith.addf %120, %119 : vector<2x32xf32>
    %122 = arith.divf %120, %121 : vector<2x32xf32>
    %123 = vector.extract_strided_slice %91 {offsets = [0, 32], sizes = [2, 32], strides = [1, 1]} : vector<2x128xf32> to vector<2x32xf32>
    %124 = arith.negf %123 : vector<2x32xf32>
    %125 = math.exp %124 : vector<2x32xf32>
    %cst_42 = arith.constant 1.000000e+00 : f32
    %126 = vector.broadcast %cst_42 : f32 to vector<2x32xf32>
    %127 = arith.addf %126, %125 : vector<2x32xf32>
    %128 = arith.divf %126, %127 : vector<2x32xf32>
    %129 = vector.extract_strided_slice %91 {offsets = [0, 64], sizes = [2, 32], strides = [1, 1]} : vector<2x128xf32> to vector<2x32xf32>
    %130 = math.tanh %129 : vector<2x32xf32>
    %131 = vector.extract_strided_slice %91 {offsets = [0, 96], sizes = [2, 32], strides = [1, 1]} : vector<2x128xf32> to vector<2x32xf32>
    %132 = arith.negf %131 : vector<2x32xf32>
    %133 = math.exp %132 : vector<2x32xf32>
    %cst_43 = arith.constant 1.000000e+00 : f32
    %134 = vector.broadcast %cst_43 : f32 to vector<2x32xf32>
    %135 = arith.addf %134, %133 : vector<2x32xf32>
    %136 = arith.divf %134, %135 : vector<2x32xf32>
    %137 = arith.mulf %128, %79 : vector<2x32xf32>
    %138 = arith.mulf %122, %130 : vector<2x32xf32>
    %139 = arith.addf %137, %138 : vector<2x32xf32>
    %140 = math.tanh %139 : vector<2x32xf32>
    %141 = arith.mulf %136, %140 : vector<2x32xf32>
    %c2 = arith.constant 2 : index
    %c0_44 = arith.constant 0 : index
    %142 = vector.load %arg5[%c2, %c0_44] : memref<16x64xf32, #tpu.memory_space<vmem>>, vector<2x32xf32>
    tpu.vector_store %arg5[%c2, %c0_44], %116 {strides = array<i32>} : memref<16x64xf32, #tpu.memory_space<vmem>>, vector<2x32xf32>,
    %c2_45 = arith.constant 2 : index
    %c32_46 = arith.constant 32 : index
    %143 = vector.load %arg5[%c2_45, %c32_46] : memref<16x64xf32, #tpu.memory_space<vmem>>, vector<2x32xf32>
    tpu.vector_store %arg5[%c2_45, %c32_46], %141 {strides = array<i32>} : memref<16x64xf32, #tpu.memory_space<vmem>>, vector<2x32xf32>,
    %144 = vector.extract_strided_slice %7 {offsets = [4, 0], sizes = [2, 128], strides = [1, 1]} : vector<16x128xf32> to vector<2x128xf32>
    %145 = arith.truncf %116 : vector<2x32xf32> to vector<2x32xbf16>
    %cst_47 = arith.constant dense<0.000000e+00> : vector<2x128xf32>
    %146 = tpu.matmul %145, %17, %cst_47 {dimension_numbers = #tpu.dot_dimension_numbers<[1], [0], [0], [1], [0, 0, 1, 1], [], []>} : vector<2x32xbf16>, vector<32x128xbf16>, vector<2x128xf32> -> vector<2x128xf32>
    %147 = arith.addf %144, %146 : vector<2x128xf32>
    %148 = vector.extract_strided_slice %15 {offsets = [10, 0], sizes = [2, 128], strides = [1, 1]} : vector<16x128xf32> to vector<2x128xf32>
    %149 = arith.truncf %141 : vector<2x32xf32> to vector<2x32xbf16>
    %cst_48 = arith.constant dense<0.000000e+00> : vector<2x128xf32>
    %150 = tpu.matmul %149, %19, %cst_48 {dimension_numbers = #tpu.dot_dimension_numbers<[1], [0], [0], [1], [0, 0, 1, 1], [], []>} : vector<2x32xbf16>, vector<32x128xbf16>, vector<2x128xf32> -> vector<2x128xf32>
    %151 = arith.addf %148, %150 : vector<2x128xf32>
    %152 = vector.extract_strided_slice %147 {offsets = [0, 0], sizes = [2, 32], strides = [1, 1]} : vector<2x128xf32> to vector<2x32xf32>
    %153 = arith.negf %152 : vector<2x32xf32>
    %154 = math.exp %153 : vector<2x32xf32>
    %cst_49 = arith.constant 1.000000e+00 : f32
    %155 = vector.broadcast %cst_49 : f32 to vector<2x32xf32>
    %156 = arith.addf %155, %154 : vector<2x32xf32>
    %157 = arith.divf %155, %156 : vector<2x32xf32>
    %158 = vector.extract_strided_slice %147 {offsets = [0, 32], sizes = [2, 32], strides = [1, 1]} : vector<2x128xf32> to vector<2x32xf32>
    %159 = arith.negf %158 : vector<2x32xf32>
    %160 = math.exp %159 : vector<2x32xf32>
    %cst_50 = arith.constant 1.000000e+00 : f32
    %161 = vector.broadcast %cst_50 : f32 to vector<2x32xf32>
    %162 = arith.addf %161, %160 : vector<2x32xf32>
    %163 = arith.divf %161, %162 : vector<2x32xf32>
    %164 = vector.extract_strided_slice %147 {offsets = [0, 64], sizes = [2, 32], strides = [1, 1]} : vector<2x128xf32> to vector<2x32xf32>
    %165 = math.tanh %164 : vector<2x32xf32>
    %166 = vector.extract_strided_slice %147 {offsets = [0, 96], sizes = [2, 32], strides = [1, 1]} : vector<2x128xf32> to vector<2x32xf32>
    %167 = arith.negf %166 : vector<2x32xf32>
    %168 = math.exp %167 : vector<2x32xf32>
    %cst_51 = arith.constant 1.000000e+00 : f32
    %169 = vector.broadcast %cst_51 : f32 to vector<2x32xf32>
    %170 = arith.addf %169, %168 : vector<2x32xf32>
    %171 = arith.divf %169, %170 : vector<2x32xf32>
    %172 = arith.mulf %163, %114 : vector<2x32xf32>
    %173 = arith.mulf %157, %165 : vector<2x32xf32>
    %174 = arith.addf %172, %173 : vector<2x32xf32>
    %175 = math.tanh %174 : vector<2x32xf32>
    %176 = arith.mulf %171, %175 : vector<2x32xf32>
    %177 = vector.extract_strided_slice %151 {offsets = [0, 0], sizes = [2, 32], strides = [1, 1]} : vector<2x128xf32> to vector<2x32xf32>
    %178 = arith.negf %177 : vector<2x32xf32>
    %179 = math.exp %178 : vector<2x32xf32>
    %cst_52 = arith.constant 1.000000e+00 : f32
    %180 = vector.broadcast %cst_52 : f32 to vector<2x32xf32>
    %181 = arith.addf %180, %179 : vector<2x32xf32>
    %182 = arith.divf %180, %181 : vector<2x32xf32>
    %183 = vector.extract_strided_slice %151 {offsets = [0, 32], sizes = [2, 32], strides = [1, 1]} : vector<2x128xf32> to vector<2x32xf32>
    %184 = arith.negf %183 : vector<2x32xf32>
    %185 = math.exp %184 : vector<2x32xf32>
    %cst_53 = arith.constant 1.000000e+00 : f32
    %186 = vector.broadcast %cst_53 : f32 to vector<2x32xf32>
    %187 = arith.addf %186, %185 : vector<2x32xf32>
    %188 = arith.divf %186, %187 : vector<2x32xf32>
    %189 = vector.extract_strided_slice %151 {offsets = [0, 64], sizes = [2, 32], strides = [1, 1]} : vector<2x128xf32> to vector<2x32xf32>
    %190 = math.tanh %189 : vector<2x32xf32>
    %191 = vector.extract_strided_slice %151 {offsets = [0, 96], sizes = [2, 32], strides = [1, 1]} : vector<2x128xf32> to vector<2x32xf32>
    %192 = arith.negf %191 : vector<2x32xf32>
    %193 = math.exp %192 : vector<2x32xf32>
    %cst_54 = arith.constant 1.000000e+00 : f32
    %194 = vector.broadcast %cst_54 : f32 to vector<2x32xf32>
    %195 = arith.addf %194, %193 : vector<2x32xf32>
    %196 = arith.divf %194, %195 : vector<2x32xf32>
    %197 = arith.mulf %188, %139 : vector<2x32xf32>
    %198 = arith.mulf %182, %190 : vector<2x32xf32>
    %199 = arith.addf %197, %198 : vector<2x32xf32>
    %200 = math.tanh %199 : vector<2x32xf32>
    %201 = arith.mulf %196, %200 : vector<2x32xf32>
    %c4 = arith.constant 4 : index
    %c0_55 = arith.constant 0 : index
    %202 = vector.load %arg5[%c4, %c0_55] : memref<16x64xf32, #tpu.memory_space<vmem>>, vector<2x32xf32>
    tpu.vector_store %arg5[%c4, %c0_55], %176 {strides = array<i32>} : memref<16x64xf32, #tpu.memory_space<vmem>>, vector<2x32xf32>,
    %c4_56 = arith.constant 4 : index
    %c32_57 = arith.constant 32 : index
    %203 = vector.load %arg5[%c4_56, %c32_57] : memref<16x64xf32, #tpu.memory_space<vmem>>, vector<2x32xf32>
    tpu.vector_store %arg5[%c4_56, %c32_57], %201 {strides = array<i32>} : memref<16x64xf32, #tpu.memory_space<vmem>>, vector<2x32xf32>,
    %204 = vector.extract_strided_slice %7 {offsets = [6, 0], sizes = [2, 128], strides = [1, 1]} : vector<16x128xf32> to vector<2x128xf32>
    %205 = arith.truncf %176 : vector<2x32xf32> to vector<2x32xbf16>
    %cst_58 = arith.constant dense<0.000000e+00> : vector<2x128xf32>
    %206 = tpu.matmul %205, %17, %cst_58 {dimension_numbers = #tpu.dot_dimension_numbers<[1], [0], [0], [1], [0, 0, 1, 1], [], []>} : vector<2x32xbf16>, vector<32x128xbf16>, vector<2x128xf32> -> vector<2x128xf32>
    %207 = arith.addf %204, %206 : vector<2x128xf32>
    %208 = vector.extract_strided_slice %15 {offsets = [8, 0], sizes = [2, 128], strides = [1, 1]} : vector<16x128xf32> to vector<2x128xf32>
    %209 = arith.truncf %201 : vector<2x32xf32> to vector<2x32xbf16>
    %cst_59 = arith.constant dense<0.000000e+00> : vector<2x128xf32>
    %210 = tpu.matmul %209, %19, %cst_59 {dimension_numbers = #tpu.dot_dimension_numbers<[1], [0], [0], [1], [0, 0, 1, 1], [], []>} : vector<2x32xbf16>, vector<32x128xbf16>, vector<2x128xf32> -> vector<2x128xf32>
    %211 = arith.addf %208, %210 : vector<2x128xf32>
    %212 = vector.extract_strided_slice %207 {offsets = [0, 0], sizes = [2, 32], strides = [1, 1]} : vector<2x128xf32> to vector<2x32xf32>
    %213 = arith.negf %212 : vector<2x32xf32>
    %214 = math.exp %213 : vector<2x32xf32>
    %cst_60 = arith.constant 1.000000e+00 : f32
    %215 = vector.broadcast %cst_60 : f32 to vector<2x32xf32>
    %216 = arith.addf %215, %214 : vector<2x32xf32>
    %217 = arith.divf %215, %216 : vector<2x32xf32>
    %218 = vector.extract_strided_slice %207 {offsets = [0, 32], sizes = [2, 32], strides = [1, 1]} : vector<2x128xf32> to vector<2x32xf32>
    %219 = arith.negf %218 : vector<2x32xf32>
    %220 = math.exp %219 : vector<2x32xf32>
    %cst_61 = arith.constant 1.000000e+00 : f32
    %221 = vector.broadcast %cst_61 : f32 to vector<2x32xf32>
    %222 = arith.addf %221, %220 : vector<2x32xf32>
    %223 = arith.divf %221, %222 : vector<2x32xf32>
    %224 = vector.extract_strided_slice %207 {offsets = [0, 64], sizes = [2, 32], strides = [1, 1]} : vector<2x128xf32> to vector<2x32xf32>
    %225 = math.tanh %224 : vector<2x32xf32>
    %226 = vector.extract_strided_slice %207 {offsets = [0, 96], sizes = [2, 32], strides = [1, 1]} : vector<2x128xf32> to vector<2x32xf32>
    %227 = arith.negf %226 : vector<2x32xf32>
    %228 = math.exp %227 : vector<2x32xf32>
    %cst_62 = arith.constant 1.000000e+00 : f32
    %229 = vector.broadcast %cst_62 : f32 to vector<2x32xf32>
    %230 = arith.addf %229, %228 : vector<2x32xf32>
    %231 = arith.divf %229, %230 : vector<2x32xf32>
    %232 = arith.mulf %223, %174 : vector<2x32xf32>
    %233 = arith.mulf %217, %225 : vector<2x32xf32>
    %234 = arith.addf %232, %233 : vector<2x32xf32>
    %235 = math.tanh %234 : vector<2x32xf32>
    %236 = arith.mulf %231, %235 : vector<2x32xf32>
    %237 = vector.extract_strided_slice %211 {offsets = [0, 0], sizes = [2, 32], strides = [1, 1]} : vector<2x128xf32> to vector<2x32xf32>
    %238 = arith.negf %237 : vector<2x32xf32>
    %239 = math.exp %238 : vector<2x32xf32>
    %cst_63 = arith.constant 1.000000e+00 : f32
    %240 = vector.broadcast %cst_63 : f32 to vector<2x32xf32>
    %241 = arith.addf %240, %239 : vector<2x32xf32>
    %242 = arith.divf %240, %241 : vector<2x32xf32>
    %243 = vector.extract_strided_slice %211 {offsets = [0, 32], sizes = [2, 32], strides = [1, 1]} : vector<2x128xf32> to vector<2x32xf32>
    %244 = arith.negf %243 : vector<2x32xf32>
    %245 = math.exp %244 : vector<2x32xf32>
    %cst_64 = arith.constant 1.000000e+00 : f32
    %246 = vector.broadcast %cst_64 : f32 to vector<2x32xf32>
    %247 = arith.addf %246, %245 : vector<2x32xf32>
    %248 = arith.divf %246, %247 : vector<2x32xf32>
    %249 = vector.extract_strided_slice %211 {offsets = [0, 64], sizes = [2, 32], strides = [1, 1]} : vector<2x128xf32> to vector<2x32xf32>
    %250 = math.tanh %249 : vector<2x32xf32>
    %251 = vector.extract_strided_slice %211 {offsets = [0, 96], sizes = [2, 32], strides = [1, 1]} : vector<2x128xf32> to vector<2x32xf32>
    %252 = arith.negf %251 : vector<2x32xf32>
    %253 = math.exp %252 : vector<2x32xf32>
    %cst_65 = arith.constant 1.000000e+00 : f32
    %254 = vector.broadcast %cst_65 : f32 to vector<2x32xf32>
    %255 = arith.addf %254, %253 : vector<2x32xf32>
    %256 = arith.divf %254, %255 : vector<2x32xf32>
    %257 = arith.mulf %248, %199 : vector<2x32xf32>
    %258 = arith.mulf %242, %250 : vector<2x32xf32>
    %259 = arith.addf %257, %258 : vector<2x32xf32>
    %260 = math.tanh %259 : vector<2x32xf32>
    %261 = arith.mulf %256, %260 : vector<2x32xf32>
    %c6 = arith.constant 6 : index
    %c0_66 = arith.constant 0 : index
    %262 = vector.load %arg5[%c6, %c0_66] : memref<16x64xf32, #tpu.memory_space<vmem>>, vector<2x32xf32>
    tpu.vector_store %arg5[%c6, %c0_66], %236 {strides = array<i32>} : memref<16x64xf32, #tpu.memory_space<vmem>>, vector<2x32xf32>,
    %c6_67 = arith.constant 6 : index
    %c32_68 = arith.constant 32 : index
    %263 = vector.load %arg5[%c6_67, %c32_68] : memref<16x64xf32, #tpu.memory_space<vmem>>, vector<2x32xf32>
    tpu.vector_store %arg5[%c6_67, %c32_68], %261 {strides = array<i32>} : memref<16x64xf32, #tpu.memory_space<vmem>>, vector<2x32xf32>,
    %264 = vector.extract_strided_slice %7 {offsets = [8, 0], sizes = [2, 128], strides = [1, 1]} : vector<16x128xf32> to vector<2x128xf32>
    %265 = arith.truncf %236 : vector<2x32xf32> to vector<2x32xbf16>
    %cst_69 = arith.constant dense<0.000000e+00> : vector<2x128xf32>
    %266 = tpu.matmul %265, %17, %cst_69 {dimension_numbers = #tpu.dot_dimension_numbers<[1], [0], [0], [1], [0, 0, 1, 1], [], []>} : vector<2x32xbf16>, vector<32x128xbf16>, vector<2x128xf32> -> vector<2x128xf32>
    %267 = arith.addf %264, %266 : vector<2x128xf32>
    %268 = vector.extract_strided_slice %15 {offsets = [6, 0], sizes = [2, 128], strides = [1, 1]} : vector<16x128xf32> to vector<2x128xf32>
    %269 = arith.truncf %261 : vector<2x32xf32> to vector<2x32xbf16>
    %cst_70 = arith.constant dense<0.000000e+00> : vector<2x128xf32>
    %270 = tpu.matmul %269, %19, %cst_70 {dimension_numbers = #tpu.dot_dimension_numbers<[1], [0], [0], [1], [0, 0, 1, 1], [], []>} : vector<2x32xbf16>, vector<32x128xbf16>, vector<2x128xf32> -> vector<2x128xf32>
    %271 = arith.addf %268, %270 : vector<2x128xf32>
    %272 = vector.extract_strided_slice %267 {offsets = [0, 0], sizes = [2, 32], strides = [1, 1]} : vector<2x128xf32> to vector<2x32xf32>
    %273 = arith.negf %272 : vector<2x32xf32>
    %274 = math.exp %273 : vector<2x32xf32>
    %cst_71 = arith.constant 1.000000e+00 : f32
    %275 = vector.broadcast %cst_71 : f32 to vector<2x32xf32>
    %276 = arith.addf %275, %274 : vector<2x32xf32>
    %277 = arith.divf %275, %276 : vector<2x32xf32>
    %278 = vector.extract_strided_slice %267 {offsets = [0, 32], sizes = [2, 32], strides = [1, 1]} : vector<2x128xf32> to vector<2x32xf32>
    %279 = arith.negf %278 : vector<2x32xf32>
    %280 = math.exp %279 : vector<2x32xf32>
    %cst_72 = arith.constant 1.000000e+00 : f32
    %281 = vector.broadcast %cst_72 : f32 to vector<2x32xf32>
    %282 = arith.addf %281, %280 : vector<2x32xf32>
    %283 = arith.divf %281, %282 : vector<2x32xf32>
    %284 = vector.extract_strided_slice %267 {offsets = [0, 64], sizes = [2, 32], strides = [1, 1]} : vector<2x128xf32> to vector<2x32xf32>
    %285 = math.tanh %284 : vector<2x32xf32>
    %286 = vector.extract_strided_slice %267 {offsets = [0, 96], sizes = [2, 32], strides = [1, 1]} : vector<2x128xf32> to vector<2x32xf32>
    %287 = arith.negf %286 : vector<2x32xf32>
    %288 = math.exp %287 : vector<2x32xf32>
    %cst_73 = arith.constant 1.000000e+00 : f32
    %289 = vector.broadcast %cst_73 : f32 to vector<2x32xf32>
    %290 = arith.addf %289, %288 : vector<2x32xf32>
    %291 = arith.divf %289, %290 : vector<2x32xf32>
    %292 = arith.mulf %283, %234 : vector<2x32xf32>
    %293 = arith.mulf %277, %285 : vector<2x32xf32>
    %294 = arith.addf %292, %293 : vector<2x32xf32>
    %295 = math.tanh %294 : vector<2x32xf32>
    %296 = arith.mulf %291, %295 : vector<2x32xf32>
    %297 = vector.extract_strided_slice %271 {offsets = [0, 0], sizes = [2, 32], strides = [1, 1]} : vector<2x128xf32> to vector<2x32xf32>
    %298 = arith.negf %297 : vector<2x32xf32>
    %299 = math.exp %298 : vector<2x32xf32>
    %cst_74 = arith.constant 1.000000e+00 : f32
    %300 = vector.broadcast %cst_74 : f32 to vector<2x32xf32>
    %301 = arith.addf %300, %299 : vector<2x32xf32>
    %302 = arith.divf %300, %301 : vector<2x32xf32>
    %303 = vector.extract_strided_slice %271 {offsets = [0, 32], sizes = [2, 32], strides = [1, 1]} : vector<2x128xf32> to vector<2x32xf32>
    %304 = arith.negf %303 : vector<2x32xf32>
    %305 = math.exp %304 : vector<2x32xf32>
    %cst_75 = arith.constant 1.000000e+00 : f32
    %306 = vector.broadcast %cst_75 : f32 to vector<2x32xf32>
    %307 = arith.addf %306, %305 : vector<2x32xf32>
    %308 = arith.divf %306, %307 : vector<2x32xf32>
    %309 = vector.extract_strided_slice %271 {offsets = [0, 64], sizes = [2, 32], strides = [1, 1]} : vector<2x128xf32> to vector<2x32xf32>
    %310 = math.tanh %309 : vector<2x32xf32>
    %311 = vector.extract_strided_slice %271 {offsets = [0, 96], sizes = [2, 32], strides = [1, 1]} : vector<2x128xf32> to vector<2x32xf32>
    %312 = arith.negf %311 : vector<2x32xf32>
    %313 = math.exp %312 : vector<2x32xf32>
    %cst_76 = arith.constant 1.000000e+00 : f32
    %314 = vector.broadcast %cst_76 : f32 to vector<2x32xf32>
    %315 = arith.addf %314, %313 : vector<2x32xf32>
    %316 = arith.divf %314, %315 : vector<2x32xf32>
    %317 = arith.mulf %308, %259 : vector<2x32xf32>
    %318 = arith.mulf %302, %310 : vector<2x32xf32>
    %319 = arith.addf %317, %318 : vector<2x32xf32>
    %320 = math.tanh %319 : vector<2x32xf32>
    %321 = arith.mulf %316, %320 : vector<2x32xf32>
    %c8 = arith.constant 8 : index
    %c0_77 = arith.constant 0 : index
    %322 = vector.load %arg5[%c8, %c0_77] : memref<16x64xf32, #tpu.memory_space<vmem>>, vector<2x32xf32>
    tpu.vector_store %arg5[%c8, %c0_77], %296 {strides = array<i32>} : memref<16x64xf32, #tpu.memory_space<vmem>>, vector<2x32xf32>,
    %c8_78 = arith.constant 8 : index
    %c32_79 = arith.constant 32 : index
    %323 = vector.load %arg5[%c8_78, %c32_79] : memref<16x64xf32, #tpu.memory_space<vmem>>, vector<2x32xf32>
    tpu.vector_store %arg5[%c8_78, %c32_79], %321 {strides = array<i32>} : memref<16x64xf32, #tpu.memory_space<vmem>>, vector<2x32xf32>,
    %324 = vector.extract_strided_slice %7 {offsets = [10, 0], sizes = [2, 128], strides = [1, 1]} : vector<16x128xf32> to vector<2x128xf32>
    %325 = arith.truncf %296 : vector<2x32xf32> to vector<2x32xbf16>
    %cst_80 = arith.constant dense<0.000000e+00> : vector<2x128xf32>
    %326 = tpu.matmul %325, %17, %cst_80 {dimension_numbers = #tpu.dot_dimension_numbers<[1], [0], [0], [1], [0, 0, 1, 1], [], []>} : vector<2x32xbf16>, vector<32x128xbf16>, vector<2x128xf32> -> vector<2x128xf32>
    %327 = arith.addf %324, %326 : vector<2x128xf32>
    %328 = vector.extract_strided_slice %15 {offsets = [4, 0], sizes = [2, 128], strides = [1, 1]} : vector<16x128xf32> to vector<2x128xf32>
    %329 = arith.truncf %321 : vector<2x32xf32> to vector<2x32xbf16>
    %cst_81 = arith.constant dense<0.000000e+00> : vector<2x128xf32>
    %330 = tpu.matmul %329, %19, %cst_81 {dimension_numbers = #tpu.dot_dimension_numbers<[1], [0], [0], [1], [0, 0, 1, 1], [], []>} : vector<2x32xbf16>, vector<32x128xbf16>, vector<2x128xf32> -> vector<2x128xf32>
    %331 = arith.addf %328, %330 : vector<2x128xf32>
    %332 = vector.extract_strided_slice %327 {offsets = [0, 0], sizes = [2, 32], strides = [1, 1]} : vector<2x128xf32> to vector<2x32xf32>
    %333 = arith.negf %332 : vector<2x32xf32>
    %334 = math.exp %333 : vector<2x32xf32>
    %cst_82 = arith.constant 1.000000e+00 : f32
    %335 = vector.broadcast %cst_82 : f32 to vector<2x32xf32>
    %336 = arith.addf %335, %334 : vector<2x32xf32>
    %337 = arith.divf %335, %336 : vector<2x32xf32>
    %338 = vector.extract_strided_slice %327 {offsets = [0, 32], sizes = [2, 32], strides = [1, 1]} : vector<2x128xf32> to vector<2x32xf32>
    %339 = arith.negf %338 : vector<2x32xf32>
    %340 = math.exp %339 : vector<2x32xf32>
    %cst_83 = arith.constant 1.000000e+00 : f32
    %341 = vector.broadcast %cst_83 : f32 to vector<2x32xf32>
    %342 = arith.addf %341, %340 : vector<2x32xf32>
    %343 = arith.divf %341, %342 : vector<2x32xf32>
    %344 = vector.extract_strided_slice %327 {offsets = [0, 64], sizes = [2, 32], strides = [1, 1]} : vector<2x128xf32> to vector<2x32xf32>
    %345 = math.tanh %344 : vector<2x32xf32>
    %346 = vector.extract_strided_slice %327 {offsets = [0, 96], sizes = [2, 32], strides = [1, 1]} : vector<2x128xf32> to vector<2x32xf32>
    %347 = arith.negf %346 : vector<2x32xf32>
    %348 = math.exp %347 : vector<2x32xf32>
    %cst_84 = arith.constant 1.000000e+00 : f32
    %349 = vector.broadcast %cst_84 : f32 to vector<2x32xf32>
    %350 = arith.addf %349, %348 : vector<2x32xf32>
    %351 = arith.divf %349, %350 : vector<2x32xf32>
    %352 = arith.mulf %343, %294 : vector<2x32xf32>
    %353 = arith.mulf %337, %345 : vector<2x32xf32>
    %354 = arith.addf %352, %353 : vector<2x32xf32>
    %355 = math.tanh %354 : vector<2x32xf32>
    %356 = arith.mulf %351, %355 : vector<2x32xf32>
    %357 = vector.extract_strided_slice %331 {offsets = [0, 0], sizes = [2, 32], strides = [1, 1]} : vector<2x128xf32> to vector<2x32xf32>
    %358 = arith.negf %357 : vector<2x32xf32>
    %359 = math.exp %358 : vector<2x32xf32>
    %cst_85 = arith.constant 1.000000e+00 : f32
    %360 = vector.broadcast %cst_85 : f32 to vector<2x32xf32>
    %361 = arith.addf %360, %359 : vector<2x32xf32>
    %362 = arith.divf %360, %361 : vector<2x32xf32>
    %363 = vector.extract_strided_slice %331 {offsets = [0, 32], sizes = [2, 32], strides = [1, 1]} : vector<2x128xf32> to vector<2x32xf32>
    %364 = arith.negf %363 : vector<2x32xf32>
    %365 = math.exp %364 : vector<2x32xf32>
    %cst_86 = arith.constant 1.000000e+00 : f32
    %366 = vector.broadcast %cst_86 : f32 to vector<2x32xf32>
    %367 = arith.addf %366, %365 : vector<2x32xf32>
    %368 = arith.divf %366, %367 : vector<2x32xf32>
    %369 = vector.extract_strided_slice %331 {offsets = [0, 64], sizes = [2, 32], strides = [1, 1]} : vector<2x128xf32> to vector<2x32xf32>
    %370 = math.tanh %369 : vector<2x32xf32>
    %371 = vector.extract_strided_slice %331 {offsets = [0, 96], sizes = [2, 32], strides = [1, 1]} : vector<2x128xf32> to vector<2x32xf32>
    %372 = arith.negf %371 : vector<2x32xf32>
    %373 = math.exp %372 : vector<2x32xf32>
    %cst_87 = arith.constant 1.000000e+00 : f32
    %374 = vector.broadcast %cst_87 : f32 to vector<2x32xf32>
    %375 = arith.addf %374, %373 : vector<2x32xf32>
    %376 = arith.divf %374, %375 : vector<2x32xf32>
    %377 = arith.mulf %368, %319 : vector<2x32xf32>
    %378 = arith.mulf %362, %370 : vector<2x32xf32>
    %379 = arith.addf %377, %378 : vector<2x32xf32>
    %380 = math.tanh %379 : vector<2x32xf32>
    %381 = arith.mulf %376, %380 : vector<2x32xf32>
    %c10 = arith.constant 10 : index
    %c0_88 = arith.constant 0 : index
    %382 = vector.load %arg5[%c10, %c0_88] : memref<16x64xf32, #tpu.memory_space<vmem>>, vector<2x32xf32>
    tpu.vector_store %arg5[%c10, %c0_88], %356 {strides = array<i32>} : memref<16x64xf32, #tpu.memory_space<vmem>>, vector<2x32xf32>,
    %c10_89 = arith.constant 10 : index
    %c32_90 = arith.constant 32 : index
    %383 = vector.load %arg5[%c10_89, %c32_90] : memref<16x64xf32, #tpu.memory_space<vmem>>, vector<2x32xf32>
    tpu.vector_store %arg5[%c10_89, %c32_90], %381 {strides = array<i32>} : memref<16x64xf32, #tpu.memory_space<vmem>>, vector<2x32xf32>,
    %384 = vector.extract_strided_slice %7 {offsets = [12, 0], sizes = [2, 128], strides = [1, 1]} : vector<16x128xf32> to vector<2x128xf32>
    %385 = arith.truncf %356 : vector<2x32xf32> to vector<2x32xbf16>
    %cst_91 = arith.constant dense<0.000000e+00> : vector<2x128xf32>
    %386 = tpu.matmul %385, %17, %cst_91 {dimension_numbers = #tpu.dot_dimension_numbers<[1], [0], [0], [1], [0, 0, 1, 1], [], []>} : vector<2x32xbf16>, vector<32x128xbf16>, vector<2x128xf32> -> vector<2x128xf32>
    %387 = arith.addf %384, %386 : vector<2x128xf32>
    %388 = vector.extract_strided_slice %15 {offsets = [2, 0], sizes = [2, 128], strides = [1, 1]} : vector<16x128xf32> to vector<2x128xf32>
    %389 = arith.truncf %381 : vector<2x32xf32> to vector<2x32xbf16>
    %cst_92 = arith.constant dense<0.000000e+00> : vector<2x128xf32>
    %390 = tpu.matmul %389, %19, %cst_92 {dimension_numbers = #tpu.dot_dimension_numbers<[1], [0], [0], [1], [0, 0, 1, 1], [], []>} : vector<2x32xbf16>, vector<32x128xbf16>, vector<2x128xf32> -> vector<2x128xf32>
    %391 = arith.addf %388, %390 : vector<2x128xf32>
    %392 = vector.extract_strided_slice %387 {offsets = [0, 0], sizes = [2, 32], strides = [1, 1]} : vector<2x128xf32> to vector<2x32xf32>
    %393 = arith.negf %392 : vector<2x32xf32>
    %394 = math.exp %393 : vector<2x32xf32>
    %cst_93 = arith.constant 1.000000e+00 : f32
    %395 = vector.broadcast %cst_93 : f32 to vector<2x32xf32>
    %396 = arith.addf %395, %394 : vector<2x32xf32>
    %397 = arith.divf %395, %396 : vector<2x32xf32>
    %398 = vector.extract_strided_slice %387 {offsets = [0, 32], sizes = [2, 32], strides = [1, 1]} : vector<2x128xf32> to vector<2x32xf32>
    %399 = arith.negf %398 : vector<2x32xf32>
    %400 = math.exp %399 : vector<2x32xf32>
    %cst_94 = arith.constant 1.000000e+00 : f32
    %401 = vector.broadcast %cst_94 : f32 to vector<2x32xf32>
    %402 = arith.addf %401, %400 : vector<2x32xf32>
    %403 = arith.divf %401, %402 : vector<2x32xf32>
    %404 = vector.extract_strided_slice %387 {offsets = [0, 64], sizes = [2, 32], strides = [1, 1]} : vector<2x128xf32> to vector<2x32xf32>
    %405 = math.tanh %404 : vector<2x32xf32>
    %406 = vector.extract_strided_slice %387 {offsets = [0, 96], sizes = [2, 32], strides = [1, 1]} : vector<2x128xf32> to vector<2x32xf32>
    %407 = arith.negf %406 : vector<2x32xf32>
    %408 = math.exp %407 : vector<2x32xf32>
    %cst_95 = arith.constant 1.000000e+00 : f32
    %409 = vector.broadcast %cst_95 : f32 to vector<2x32xf32>
    %410 = arith.addf %409, %408 : vector<2x32xf32>
    %411 = arith.divf %409, %410 : vector<2x32xf32>
    %412 = arith.mulf %403, %354 : vector<2x32xf32>
    %413 = arith.mulf %397, %405 : vector<2x32xf32>
    %414 = arith.addf %412, %413 : vector<2x32xf32>
    %415 = math.tanh %414 : vector<2x32xf32>
    %416 = arith.mulf %411, %415 : vector<2x32xf32>
    %417 = vector.extract_strided_slice %391 {offsets = [0, 0], sizes = [2, 32], strides = [1, 1]} : vector<2x128xf32> to vector<2x32xf32>
    %418 = arith.negf %417 : vector<2x32xf32>
    %419 = math.exp %418 : vector<2x32xf32>
    %cst_96 = arith.constant 1.000000e+00 : f32
    %420 = vector.broadcast %cst_96 : f32 to vector<2x32xf32>
    %421 = arith.addf %420, %419 : vector<2x32xf32>
    %422 = arith.divf %420, %421 : vector<2x32xf32>
    %423 = vector.extract_strided_slice %391 {offsets = [0, 32], sizes = [2, 32], strides = [1, 1]} : vector<2x128xf32> to vector<2x32xf32>
    %424 = arith.negf %423 : vector<2x32xf32>
    %425 = math.exp %424 : vector<2x32xf32>
    %cst_97 = arith.constant 1.000000e+00 : f32
    %426 = vector.broadcast %cst_97 : f32 to vector<2x32xf32>
    %427 = arith.addf %426, %425 : vector<2x32xf32>
    %428 = arith.divf %426, %427 : vector<2x32xf32>
    %429 = vector.extract_strided_slice %391 {offsets = [0, 64], sizes = [2, 32], strides = [1, 1]} : vector<2x128xf32> to vector<2x32xf32>
    %430 = math.tanh %429 : vector<2x32xf32>
    %431 = vector.extract_strided_slice %391 {offsets = [0, 96], sizes = [2, 32], strides = [1, 1]} : vector<2x128xf32> to vector<2x32xf32>
    %432 = arith.negf %431 : vector<2x32xf32>
    %433 = math.exp %432 : vector<2x32xf32>
    %cst_98 = arith.constant 1.000000e+00 : f32
    %434 = vector.broadcast %cst_98 : f32 to vector<2x32xf32>
    %435 = arith.addf %434, %433 : vector<2x32xf32>
    %436 = arith.divf %434, %435 : vector<2x32xf32>
    %437 = arith.mulf %428, %379 : vector<2x32xf32>
    %438 = arith.mulf %422, %430 : vector<2x32xf32>
    %439 = arith.addf %437, %438 : vector<2x32xf32>
    %440 = math.tanh %439 : vector<2x32xf32>
    %441 = arith.mulf %436, %440 : vector<2x32xf32>
    %c12 = arith.constant 12 : index
    %c0_99 = arith.constant 0 : index
    %442 = vector.load %arg5[%c12, %c0_99] : memref<16x64xf32, #tpu.memory_space<vmem>>, vector<2x32xf32>
    tpu.vector_store %arg5[%c12, %c0_99], %416 {strides = array<i32>} : memref<16x64xf32, #tpu.memory_space<vmem>>, vector<2x32xf32>,
    %c12_100 = arith.constant 12 : index
    %c32_101 = arith.constant 32 : index
    %443 = vector.load %arg5[%c12_100, %c32_101] : memref<16x64xf32, #tpu.memory_space<vmem>>, vector<2x32xf32>
    tpu.vector_store %arg5[%c12_100, %c32_101], %441 {strides = array<i32>} : memref<16x64xf32, #tpu.memory_space<vmem>>, vector<2x32xf32>,
    %444 = vector.extract_strided_slice %7 {offsets = [14, 0], sizes = [2, 128], strides = [1, 1]} : vector<16x128xf32> to vector<2x128xf32>
    %445 = arith.truncf %416 : vector<2x32xf32> to vector<2x32xbf16>
    %cst_102 = arith.constant dense<0.000000e+00> : vector<2x128xf32>
    %446 = tpu.matmul %445, %17, %cst_102 {dimension_numbers = #tpu.dot_dimension_numbers<[1], [0], [0], [1], [0, 0, 1, 1], [], []>} : vector<2x32xbf16>, vector<32x128xbf16>, vector<2x128xf32> -> vector<2x128xf32>
    %447 = arith.addf %444, %446 : vector<2x128xf32>
    %448 = vector.extract_strided_slice %15 {offsets = [0, 0], sizes = [2, 128], strides = [1, 1]} : vector<16x128xf32> to vector<2x128xf32>
    %449 = arith.truncf %441 : vector<2x32xf32> to vector<2x32xbf16>
    %cst_103 = arith.constant dense<0.000000e+00> : vector<2x128xf32>
    %450 = tpu.matmul %449, %19, %cst_103 {dimension_numbers = #tpu.dot_dimension_numbers<[1], [0], [0], [1], [0, 0, 1, 1], [], []>} : vector<2x32xbf16>, vector<32x128xbf16>, vector<2x128xf32> -> vector<2x128xf32>
    %451 = arith.addf %448, %450 : vector<2x128xf32>
    %452 = vector.extract_strided_slice %447 {offsets = [0, 0], sizes = [2, 32], strides = [1, 1]} : vector<2x128xf32> to vector<2x32xf32>
    %453 = arith.negf %452 : vector<2x32xf32>
    %454 = math.exp %453 : vector<2x32xf32>
    %cst_104 = arith.constant 1.000000e+00 : f32
    %455 = vector.broadcast %cst_104 : f32 to vector<2x32xf32>
    %456 = arith.addf %455, %454 : vector<2x32xf32>
    %457 = arith.divf %455, %456 : vector<2x32xf32>
    %458 = vector.extract_strided_slice %447 {offsets = [0, 32], sizes = [2, 32], strides = [1, 1]} : vector<2x128xf32> to vector<2x32xf32>
    %459 = arith.negf %458 : vector<2x32xf32>
    %460 = math.exp %459 : vector<2x32xf32>
    %cst_105 = arith.constant 1.000000e+00 : f32
    %461 = vector.broadcast %cst_105 : f32 to vector<2x32xf32>
    %462 = arith.addf %461, %460 : vector<2x32xf32>
    %463 = arith.divf %461, %462 : vector<2x32xf32>
    %464 = vector.extract_strided_slice %447 {offsets = [0, 64], sizes = [2, 32], strides = [1, 1]} : vector<2x128xf32> to vector<2x32xf32>
    %465 = math.tanh %464 : vector<2x32xf32>
    %466 = vector.extract_strided_slice %447 {offsets = [0, 96], sizes = [2, 32], strides = [1, 1]} : vector<2x128xf32> to vector<2x32xf32>
    %467 = arith.negf %466 : vector<2x32xf32>
    %468 = math.exp %467 : vector<2x32xf32>
    %cst_106 = arith.constant 1.000000e+00 : f32
    %469 = vector.broadcast %cst_106 : f32 to vector<2x32xf32>
    %470 = arith.addf %469, %468 : vector<2x32xf32>
    %471 = arith.divf %469, %470 : vector<2x32xf32>
    %472 = arith.mulf %463, %414 : vector<2x32xf32>
    %473 = arith.mulf %457, %465 : vector<2x32xf32>
    %474 = arith.addf %472, %473 : vector<2x32xf32>
    %475 = math.tanh %474 : vector<2x32xf32>
    %476 = arith.mulf %471, %475 : vector<2x32xf32>
    %477 = vector.extract_strided_slice %451 {offsets = [0, 0], sizes = [2, 32], strides = [1, 1]} : vector<2x128xf32> to vector<2x32xf32>
    %478 = arith.negf %477 : vector<2x32xf32>
    %479 = math.exp %478 : vector<2x32xf32>
    %cst_107 = arith.constant 1.000000e+00 : f32
    %480 = vector.broadcast %cst_107 : f32 to vector<2x32xf32>
    %481 = arith.addf %480, %479 : vector<2x32xf32>
    %482 = arith.divf %480, %481 : vector<2x32xf32>
    %483 = vector.extract_strided_slice %451 {offsets = [0, 32], sizes = [2, 32], strides = [1, 1]} : vector<2x128xf32> to vector<2x32xf32>
    %484 = arith.negf %483 : vector<2x32xf32>
    %485 = math.exp %484 : vector<2x32xf32>
    %cst_108 = arith.constant 1.000000e+00 : f32
    %486 = vector.broadcast %cst_108 : f32 to vector<2x32xf32>
    %487 = arith.addf %486, %485 : vector<2x32xf32>
    %488 = arith.divf %486, %487 : vector<2x32xf32>
    %489 = vector.extract_strided_slice %451 {offsets = [0, 64], sizes = [2, 32], strides = [1, 1]} : vector<2x128xf32> to vector<2x32xf32>
    %490 = math.tanh %489 : vector<2x32xf32>
    %491 = vector.extract_strided_slice %451 {offsets = [0, 96], sizes = [2, 32], strides = [1, 1]} : vector<2x128xf32> to vector<2x32xf32>
    %492 = arith.negf %491 : vector<2x32xf32>
    %493 = math.exp %492 : vector<2x32xf32>
    %cst_109 = arith.constant 1.000000e+00 : f32
    %494 = vector.broadcast %cst_109 : f32 to vector<2x32xf32>
    %495 = arith.addf %494, %493 : vector<2x32xf32>
    %496 = arith.divf %494, %495 : vector<2x32xf32>
    %497 = arith.mulf %488, %439 : vector<2x32xf32>
    %498 = arith.mulf %482, %490 : vector<2x32xf32>
    %499 = arith.addf %497, %498 : vector<2x32xf32>
    %500 = math.tanh %499 : vector<2x32xf32>
    %501 = arith.mulf %496, %500 : vector<2x32xf32>
    %c14 = arith.constant 14 : index
    %c0_110 = arith.constant 0 : index
    %502 = vector.load %arg5[%c14, %c0_110] : memref<16x64xf32, #tpu.memory_space<vmem>>, vector<2x32xf32>
    tpu.vector_store %arg5[%c14, %c0_110], %476 {strides = array<i32>} : memref<16x64xf32, #tpu.memory_space<vmem>>, vector<2x32xf32>,
    %c14_111 = arith.constant 14 : index
    %c32_112 = arith.constant 32 : index
    %503 = vector.load %arg5[%c14_111, %c32_112] : memref<16x64xf32, #tpu.memory_space<vmem>>, vector<2x32xf32>
    tpu.vector_store %arg5[%c14_111, %c32_112], %501 {strides = array<i32>} : memref<16x64xf32, #tpu.memory_space<vmem>>, vector<2x32xf32>,
    return
  }
}

module attributes {stable_mosaic.version = 11 : i64} {
  func.func @classifier_kernel(%arg0: memref<16x160xbf16, #tpu.memory_space<vmem>>, %arg1: memref<160x32xbf16, #tpu.memory_space<vmem>>, %arg2: memref<1x32xf32, #tpu.memory_space<vmem>>, %arg3: memref<2x32x128xbf16, #tpu.memory_space<vmem>>, %arg4: memref<2x32x128xbf16, #tpu.memory_space<vmem>>, %arg5: memref<2x1x128xf32, #tpu.memory_space<vmem>>, %arg6: memref<64x4xf32, #tpu.memory_space<vmem>>, %arg7: memref<1x4xf32, #tpu.memory_space<vmem>>, %arg8: memref<2x4xf32, #tpu.memory_space<vmem>>) attributes {dimension_semantics = [], scalar_prefetch = 0 : i64, scratch_operands = 0 : i64, tpu.core_type = #tpu.core_type<tc>} {
    %c0 = arith.constant 0 : index
    %c0_0 = arith.constant 0 : index
    %0 = vector.load %arg0[%c0, %c0_0] : memref<16x160xbf16, #tpu.memory_space<vmem>>, vector<16x160xbf16>
    %c0_1 = arith.constant 0 : index
    %c0_2 = arith.constant 0 : index
    %1 = vector.load %arg1[%c0_1, %c0_2] : memref<160x32xbf16, #tpu.memory_space<vmem>>, vector<160x32xbf16>
    %cst = arith.constant dense<0.000000e+00> : vector<16x32xf32>
    %2 = tpu.matmul %0, %1, %cst {dimension_numbers = #tpu.dot_dimension_numbers<[1], [0], [0], [1], [0, 0, 1, 1], [], []>} : vector<16x160xbf16>, vector<160x32xbf16>, vector<16x32xf32> -> vector<16x32xf32>
    %c0_3 = arith.constant 0 : index
    %c0_4 = arith.constant 0 : index
    %3 = vector.load %arg2[%c0_3, %c0_4] : memref<1x32xf32, #tpu.memory_space<vmem>>, vector<1x32xf32>
    %4 = vector.broadcast %3 : vector<1x32xf32> to vector<16x32xf32>
    %5 = arith.addf %2, %4 : vector<16x32xf32>
    %6 = arith.truncf %5 : vector<16x32xf32> to vector<16x32xbf16>
    %c0_5 = arith.constant 0 : index
    %c0_6 = arith.constant 0 : index
    %c0_7 = arith.constant 0 : index
    %7 = vector.load %arg3[%c0_5, %c0_6, %c0_7] : memref<2x32x128xbf16, #tpu.memory_space<vmem>>, vector<1x32x128xbf16>
    %8 = vector.shape_cast %7 : vector<1x32x128xbf16> to vector<32x128xbf16>
    %cst_8 = arith.constant dense<0.000000e+00> : vector<16x128xf32>
    %9 = tpu.matmul %6, %8, %cst_8 {dimension_numbers = #tpu.dot_dimension_numbers<[1], [0], [0], [1], [0, 0, 1, 1], [], []>} : vector<16x32xbf16>, vector<32x128xbf16>, vector<16x128xf32> -> vector<16x128xf32>
    %c0_9 = arith.constant 0 : index
    %c0_10 = arith.constant 0 : index
    %c0_11 = arith.constant 0 : index
    %10 = vector.load %arg5[%c0_9, %c0_10, %c0_11] : memref<2x1x128xf32, #tpu.memory_space<vmem>>, vector<1x1x128xf32>
    %11 = vector.shape_cast %10 : vector<1x1x128xf32> to vector<1x128xf32>
    %12 = vector.broadcast %11 : vector<1x128xf32> to vector<16x128xf32>
    %13 = arith.addf %9, %12 : vector<16x128xf32>
    %c1 = arith.constant 1 : index
    %c0_12 = arith.constant 0 : index
    %c0_13 = arith.constant 0 : index
    %14 = vector.load %arg3[%c1, %c0_12, %c0_13] : memref<2x32x128xbf16, #tpu.memory_space<vmem>>, vector<1x32x128xbf16>
    %15 = vector.shape_cast %14 : vector<1x32x128xbf16> to vector<32x128xbf16>
    %cst_14 = arith.constant dense<0.000000e+00> : vector<16x128xf32>
    %16 = tpu.matmul %6, %15, %cst_14 {dimension_numbers = #tpu.dot_dimension_numbers<[1], [0], [0], [1], [0, 0, 1, 1], [], []>} : vector<16x32xbf16>, vector<32x128xbf16>, vector<16x128xf32> -> vector<16x128xf32>
    %c1_15 = arith.constant 1 : index
    %c0_16 = arith.constant 0 : index
    %c0_17 = arith.constant 0 : index
    %17 = vector.load %arg5[%c1_15, %c0_16, %c0_17] : memref<2x1x128xf32, #tpu.memory_space<vmem>>, vector<1x1x128xf32>
    %18 = vector.shape_cast %17 : vector<1x1x128xf32> to vector<1x128xf32>
    %19 = vector.broadcast %18 : vector<1x128xf32> to vector<16x128xf32>
    %20 = arith.addf %16, %19 : vector<16x128xf32>
    %c0_18 = arith.constant 0 : index
    %c0_19 = arith.constant 0 : index
    %c0_20 = arith.constant 0 : index
    %21 = vector.load %arg4[%c0_18, %c0_19, %c0_20] : memref<2x32x128xbf16, #tpu.memory_space<vmem>>, vector<1x32x128xbf16>
    %22 = vector.shape_cast %21 : vector<1x32x128xbf16> to vector<32x128xbf16>
    %c1_21 = arith.constant 1 : index
    %c0_22 = arith.constant 0 : index
    %c0_23 = arith.constant 0 : index
    %23 = vector.load %arg4[%c1_21, %c0_22, %c0_23] : memref<2x32x128xbf16, #tpu.memory_space<vmem>>, vector<1x32x128xbf16>
    %24 = vector.shape_cast %23 : vector<1x32x128xbf16> to vector<32x128xbf16>
    %cst_24 = arith.constant 0.000000e+00 : f32
    %25 = vector.broadcast %cst_24 : f32 to vector<2x32xf32>
    %cst_25 = arith.constant 0.000000e+00 : f32
    %26 = vector.broadcast %cst_25 : f32 to vector<2x32xf32>
    %cst_26 = arith.constant 0.000000e+00 : f32
    %27 = vector.broadcast %cst_26 : f32 to vector<2x32xf32>
    %cst_27 = arith.constant 0.000000e+00 : f32
    %28 = vector.broadcast %cst_27 : f32 to vector<2x32xf32>
    %29 = vector.extract_strided_slice %13 {offsets = [0, 0], sizes = [2, 128], strides = [1, 1]} : vector<16x128xf32> to vector<2x128xf32>
    %30 = arith.truncf %25 : vector<2x32xf32> to vector<2x32xbf16>
    %cst_28 = arith.constant dense<0.000000e+00> : vector<2x128xf32>
    %31 = tpu.matmul %30, %22, %cst_28 {dimension_numbers = #tpu.dot_dimension_numbers<[1], [0], [0], [1], [0, 0, 1, 1], [], []>} : vector<2x32xbf16>, vector<32x128xbf16>, vector<2x128xf32> -> vector<2x128xf32>
    %32 = arith.addf %29, %31 : vector<2x128xf32>
    %33 = vector.extract_strided_slice %20 {offsets = [14, 0], sizes = [2, 128], strides = [1, 1]} : vector<16x128xf32> to vector<2x128xf32>
    %34 = arith.truncf %27 : vector<2x32xf32> to vector<2x32xbf16>
    %cst_29 = arith.constant dense<0.000000e+00> : vector<2x128xf32>
    %35 = tpu.matmul %34, %24, %cst_29 {dimension_numbers = #tpu.dot_dimension_numbers<[1], [0], [0], [1], [0, 0, 1, 1], [], []>} : vector<2x32xbf16>, vector<32x128xbf16>, vector<2x128xf32> -> vector<2x128xf32>
    %36 = arith.addf %33, %35 : vector<2x128xf32>
    %37 = vector.extract_strided_slice %32 {offsets = [0, 0], sizes = [2, 32], strides = [1, 1]} : vector<2x128xf32> to vector<2x32xf32>
    %38 = arith.negf %37 : vector<2x32xf32>
    %39 = math.exp %38 : vector<2x32xf32>
    %cst_30 = arith.constant 1.000000e+00 : f32
    %40 = vector.broadcast %cst_30 : f32 to vector<2x32xf32>
    %41 = arith.addf %40, %39 : vector<2x32xf32>
    %42 = arith.divf %40, %41 : vector<2x32xf32>
    %43 = vector.extract_strided_slice %32 {offsets = [0, 32], sizes = [2, 32], strides = [1, 1]} : vector<2x128xf32> to vector<2x32xf32>
    %44 = arith.negf %43 : vector<2x32xf32>
    %45 = math.exp %44 : vector<2x32xf32>
    %cst_31 = arith.constant 1.000000e+00 : f32
    %46 = vector.broadcast %cst_31 : f32 to vector<2x32xf32>
    %47 = arith.addf %46, %45 : vector<2x32xf32>
    %48 = arith.divf %46, %47 : vector<2x32xf32>
    %49 = vector.extract_strided_slice %32 {offsets = [0, 64], sizes = [2, 32], strides = [1, 1]} : vector<2x128xf32> to vector<2x32xf32>
    %50 = math.tanh %49 : vector<2x32xf32>
    %51 = vector.extract_strided_slice %32 {offsets = [0, 96], sizes = [2, 32], strides = [1, 1]} : vector<2x128xf32> to vector<2x32xf32>
    %52 = arith.negf %51 : vector<2x32xf32>
    %53 = math.exp %52 : vector<2x32xf32>
    %cst_32 = arith.constant 1.000000e+00 : f32
    %54 = vector.broadcast %cst_32 : f32 to vector<2x32xf32>
    %55 = arith.addf %54, %53 : vector<2x32xf32>
    %56 = arith.divf %54, %55 : vector<2x32xf32>
    %57 = arith.mulf %48, %26 : vector<2x32xf32>
    %58 = arith.mulf %42, %50 : vector<2x32xf32>
    %59 = arith.addf %57, %58 : vector<2x32xf32>
    %60 = math.tanh %59 : vector<2x32xf32>
    %61 = arith.mulf %56, %60 : vector<2x32xf32>
    %62 = vector.extract_strided_slice %36 {offsets = [0, 0], sizes = [2, 32], strides = [1, 1]} : vector<2x128xf32> to vector<2x32xf32>
    %63 = arith.negf %62 : vector<2x32xf32>
    %64 = math.exp %63 : vector<2x32xf32>
    %cst_33 = arith.constant 1.000000e+00 : f32
    %65 = vector.broadcast %cst_33 : f32 to vector<2x32xf32>
    %66 = arith.addf %65, %64 : vector<2x32xf32>
    %67 = arith.divf %65, %66 : vector<2x32xf32>
    %68 = vector.extract_strided_slice %36 {offsets = [0, 32], sizes = [2, 32], strides = [1, 1]} : vector<2x128xf32> to vector<2x32xf32>
    %69 = arith.negf %68 : vector<2x32xf32>
    %70 = math.exp %69 : vector<2x32xf32>
    %cst_34 = arith.constant 1.000000e+00 : f32
    %71 = vector.broadcast %cst_34 : f32 to vector<2x32xf32>
    %72 = arith.addf %71, %70 : vector<2x32xf32>
    %73 = arith.divf %71, %72 : vector<2x32xf32>
    %74 = vector.extract_strided_slice %36 {offsets = [0, 64], sizes = [2, 32], strides = [1, 1]} : vector<2x128xf32> to vector<2x32xf32>
    %75 = math.tanh %74 : vector<2x32xf32>
    %76 = vector.extract_strided_slice %36 {offsets = [0, 96], sizes = [2, 32], strides = [1, 1]} : vector<2x128xf32> to vector<2x32xf32>
    %77 = arith.negf %76 : vector<2x32xf32>
    %78 = math.exp %77 : vector<2x32xf32>
    %cst_35 = arith.constant 1.000000e+00 : f32
    %79 = vector.broadcast %cst_35 : f32 to vector<2x32xf32>
    %80 = arith.addf %79, %78 : vector<2x32xf32>
    %81 = arith.divf %79, %80 : vector<2x32xf32>
    %82 = arith.mulf %73, %28 : vector<2x32xf32>
    %83 = arith.mulf %67, %75 : vector<2x32xf32>
    %84 = arith.addf %82, %83 : vector<2x32xf32>
    %85 = math.tanh %84 : vector<2x32xf32>
    %86 = arith.mulf %81, %85 : vector<2x32xf32>
    %87 = vector.extract_strided_slice %13 {offsets = [2, 0], sizes = [2, 128], strides = [1, 1]} : vector<16x128xf32> to vector<2x128xf32>
    %88 = arith.truncf %61 : vector<2x32xf32> to vector<2x32xbf16>
    %cst_36 = arith.constant dense<0.000000e+00> : vector<2x128xf32>
    %89 = tpu.matmul %88, %22, %cst_36 {dimension_numbers = #tpu.dot_dimension_numbers<[1], [0], [0], [1], [0, 0, 1, 1], [], []>} : vector<2x32xbf16>, vector<32x128xbf16>, vector<2x128xf32> -> vector<2x128xf32>
    %90 = arith.addf %87, %89 : vector<2x128xf32>
    %91 = vector.extract_strided_slice %20 {offsets = [12, 0], sizes = [2, 128], strides = [1, 1]} : vector<16x128xf32> to vector<2x128xf32>
    %92 = arith.truncf %86 : vector<2x32xf32> to vector<2x32xbf16>
    %cst_37 = arith.constant dense<0.000000e+00> : vector<2x128xf32>
    %93 = tpu.matmul %92, %24, %cst_37 {dimension_numbers = #tpu.dot_dimension_numbers<[1], [0], [0], [1], [0, 0, 1, 1], [], []>} : vector<2x32xbf16>, vector<32x128xbf16>, vector<2x128xf32> -> vector<2x128xf32>
    %94 = arith.addf %91, %93 : vector<2x128xf32>
    %95 = vector.extract_strided_slice %90 {offsets = [0, 0], sizes = [2, 32], strides = [1, 1]} : vector<2x128xf32> to vector<2x32xf32>
    %96 = arith.negf %95 : vector<2x32xf32>
    %97 = math.exp %96 : vector<2x32xf32>
    %cst_38 = arith.constant 1.000000e+00 : f32
    %98 = vector.broadcast %cst_38 : f32 to vector<2x32xf32>
    %99 = arith.addf %98, %97 : vector<2x32xf32>
    %100 = arith.divf %98, %99 : vector<2x32xf32>
    %101 = vector.extract_strided_slice %90 {offsets = [0, 32], sizes = [2, 32], strides = [1, 1]} : vector<2x128xf32> to vector<2x32xf32>
    %102 = arith.negf %101 : vector<2x32xf32>
    %103 = math.exp %102 : vector<2x32xf32>
    %cst_39 = arith.constant 1.000000e+00 : f32
    %104 = vector.broadcast %cst_39 : f32 to vector<2x32xf32>
    %105 = arith.addf %104, %103 : vector<2x32xf32>
    %106 = arith.divf %104, %105 : vector<2x32xf32>
    %107 = vector.extract_strided_slice %90 {offsets = [0, 64], sizes = [2, 32], strides = [1, 1]} : vector<2x128xf32> to vector<2x32xf32>
    %108 = math.tanh %107 : vector<2x32xf32>
    %109 = vector.extract_strided_slice %90 {offsets = [0, 96], sizes = [2, 32], strides = [1, 1]} : vector<2x128xf32> to vector<2x32xf32>
    %110 = arith.negf %109 : vector<2x32xf32>
    %111 = math.exp %110 : vector<2x32xf32>
    %cst_40 = arith.constant 1.000000e+00 : f32
    %112 = vector.broadcast %cst_40 : f32 to vector<2x32xf32>
    %113 = arith.addf %112, %111 : vector<2x32xf32>
    %114 = arith.divf %112, %113 : vector<2x32xf32>
    %115 = arith.mulf %106, %59 : vector<2x32xf32>
    %116 = arith.mulf %100, %108 : vector<2x32xf32>
    %117 = arith.addf %115, %116 : vector<2x32xf32>
    %118 = math.tanh %117 : vector<2x32xf32>
    %119 = arith.mulf %114, %118 : vector<2x32xf32>
    %120 = vector.extract_strided_slice %94 {offsets = [0, 0], sizes = [2, 32], strides = [1, 1]} : vector<2x128xf32> to vector<2x32xf32>
    %121 = arith.negf %120 : vector<2x32xf32>
    %122 = math.exp %121 : vector<2x32xf32>
    %cst_41 = arith.constant 1.000000e+00 : f32
    %123 = vector.broadcast %cst_41 : f32 to vector<2x32xf32>
    %124 = arith.addf %123, %122 : vector<2x32xf32>
    %125 = arith.divf %123, %124 : vector<2x32xf32>
    %126 = vector.extract_strided_slice %94 {offsets = [0, 32], sizes = [2, 32], strides = [1, 1]} : vector<2x128xf32> to vector<2x32xf32>
    %127 = arith.negf %126 : vector<2x32xf32>
    %128 = math.exp %127 : vector<2x32xf32>
    %cst_42 = arith.constant 1.000000e+00 : f32
    %129 = vector.broadcast %cst_42 : f32 to vector<2x32xf32>
    %130 = arith.addf %129, %128 : vector<2x32xf32>
    %131 = arith.divf %129, %130 : vector<2x32xf32>
    %132 = vector.extract_strided_slice %94 {offsets = [0, 64], sizes = [2, 32], strides = [1, 1]} : vector<2x128xf32> to vector<2x32xf32>
    %133 = math.tanh %132 : vector<2x32xf32>
    %134 = vector.extract_strided_slice %94 {offsets = [0, 96], sizes = [2, 32], strides = [1, 1]} : vector<2x128xf32> to vector<2x32xf32>
    %135 = arith.negf %134 : vector<2x32xf32>
    %136 = math.exp %135 : vector<2x32xf32>
    %cst_43 = arith.constant 1.000000e+00 : f32
    %137 = vector.broadcast %cst_43 : f32 to vector<2x32xf32>
    %138 = arith.addf %137, %136 : vector<2x32xf32>
    %139 = arith.divf %137, %138 : vector<2x32xf32>
    %140 = arith.mulf %131, %84 : vector<2x32xf32>
    %141 = arith.mulf %125, %133 : vector<2x32xf32>
    %142 = arith.addf %140, %141 : vector<2x32xf32>
    %143 = math.tanh %142 : vector<2x32xf32>
    %144 = arith.mulf %139, %143 : vector<2x32xf32>
    %145 = vector.extract_strided_slice %13 {offsets = [4, 0], sizes = [2, 128], strides = [1, 1]} : vector<16x128xf32> to vector<2x128xf32>
    %146 = arith.truncf %119 : vector<2x32xf32> to vector<2x32xbf16>
    %cst_44 = arith.constant dense<0.000000e+00> : vector<2x128xf32>
    %147 = tpu.matmul %146, %22, %cst_44 {dimension_numbers = #tpu.dot_dimension_numbers<[1], [0], [0], [1], [0, 0, 1, 1], [], []>} : vector<2x32xbf16>, vector<32x128xbf16>, vector<2x128xf32> -> vector<2x128xf32>
    %148 = arith.addf %145, %147 : vector<2x128xf32>
    %149 = vector.extract_strided_slice %20 {offsets = [10, 0], sizes = [2, 128], strides = [1, 1]} : vector<16x128xf32> to vector<2x128xf32>
    %150 = arith.truncf %144 : vector<2x32xf32> to vector<2x32xbf16>
    %cst_45 = arith.constant dense<0.000000e+00> : vector<2x128xf32>
    %151 = tpu.matmul %150, %24, %cst_45 {dimension_numbers = #tpu.dot_dimension_numbers<[1], [0], [0], [1], [0, 0, 1, 1], [], []>} : vector<2x32xbf16>, vector<32x128xbf16>, vector<2x128xf32> -> vector<2x128xf32>
    %152 = arith.addf %149, %151 : vector<2x128xf32>
    %153 = vector.extract_strided_slice %148 {offsets = [0, 0], sizes = [2, 32], strides = [1, 1]} : vector<2x128xf32> to vector<2x32xf32>
    %154 = arith.negf %153 : vector<2x32xf32>
    %155 = math.exp %154 : vector<2x32xf32>
    %cst_46 = arith.constant 1.000000e+00 : f32
    %156 = vector.broadcast %cst_46 : f32 to vector<2x32xf32>
    %157 = arith.addf %156, %155 : vector<2x32xf32>
    %158 = arith.divf %156, %157 : vector<2x32xf32>
    %159 = vector.extract_strided_slice %148 {offsets = [0, 32], sizes = [2, 32], strides = [1, 1]} : vector<2x128xf32> to vector<2x32xf32>
    %160 = arith.negf %159 : vector<2x32xf32>
    %161 = math.exp %160 : vector<2x32xf32>
    %cst_47 = arith.constant 1.000000e+00 : f32
    %162 = vector.broadcast %cst_47 : f32 to vector<2x32xf32>
    %163 = arith.addf %162, %161 : vector<2x32xf32>
    %164 = arith.divf %162, %163 : vector<2x32xf32>
    %165 = vector.extract_strided_slice %148 {offsets = [0, 64], sizes = [2, 32], strides = [1, 1]} : vector<2x128xf32> to vector<2x32xf32>
    %166 = math.tanh %165 : vector<2x32xf32>
    %167 = vector.extract_strided_slice %148 {offsets = [0, 96], sizes = [2, 32], strides = [1, 1]} : vector<2x128xf32> to vector<2x32xf32>
    %168 = arith.negf %167 : vector<2x32xf32>
    %169 = math.exp %168 : vector<2x32xf32>
    %cst_48 = arith.constant 1.000000e+00 : f32
    %170 = vector.broadcast %cst_48 : f32 to vector<2x32xf32>
    %171 = arith.addf %170, %169 : vector<2x32xf32>
    %172 = arith.divf %170, %171 : vector<2x32xf32>
    %173 = arith.mulf %164, %117 : vector<2x32xf32>
    %174 = arith.mulf %158, %166 : vector<2x32xf32>
    %175 = arith.addf %173, %174 : vector<2x32xf32>
    %176 = math.tanh %175 : vector<2x32xf32>
    %177 = arith.mulf %172, %176 : vector<2x32xf32>
    %178 = vector.extract_strided_slice %152 {offsets = [0, 0], sizes = [2, 32], strides = [1, 1]} : vector<2x128xf32> to vector<2x32xf32>
    %179 = arith.negf %178 : vector<2x32xf32>
    %180 = math.exp %179 : vector<2x32xf32>
    %cst_49 = arith.constant 1.000000e+00 : f32
    %181 = vector.broadcast %cst_49 : f32 to vector<2x32xf32>
    %182 = arith.addf %181, %180 : vector<2x32xf32>
    %183 = arith.divf %181, %182 : vector<2x32xf32>
    %184 = vector.extract_strided_slice %152 {offsets = [0, 32], sizes = [2, 32], strides = [1, 1]} : vector<2x128xf32> to vector<2x32xf32>
    %185 = arith.negf %184 : vector<2x32xf32>
    %186 = math.exp %185 : vector<2x32xf32>
    %cst_50 = arith.constant 1.000000e+00 : f32
    %187 = vector.broadcast %cst_50 : f32 to vector<2x32xf32>
    %188 = arith.addf %187, %186 : vector<2x32xf32>
    %189 = arith.divf %187, %188 : vector<2x32xf32>
    %190 = vector.extract_strided_slice %152 {offsets = [0, 64], sizes = [2, 32], strides = [1, 1]} : vector<2x128xf32> to vector<2x32xf32>
    %191 = math.tanh %190 : vector<2x32xf32>
    %192 = vector.extract_strided_slice %152 {offsets = [0, 96], sizes = [2, 32], strides = [1, 1]} : vector<2x128xf32> to vector<2x32xf32>
    %193 = arith.negf %192 : vector<2x32xf32>
    %194 = math.exp %193 : vector<2x32xf32>
    %cst_51 = arith.constant 1.000000e+00 : f32
    %195 = vector.broadcast %cst_51 : f32 to vector<2x32xf32>
    %196 = arith.addf %195, %194 : vector<2x32xf32>
    %197 = arith.divf %195, %196 : vector<2x32xf32>
    %198 = arith.mulf %189, %142 : vector<2x32xf32>
    %199 = arith.mulf %183, %191 : vector<2x32xf32>
    %200 = arith.addf %198, %199 : vector<2x32xf32>
    %201 = math.tanh %200 : vector<2x32xf32>
    %202 = arith.mulf %197, %201 : vector<2x32xf32>
    %203 = vector.extract_strided_slice %13 {offsets = [6, 0], sizes = [2, 128], strides = [1, 1]} : vector<16x128xf32> to vector<2x128xf32>
    %204 = arith.truncf %177 : vector<2x32xf32> to vector<2x32xbf16>
    %cst_52 = arith.constant dense<0.000000e+00> : vector<2x128xf32>
    %205 = tpu.matmul %204, %22, %cst_52 {dimension_numbers = #tpu.dot_dimension_numbers<[1], [0], [0], [1], [0, 0, 1, 1], [], []>} : vector<2x32xbf16>, vector<32x128xbf16>, vector<2x128xf32> -> vector<2x128xf32>
    %206 = arith.addf %203, %205 : vector<2x128xf32>
    %207 = vector.extract_strided_slice %20 {offsets = [8, 0], sizes = [2, 128], strides = [1, 1]} : vector<16x128xf32> to vector<2x128xf32>
    %208 = arith.truncf %202 : vector<2x32xf32> to vector<2x32xbf16>
    %cst_53 = arith.constant dense<0.000000e+00> : vector<2x128xf32>
    %209 = tpu.matmul %208, %24, %cst_53 {dimension_numbers = #tpu.dot_dimension_numbers<[1], [0], [0], [1], [0, 0, 1, 1], [], []>} : vector<2x32xbf16>, vector<32x128xbf16>, vector<2x128xf32> -> vector<2x128xf32>
    %210 = arith.addf %207, %209 : vector<2x128xf32>
    %211 = vector.extract_strided_slice %206 {offsets = [0, 0], sizes = [2, 32], strides = [1, 1]} : vector<2x128xf32> to vector<2x32xf32>
    %212 = arith.negf %211 : vector<2x32xf32>
    %213 = math.exp %212 : vector<2x32xf32>
    %cst_54 = arith.constant 1.000000e+00 : f32
    %214 = vector.broadcast %cst_54 : f32 to vector<2x32xf32>
    %215 = arith.addf %214, %213 : vector<2x32xf32>
    %216 = arith.divf %214, %215 : vector<2x32xf32>
    %217 = vector.extract_strided_slice %206 {offsets = [0, 32], sizes = [2, 32], strides = [1, 1]} : vector<2x128xf32> to vector<2x32xf32>
    %218 = arith.negf %217 : vector<2x32xf32>
    %219 = math.exp %218 : vector<2x32xf32>
    %cst_55 = arith.constant 1.000000e+00 : f32
    %220 = vector.broadcast %cst_55 : f32 to vector<2x32xf32>
    %221 = arith.addf %220, %219 : vector<2x32xf32>
    %222 = arith.divf %220, %221 : vector<2x32xf32>
    %223 = vector.extract_strided_slice %206 {offsets = [0, 64], sizes = [2, 32], strides = [1, 1]} : vector<2x128xf32> to vector<2x32xf32>
    %224 = math.tanh %223 : vector<2x32xf32>
    %225 = vector.extract_strided_slice %206 {offsets = [0, 96], sizes = [2, 32], strides = [1, 1]} : vector<2x128xf32> to vector<2x32xf32>
    %226 = arith.negf %225 : vector<2x32xf32>
    %227 = math.exp %226 : vector<2x32xf32>
    %cst_56 = arith.constant 1.000000e+00 : f32
    %228 = vector.broadcast %cst_56 : f32 to vector<2x32xf32>
    %229 = arith.addf %228, %227 : vector<2x32xf32>
    %230 = arith.divf %228, %229 : vector<2x32xf32>
    %231 = arith.mulf %222, %175 : vector<2x32xf32>
    %232 = arith.mulf %216, %224 : vector<2x32xf32>
    %233 = arith.addf %231, %232 : vector<2x32xf32>
    %234 = math.tanh %233 : vector<2x32xf32>
    %235 = arith.mulf %230, %234 : vector<2x32xf32>
    %236 = vector.extract_strided_slice %210 {offsets = [0, 0], sizes = [2, 32], strides = [1, 1]} : vector<2x128xf32> to vector<2x32xf32>
    %237 = arith.negf %236 : vector<2x32xf32>
    %238 = math.exp %237 : vector<2x32xf32>
    %cst_57 = arith.constant 1.000000e+00 : f32
    %239 = vector.broadcast %cst_57 : f32 to vector<2x32xf32>
    %240 = arith.addf %239, %238 : vector<2x32xf32>
    %241 = arith.divf %239, %240 : vector<2x32xf32>
    %242 = vector.extract_strided_slice %210 {offsets = [0, 32], sizes = [2, 32], strides = [1, 1]} : vector<2x128xf32> to vector<2x32xf32>
    %243 = arith.negf %242 : vector<2x32xf32>
    %244 = math.exp %243 : vector<2x32xf32>
    %cst_58 = arith.constant 1.000000e+00 : f32
    %245 = vector.broadcast %cst_58 : f32 to vector<2x32xf32>
    %246 = arith.addf %245, %244 : vector<2x32xf32>
    %247 = arith.divf %245, %246 : vector<2x32xf32>
    %248 = vector.extract_strided_slice %210 {offsets = [0, 64], sizes = [2, 32], strides = [1, 1]} : vector<2x128xf32> to vector<2x32xf32>
    %249 = math.tanh %248 : vector<2x32xf32>
    %250 = vector.extract_strided_slice %210 {offsets = [0, 96], sizes = [2, 32], strides = [1, 1]} : vector<2x128xf32> to vector<2x32xf32>
    %251 = arith.negf %250 : vector<2x32xf32>
    %252 = math.exp %251 : vector<2x32xf32>
    %cst_59 = arith.constant 1.000000e+00 : f32
    %253 = vector.broadcast %cst_59 : f32 to vector<2x32xf32>
    %254 = arith.addf %253, %252 : vector<2x32xf32>
    %255 = arith.divf %253, %254 : vector<2x32xf32>
    %256 = arith.mulf %247, %200 : vector<2x32xf32>
    %257 = arith.mulf %241, %249 : vector<2x32xf32>
    %258 = arith.addf %256, %257 : vector<2x32xf32>
    %259 = math.tanh %258 : vector<2x32xf32>
    %260 = arith.mulf %255, %259 : vector<2x32xf32>
    %261 = vector.extract_strided_slice %13 {offsets = [8, 0], sizes = [2, 128], strides = [1, 1]} : vector<16x128xf32> to vector<2x128xf32>
    %262 = arith.truncf %235 : vector<2x32xf32> to vector<2x32xbf16>
    %cst_60 = arith.constant dense<0.000000e+00> : vector<2x128xf32>
    %263 = tpu.matmul %262, %22, %cst_60 {dimension_numbers = #tpu.dot_dimension_numbers<[1], [0], [0], [1], [0, 0, 1, 1], [], []>} : vector<2x32xbf16>, vector<32x128xbf16>, vector<2x128xf32> -> vector<2x128xf32>
    %264 = arith.addf %261, %263 : vector<2x128xf32>
    %265 = vector.extract_strided_slice %20 {offsets = [6, 0], sizes = [2, 128], strides = [1, 1]} : vector<16x128xf32> to vector<2x128xf32>
    %266 = arith.truncf %260 : vector<2x32xf32> to vector<2x32xbf16>
    %cst_61 = arith.constant dense<0.000000e+00> : vector<2x128xf32>
    %267 = tpu.matmul %266, %24, %cst_61 {dimension_numbers = #tpu.dot_dimension_numbers<[1], [0], [0], [1], [0, 0, 1, 1], [], []>} : vector<2x32xbf16>, vector<32x128xbf16>, vector<2x128xf32> -> vector<2x128xf32>
    %268 = arith.addf %265, %267 : vector<2x128xf32>
    %269 = vector.extract_strided_slice %264 {offsets = [0, 0], sizes = [2, 32], strides = [1, 1]} : vector<2x128xf32> to vector<2x32xf32>
    %270 = arith.negf %269 : vector<2x32xf32>
    %271 = math.exp %270 : vector<2x32xf32>
    %cst_62 = arith.constant 1.000000e+00 : f32
    %272 = vector.broadcast %cst_62 : f32 to vector<2x32xf32>
    %273 = arith.addf %272, %271 : vector<2x32xf32>
    %274 = arith.divf %272, %273 : vector<2x32xf32>
    %275 = vector.extract_strided_slice %264 {offsets = [0, 32], sizes = [2, 32], strides = [1, 1]} : vector<2x128xf32> to vector<2x32xf32>
    %276 = arith.negf %275 : vector<2x32xf32>
    %277 = math.exp %276 : vector<2x32xf32>
    %cst_63 = arith.constant 1.000000e+00 : f32
    %278 = vector.broadcast %cst_63 : f32 to vector<2x32xf32>
    %279 = arith.addf %278, %277 : vector<2x32xf32>
    %280 = arith.divf %278, %279 : vector<2x32xf32>
    %281 = vector.extract_strided_slice %264 {offsets = [0, 64], sizes = [2, 32], strides = [1, 1]} : vector<2x128xf32> to vector<2x32xf32>
    %282 = math.tanh %281 : vector<2x32xf32>
    %283 = vector.extract_strided_slice %264 {offsets = [0, 96], sizes = [2, 32], strides = [1, 1]} : vector<2x128xf32> to vector<2x32xf32>
    %284 = arith.negf %283 : vector<2x32xf32>
    %285 = math.exp %284 : vector<2x32xf32>
    %cst_64 = arith.constant 1.000000e+00 : f32
    %286 = vector.broadcast %cst_64 : f32 to vector<2x32xf32>
    %287 = arith.addf %286, %285 : vector<2x32xf32>
    %288 = arith.divf %286, %287 : vector<2x32xf32>
    %289 = arith.mulf %280, %233 : vector<2x32xf32>
    %290 = arith.mulf %274, %282 : vector<2x32xf32>
    %291 = arith.addf %289, %290 : vector<2x32xf32>
    %292 = math.tanh %291 : vector<2x32xf32>
    %293 = arith.mulf %288, %292 : vector<2x32xf32>
    %294 = vector.extract_strided_slice %268 {offsets = [0, 0], sizes = [2, 32], strides = [1, 1]} : vector<2x128xf32> to vector<2x32xf32>
    %295 = arith.negf %294 : vector<2x32xf32>
    %296 = math.exp %295 : vector<2x32xf32>
    %cst_65 = arith.constant 1.000000e+00 : f32
    %297 = vector.broadcast %cst_65 : f32 to vector<2x32xf32>
    %298 = arith.addf %297, %296 : vector<2x32xf32>
    %299 = arith.divf %297, %298 : vector<2x32xf32>
    %300 = vector.extract_strided_slice %268 {offsets = [0, 32], sizes = [2, 32], strides = [1, 1]} : vector<2x128xf32> to vector<2x32xf32>
    %301 = arith.negf %300 : vector<2x32xf32>
    %302 = math.exp %301 : vector<2x32xf32>
    %cst_66 = arith.constant 1.000000e+00 : f32
    %303 = vector.broadcast %cst_66 : f32 to vector<2x32xf32>
    %304 = arith.addf %303, %302 : vector<2x32xf32>
    %305 = arith.divf %303, %304 : vector<2x32xf32>
    %306 = vector.extract_strided_slice %268 {offsets = [0, 64], sizes = [2, 32], strides = [1, 1]} : vector<2x128xf32> to vector<2x32xf32>
    %307 = math.tanh %306 : vector<2x32xf32>
    %308 = vector.extract_strided_slice %268 {offsets = [0, 96], sizes = [2, 32], strides = [1, 1]} : vector<2x128xf32> to vector<2x32xf32>
    %309 = arith.negf %308 : vector<2x32xf32>
    %310 = math.exp %309 : vector<2x32xf32>
    %cst_67 = arith.constant 1.000000e+00 : f32
    %311 = vector.broadcast %cst_67 : f32 to vector<2x32xf32>
    %312 = arith.addf %311, %310 : vector<2x32xf32>
    %313 = arith.divf %311, %312 : vector<2x32xf32>
    %314 = arith.mulf %305, %258 : vector<2x32xf32>
    %315 = arith.mulf %299, %307 : vector<2x32xf32>
    %316 = arith.addf %314, %315 : vector<2x32xf32>
    %317 = math.tanh %316 : vector<2x32xf32>
    %318 = arith.mulf %313, %317 : vector<2x32xf32>
    %319 = vector.extract_strided_slice %13 {offsets = [10, 0], sizes = [2, 128], strides = [1, 1]} : vector<16x128xf32> to vector<2x128xf32>
    %320 = arith.truncf %293 : vector<2x32xf32> to vector<2x32xbf16>
    %cst_68 = arith.constant dense<0.000000e+00> : vector<2x128xf32>
    %321 = tpu.matmul %320, %22, %cst_68 {dimension_numbers = #tpu.dot_dimension_numbers<[1], [0], [0], [1], [0, 0, 1, 1], [], []>} : vector<2x32xbf16>, vector<32x128xbf16>, vector<2x128xf32> -> vector<2x128xf32>
    %322 = arith.addf %319, %321 : vector<2x128xf32>
    %323 = vector.extract_strided_slice %20 {offsets = [4, 0], sizes = [2, 128], strides = [1, 1]} : vector<16x128xf32> to vector<2x128xf32>
    %324 = arith.truncf %318 : vector<2x32xf32> to vector<2x32xbf16>
    %cst_69 = arith.constant dense<0.000000e+00> : vector<2x128xf32>
    %325 = tpu.matmul %324, %24, %cst_69 {dimension_numbers = #tpu.dot_dimension_numbers<[1], [0], [0], [1], [0, 0, 1, 1], [], []>} : vector<2x32xbf16>, vector<32x128xbf16>, vector<2x128xf32> -> vector<2x128xf32>
    %326 = arith.addf %323, %325 : vector<2x128xf32>
    %327 = vector.extract_strided_slice %322 {offsets = [0, 0], sizes = [2, 32], strides = [1, 1]} : vector<2x128xf32> to vector<2x32xf32>
    %328 = arith.negf %327 : vector<2x32xf32>
    %329 = math.exp %328 : vector<2x32xf32>
    %cst_70 = arith.constant 1.000000e+00 : f32
    %330 = vector.broadcast %cst_70 : f32 to vector<2x32xf32>
    %331 = arith.addf %330, %329 : vector<2x32xf32>
    %332 = arith.divf %330, %331 : vector<2x32xf32>
    %333 = vector.extract_strided_slice %322 {offsets = [0, 32], sizes = [2, 32], strides = [1, 1]} : vector<2x128xf32> to vector<2x32xf32>
    %334 = arith.negf %333 : vector<2x32xf32>
    %335 = math.exp %334 : vector<2x32xf32>
    %cst_71 = arith.constant 1.000000e+00 : f32
    %336 = vector.broadcast %cst_71 : f32 to vector<2x32xf32>
    %337 = arith.addf %336, %335 : vector<2x32xf32>
    %338 = arith.divf %336, %337 : vector<2x32xf32>
    %339 = vector.extract_strided_slice %322 {offsets = [0, 64], sizes = [2, 32], strides = [1, 1]} : vector<2x128xf32> to vector<2x32xf32>
    %340 = math.tanh %339 : vector<2x32xf32>
    %341 = vector.extract_strided_slice %322 {offsets = [0, 96], sizes = [2, 32], strides = [1, 1]} : vector<2x128xf32> to vector<2x32xf32>
    %342 = arith.negf %341 : vector<2x32xf32>
    %343 = math.exp %342 : vector<2x32xf32>
    %cst_72 = arith.constant 1.000000e+00 : f32
    %344 = vector.broadcast %cst_72 : f32 to vector<2x32xf32>
    %345 = arith.addf %344, %343 : vector<2x32xf32>
    %346 = arith.divf %344, %345 : vector<2x32xf32>
    %347 = arith.mulf %338, %291 : vector<2x32xf32>
    %348 = arith.mulf %332, %340 : vector<2x32xf32>
    %349 = arith.addf %347, %348 : vector<2x32xf32>
    %350 = math.tanh %349 : vector<2x32xf32>
    %351 = arith.mulf %346, %350 : vector<2x32xf32>
    %352 = vector.extract_strided_slice %326 {offsets = [0, 0], sizes = [2, 32], strides = [1, 1]} : vector<2x128xf32> to vector<2x32xf32>
    %353 = arith.negf %352 : vector<2x32xf32>
    %354 = math.exp %353 : vector<2x32xf32>
    %cst_73 = arith.constant 1.000000e+00 : f32
    %355 = vector.broadcast %cst_73 : f32 to vector<2x32xf32>
    %356 = arith.addf %355, %354 : vector<2x32xf32>
    %357 = arith.divf %355, %356 : vector<2x32xf32>
    %358 = vector.extract_strided_slice %326 {offsets = [0, 32], sizes = [2, 32], strides = [1, 1]} : vector<2x128xf32> to vector<2x32xf32>
    %359 = arith.negf %358 : vector<2x32xf32>
    %360 = math.exp %359 : vector<2x32xf32>
    %cst_74 = arith.constant 1.000000e+00 : f32
    %361 = vector.broadcast %cst_74 : f32 to vector<2x32xf32>
    %362 = arith.addf %361, %360 : vector<2x32xf32>
    %363 = arith.divf %361, %362 : vector<2x32xf32>
    %364 = vector.extract_strided_slice %326 {offsets = [0, 64], sizes = [2, 32], strides = [1, 1]} : vector<2x128xf32> to vector<2x32xf32>
    %365 = math.tanh %364 : vector<2x32xf32>
    %366 = vector.extract_strided_slice %326 {offsets = [0, 96], sizes = [2, 32], strides = [1, 1]} : vector<2x128xf32> to vector<2x32xf32>
    %367 = arith.negf %366 : vector<2x32xf32>
    %368 = math.exp %367 : vector<2x32xf32>
    %cst_75 = arith.constant 1.000000e+00 : f32
    %369 = vector.broadcast %cst_75 : f32 to vector<2x32xf32>
    %370 = arith.addf %369, %368 : vector<2x32xf32>
    %371 = arith.divf %369, %370 : vector<2x32xf32>
    %372 = arith.mulf %363, %316 : vector<2x32xf32>
    %373 = arith.mulf %357, %365 : vector<2x32xf32>
    %374 = arith.addf %372, %373 : vector<2x32xf32>
    %375 = math.tanh %374 : vector<2x32xf32>
    %376 = arith.mulf %371, %375 : vector<2x32xf32>
    %377 = vector.extract_strided_slice %13 {offsets = [12, 0], sizes = [2, 128], strides = [1, 1]} : vector<16x128xf32> to vector<2x128xf32>
    %378 = arith.truncf %351 : vector<2x32xf32> to vector<2x32xbf16>
    %cst_76 = arith.constant dense<0.000000e+00> : vector<2x128xf32>
    %379 = tpu.matmul %378, %22, %cst_76 {dimension_numbers = #tpu.dot_dimension_numbers<[1], [0], [0], [1], [0, 0, 1, 1], [], []>} : vector<2x32xbf16>, vector<32x128xbf16>, vector<2x128xf32> -> vector<2x128xf32>
    %380 = arith.addf %377, %379 : vector<2x128xf32>
    %381 = vector.extract_strided_slice %20 {offsets = [2, 0], sizes = [2, 128], strides = [1, 1]} : vector<16x128xf32> to vector<2x128xf32>
    %382 = arith.truncf %376 : vector<2x32xf32> to vector<2x32xbf16>
    %cst_77 = arith.constant dense<0.000000e+00> : vector<2x128xf32>
    %383 = tpu.matmul %382, %24, %cst_77 {dimension_numbers = #tpu.dot_dimension_numbers<[1], [0], [0], [1], [0, 0, 1, 1], [], []>} : vector<2x32xbf16>, vector<32x128xbf16>, vector<2x128xf32> -> vector<2x128xf32>
    %384 = arith.addf %381, %383 : vector<2x128xf32>
    %385 = vector.extract_strided_slice %380 {offsets = [0, 0], sizes = [2, 32], strides = [1, 1]} : vector<2x128xf32> to vector<2x32xf32>
    %386 = arith.negf %385 : vector<2x32xf32>
    %387 = math.exp %386 : vector<2x32xf32>
    %cst_78 = arith.constant 1.000000e+00 : f32
    %388 = vector.broadcast %cst_78 : f32 to vector<2x32xf32>
    %389 = arith.addf %388, %387 : vector<2x32xf32>
    %390 = arith.divf %388, %389 : vector<2x32xf32>
    %391 = vector.extract_strided_slice %380 {offsets = [0, 32], sizes = [2, 32], strides = [1, 1]} : vector<2x128xf32> to vector<2x32xf32>
    %392 = arith.negf %391 : vector<2x32xf32>
    %393 = math.exp %392 : vector<2x32xf32>
    %cst_79 = arith.constant 1.000000e+00 : f32
    %394 = vector.broadcast %cst_79 : f32 to vector<2x32xf32>
    %395 = arith.addf %394, %393 : vector<2x32xf32>
    %396 = arith.divf %394, %395 : vector<2x32xf32>
    %397 = vector.extract_strided_slice %380 {offsets = [0, 64], sizes = [2, 32], strides = [1, 1]} : vector<2x128xf32> to vector<2x32xf32>
    %398 = math.tanh %397 : vector<2x32xf32>
    %399 = vector.extract_strided_slice %380 {offsets = [0, 96], sizes = [2, 32], strides = [1, 1]} : vector<2x128xf32> to vector<2x32xf32>
    %400 = arith.negf %399 : vector<2x32xf32>
    %401 = math.exp %400 : vector<2x32xf32>
    %cst_80 = arith.constant 1.000000e+00 : f32
    %402 = vector.broadcast %cst_80 : f32 to vector<2x32xf32>
    %403 = arith.addf %402, %401 : vector<2x32xf32>
    %404 = arith.divf %402, %403 : vector<2x32xf32>
    %405 = arith.mulf %396, %349 : vector<2x32xf32>
    %406 = arith.mulf %390, %398 : vector<2x32xf32>
    %407 = arith.addf %405, %406 : vector<2x32xf32>
    %408 = math.tanh %407 : vector<2x32xf32>
    %409 = arith.mulf %404, %408 : vector<2x32xf32>
    %410 = vector.extract_strided_slice %384 {offsets = [0, 0], sizes = [2, 32], strides = [1, 1]} : vector<2x128xf32> to vector<2x32xf32>
    %411 = arith.negf %410 : vector<2x32xf32>
    %412 = math.exp %411 : vector<2x32xf32>
    %cst_81 = arith.constant 1.000000e+00 : f32
    %413 = vector.broadcast %cst_81 : f32 to vector<2x32xf32>
    %414 = arith.addf %413, %412 : vector<2x32xf32>
    %415 = arith.divf %413, %414 : vector<2x32xf32>
    %416 = vector.extract_strided_slice %384 {offsets = [0, 32], sizes = [2, 32], strides = [1, 1]} : vector<2x128xf32> to vector<2x32xf32>
    %417 = arith.negf %416 : vector<2x32xf32>
    %418 = math.exp %417 : vector<2x32xf32>
    %cst_82 = arith.constant 1.000000e+00 : f32
    %419 = vector.broadcast %cst_82 : f32 to vector<2x32xf32>
    %420 = arith.addf %419, %418 : vector<2x32xf32>
    %421 = arith.divf %419, %420 : vector<2x32xf32>
    %422 = vector.extract_strided_slice %384 {offsets = [0, 64], sizes = [2, 32], strides = [1, 1]} : vector<2x128xf32> to vector<2x32xf32>
    %423 = math.tanh %422 : vector<2x32xf32>
    %424 = vector.extract_strided_slice %384 {offsets = [0, 96], sizes = [2, 32], strides = [1, 1]} : vector<2x128xf32> to vector<2x32xf32>
    %425 = arith.negf %424 : vector<2x32xf32>
    %426 = math.exp %425 : vector<2x32xf32>
    %cst_83 = arith.constant 1.000000e+00 : f32
    %427 = vector.broadcast %cst_83 : f32 to vector<2x32xf32>
    %428 = arith.addf %427, %426 : vector<2x32xf32>
    %429 = arith.divf %427, %428 : vector<2x32xf32>
    %430 = arith.mulf %421, %374 : vector<2x32xf32>
    %431 = arith.mulf %415, %423 : vector<2x32xf32>
    %432 = arith.addf %430, %431 : vector<2x32xf32>
    %433 = math.tanh %432 : vector<2x32xf32>
    %434 = arith.mulf %429, %433 : vector<2x32xf32>
    %435 = vector.extract_strided_slice %13 {offsets = [14, 0], sizes = [2, 128], strides = [1, 1]} : vector<16x128xf32> to vector<2x128xf32>
    %436 = arith.truncf %409 : vector<2x32xf32> to vector<2x32xbf16>
    %cst_84 = arith.constant dense<0.000000e+00> : vector<2x128xf32>
    %437 = tpu.matmul %436, %22, %cst_84 {dimension_numbers = #tpu.dot_dimension_numbers<[1], [0], [0], [1], [0, 0, 1, 1], [], []>} : vector<2x32xbf16>, vector<32x128xbf16>, vector<2x128xf32> -> vector<2x128xf32>
    %438 = arith.addf %435, %437 : vector<2x128xf32>
    %439 = vector.extract_strided_slice %20 {offsets = [0, 0], sizes = [2, 128], strides = [1, 1]} : vector<16x128xf32> to vector<2x128xf32>
    %440 = arith.truncf %434 : vector<2x32xf32> to vector<2x32xbf16>
    %cst_85 = arith.constant dense<0.000000e+00> : vector<2x128xf32>
    %441 = tpu.matmul %440, %24, %cst_85 {dimension_numbers = #tpu.dot_dimension_numbers<[1], [0], [0], [1], [0, 0, 1, 1], [], []>} : vector<2x32xbf16>, vector<32x128xbf16>, vector<2x128xf32> -> vector<2x128xf32>
    %442 = arith.addf %439, %441 : vector<2x128xf32>
    %443 = vector.extract_strided_slice %438 {offsets = [0, 0], sizes = [2, 32], strides = [1, 1]} : vector<2x128xf32> to vector<2x32xf32>
    %444 = arith.negf %443 : vector<2x32xf32>
    %445 = math.exp %444 : vector<2x32xf32>
    %cst_86 = arith.constant 1.000000e+00 : f32
    %446 = vector.broadcast %cst_86 : f32 to vector<2x32xf32>
    %447 = arith.addf %446, %445 : vector<2x32xf32>
    %448 = arith.divf %446, %447 : vector<2x32xf32>
    %449 = vector.extract_strided_slice %438 {offsets = [0, 32], sizes = [2, 32], strides = [1, 1]} : vector<2x128xf32> to vector<2x32xf32>
    %450 = arith.negf %449 : vector<2x32xf32>
    %451 = math.exp %450 : vector<2x32xf32>
    %cst_87 = arith.constant 1.000000e+00 : f32
    %452 = vector.broadcast %cst_87 : f32 to vector<2x32xf32>
    %453 = arith.addf %452, %451 : vector<2x32xf32>
    %454 = arith.divf %452, %453 : vector<2x32xf32>
    %455 = vector.extract_strided_slice %438 {offsets = [0, 64], sizes = [2, 32], strides = [1, 1]} : vector<2x128xf32> to vector<2x32xf32>
    %456 = math.tanh %455 : vector<2x32xf32>
    %457 = vector.extract_strided_slice %438 {offsets = [0, 96], sizes = [2, 32], strides = [1, 1]} : vector<2x128xf32> to vector<2x32xf32>
    %458 = arith.negf %457 : vector<2x32xf32>
    %459 = math.exp %458 : vector<2x32xf32>
    %cst_88 = arith.constant 1.000000e+00 : f32
    %460 = vector.broadcast %cst_88 : f32 to vector<2x32xf32>
    %461 = arith.addf %460, %459 : vector<2x32xf32>
    %462 = arith.divf %460, %461 : vector<2x32xf32>
    %463 = arith.mulf %454, %407 : vector<2x32xf32>
    %464 = arith.mulf %448, %456 : vector<2x32xf32>
    %465 = arith.addf %463, %464 : vector<2x32xf32>
    %466 = math.tanh %465 : vector<2x32xf32>
    %467 = arith.mulf %462, %466 : vector<2x32xf32>
    %468 = vector.extract_strided_slice %442 {offsets = [0, 0], sizes = [2, 32], strides = [1, 1]} : vector<2x128xf32> to vector<2x32xf32>
    %469 = arith.negf %468 : vector<2x32xf32>
    %470 = math.exp %469 : vector<2x32xf32>
    %cst_89 = arith.constant 1.000000e+00 : f32
    %471 = vector.broadcast %cst_89 : f32 to vector<2x32xf32>
    %472 = arith.addf %471, %470 : vector<2x32xf32>
    %473 = arith.divf %471, %472 : vector<2x32xf32>
    %474 = vector.extract_strided_slice %442 {offsets = [0, 32], sizes = [2, 32], strides = [1, 1]} : vector<2x128xf32> to vector<2x32xf32>
    %475 = arith.negf %474 : vector<2x32xf32>
    %476 = math.exp %475 : vector<2x32xf32>
    %cst_90 = arith.constant 1.000000e+00 : f32
    %477 = vector.broadcast %cst_90 : f32 to vector<2x32xf32>
    %478 = arith.addf %477, %476 : vector<2x32xf32>
    %479 = arith.divf %477, %478 : vector<2x32xf32>
    %480 = vector.extract_strided_slice %442 {offsets = [0, 64], sizes = [2, 32], strides = [1, 1]} : vector<2x128xf32> to vector<2x32xf32>
    %481 = math.tanh %480 : vector<2x32xf32>
    %482 = vector.extract_strided_slice %442 {offsets = [0, 96], sizes = [2, 32], strides = [1, 1]} : vector<2x128xf32> to vector<2x32xf32>
    %483 = arith.negf %482 : vector<2x32xf32>
    %484 = math.exp %483 : vector<2x32xf32>
    %cst_91 = arith.constant 1.000000e+00 : f32
    %485 = vector.broadcast %cst_91 : f32 to vector<2x32xf32>
    %486 = arith.addf %485, %484 : vector<2x32xf32>
    %487 = arith.divf %485, %486 : vector<2x32xf32>
    %488 = arith.mulf %479, %432 : vector<2x32xf32>
    %489 = arith.mulf %473, %481 : vector<2x32xf32>
    %490 = arith.addf %488, %489 : vector<2x32xf32>
    %491 = math.tanh %490 : vector<2x32xf32>
    %492 = arith.mulf %487, %491 : vector<2x32xf32>
    %c0_92 = arith.constant 0 : index
    %c0_93 = arith.constant 0 : index
    %493 = vector.load %arg6[%c0_92, %c0_93] : memref<64x4xf32, #tpu.memory_space<vmem>>, vector<32x4xf32>
    %cst_94 = arith.constant dense<0.000000e+00> : vector<2x4xf32>
    %494 = tpu.matmul %467, %493, %cst_94 {dimension_numbers = #tpu.dot_dimension_numbers<[1], [0], [0], [1], [0, 0, 1, 1], [], []>} : vector<2x32xf32>, vector<32x4xf32>, vector<2x4xf32> -> vector<2x4xf32>
    %c32 = arith.constant 32 : index
    %c0_95 = arith.constant 0 : index
    %495 = vector.load %arg6[%c32, %c0_95] : memref<64x4xf32, #tpu.memory_space<vmem>>, vector<32x4xf32>
    %cst_96 = arith.constant dense<0.000000e+00> : vector<2x4xf32>
    %496 = tpu.matmul %492, %495, %cst_96 {dimension_numbers = #tpu.dot_dimension_numbers<[1], [0], [0], [1], [0, 0, 1, 1], [], []>} : vector<2x32xf32>, vector<32x4xf32>, vector<2x4xf32> -> vector<2x4xf32>
    %497 = arith.addf %494, %496 : vector<2x4xf32>
    %c0_97 = arith.constant 0 : index
    %c0_98 = arith.constant 0 : index
    %498 = vector.load %arg7[%c0_97, %c0_98] : memref<1x4xf32, #tpu.memory_space<vmem>>, vector<1x4xf32>
    %499 = vector.broadcast %498 : vector<1x4xf32> to vector<2x4xf32>
    %500 = arith.addf %497, %499 : vector<2x4xf32>
    %c0_99 = arith.constant 0 : index
    %c0_100 = arith.constant 0 : index
    %501 = vector.load %arg8[%c0_99, %c0_100] : memref<2x4xf32, #tpu.memory_space<vmem>>, vector<2x4xf32>
    tpu.vector_store %arg8[%c0_99, %c0_100], %500 {strides = array<i32>} : memref<2x4xf32, #tpu.memory_space<vmem>>, vector<2x4xf32>,
    return
  }
}

</mosaic_0001>

<llo_original>
// kernel: _lambda_.3
$region0: #{_lambda_.3}
  #allocation0 [shape = 'u32[]', space=smem, size = 0x4, offset = 0x4, fixed_abs, tag = 'smem constant byte address 0x4 - core index']
  #allocation1 [shape = 'u32[144,128]{1,0:T(1,128)}', space=vmem, size = 0x12000, scoped, tag = 'internal scratch']
  %s0 = inlined_call_operand.vmem [shape: bf16[16,32], index: 0, kind: input, shape index: {}, may-alias: {0,1}]
  %s1 = inlined_call_operand.vmem [shape: bf16[16,32], index: 1, kind: input, shape index: {}, may-alias: {0,1}]
  %s2 = inlined_call_operand.vmem [shape: bf16[2,32,128], index: 2, kind: input, shape index: {}]
  %s3 = inlined_call_operand.vmem [shape: bf16[2,32,128], index: 3, kind: input, shape index: {}]
  %s4 = inlined_call_operand.vmem [shape: f32[2,1,128], index: 4, kind: input, shape index: {}]
  %s5 = inlined_call_operand.vmem [shape: f32[16,64], index: 5, kind: output, shape index: {}]
  %s6 = sld [smem:[#allocation0]]
  $region30: #{_lambda_.3} parent=0
    _
  %s8 = ssub.s32 1, %s6
  %s9 = scalar_select 0, %s8, %s6
  // Predicated region
  $region2: #{_lambda_.3} parent=0 // pred_check
    _
  $region3: #{_lambda_.3} parent=0 // pred_check_branch
    %11 = sbr.rel (0) target = $region5
  $region4: #{_lambda_.3} parent=0 // pred_region
    _
  $region5: #{_lambda_.3} parent=0 // pred_fallthru
    _
  // Predicated region
  $region6: #{_lambda_.3} parent=0 // pred_check
    _
  $region7: #{_lambda_.3} parent=0 // pred_check_branch
    %13 = sbr.rel (0) target = $region9
  $region8: #{_lambda_.3} parent=0 // pred_region
    _
  $region9: #{_lambda_.3} parent=0 // pred_fallthru
    _
  // Predicated region
  $region10: #{_lambda_.3} parent=0 // pred_check
    _
  $region11: #{_lambda_.3} parent=0 // pred_check_branch
    %15 = sbr.rel (0) target = $region13
  $region12: #{_lambda_.3} parent=0 // pred_region
    _
  $region13: #{_lambda_.3} parent=0 // pred_fallthru
    _
  // Predicated region
  $region14: #{_lambda_.3} parent=0 // pred_check
    _
  $region15: #{_lambda_.3} parent=0 // pred_check_branch
    %17 = sbr.rel (0) target = $region17
  $region16: #{_lambda_.3} parent=0 // pred_region
    _
  $region17: #{_lambda_.3} parent=0 // pred_fallthru
    _
  // Predicated region
  $region18: #{_lambda_.3} parent=0 // pred_check
    _
  $region19: #{_lambda_.3} parent=0 // pred_check_branch
    %19 = sbr.rel (0) target = $region21
  $region20: #{_lambda_.3} parent=0 // pred_region
    _
  $region21: #{_lambda_.3} parent=0 // pred_fallthru
    _
  %v21 = vld [vmem:[%s0] sm:$0xf]
  %v22 = vld [vmem:[%s0 + $0x4] sm:$0xf]
  %v23 = vld [vmem:[%s2] sm:$0xf]
  %v24 = vld [vmem:[%s2 + $0x4] sm:$0xf]
  %v25 = vld [vmem:[%s2 + $0x8] sm:$0xf]
  %v26 = vld [vmem:[%s2 + $0xc] sm:$0xf]
  %v27 = vld [vmem:[%s4] sm:$0x1]
  %v29 = vlaneseq
  %v30 = vshrl.u32 %v29, 7
  %v31 = vsub.s32 0, %v30
  %v32 = vrot.slane %v27, %v31
  %v36 = vunpack.c.l.b16 %v21
  %v37 = vunpack.c.l.b16 %v22
  %v38 = vpack.c.b16 %v37, %v36
  %v43 = vunpack.c.l.b16 %v23
  %v44 = vunpack.c.l.b16 %v24
  %v45 = vunpack.c.l.b16 %v25
  %v46 = vunpack.c.l.b16 %v26
  %v47 = vpack.c.b16 %v44, %v43
  %v48 = vpack.c.b16 %v46, %v45
  %vm51 = vcmask 261120
  %v53 = vsel %vm51, %v38, 0
  %55 = vmatprep.subr.bf16.mxu0 0
  %56 = vmatpush1.bf16.msra.mxu0 %v47
  %57 = vmatprep.subr.bf16.mxu0 0
  %58 = vmatpush1.bf16.msra.mxu0 %v48
  %59 = vmatprep.subr.bf16.mxu0 0
  %60 = vmatpush1.bf16.msra.mxu0 0
  %61 = vmatprep.subr.bf16.mxu0 0
  %62 = vmatpush1.bf16.msra.mxu0 0
  %63 = vmatprep.subr.bf16.mxu0 0
  %64 = vmatpush1.bf16.msra.mxu0 0
  %65 = vmatprep.subr.bf16.mxu0 0
  %66 = vmatpush1.bf16.msra.mxu0 0
  %67 = vmatprep.subr.bf16.mxu0 0
  %68 = vmatpush1.bf16.msra.mxu0 0
  %69 = vmatprep.subr.bf16.mxu0 0
  %70 = vmatpush1.bf16.msra.mxu0 0
  %71 = vmatprep.subr.bf16.mxu0 0
  %72 = vmatpush1.bf16.msra.mxu0 0
  %73 = vmatprep.subr.bf16.mxu0 0
  %74 = vmatpush1.bf16.msra.mxu0 0
  %75 = vmatprep.subr.bf16.mxu0 0
  %76 = vmatpush1.bf16.msra.mxu0 0
  %77 = vmatprep.subr.bf16.mxu0 0
  %78 = vmatpush1.bf16.msra.mxu0 0
  %79 = vmatprep.subr.bf16.mxu0 0
  %80 = vmatpush1.bf16.msra.mxu0 0
  %81 = vmatprep.subr.bf16.mxu0 0
  %82 = vmatpush1.bf16.msra.mxu0 0
  %83 = vmatprep.subr.bf16.mxu0 0
  %84 = vmatpush1.bf16.msra.mxu0 0
  %85 = vmatprep.subr.bf16.mxu0 0
  %86 = vmatpush1.bf16.msra.mxu0 0
  %87 = vmatprep.mubr.bf16.mxu0 0
  %88 = vmatmul.mubr.bf16.gmra.mrb[0].mxu0 %v53
  %v89 = vpop.f32.mrb[0].mxu0
  %v90 = vadd.f32 %v32, %v89
  %v91 = vpop.f32.mrb[0].mxu0
  %v92 = vpop.f32.mrb[0].mxu0
  %v93 = vadd.f32 %v32, %v92
  %v94 = vpop.f32.mrb[0].mxu0
  %95 = vdwg.mxu0
  %v96 = vld [vmem:[%s1] sm:$0xf]
  %v97 = vld [vmem:[%s1 + $0x4] sm:$0xf]
  %s98 = scalar_lea.vmem %s2, 16
  %v99 = vld [vmem:[%s98] sm:$0xf]
  %v100 = vld [vmem:[%s98 + $0x4] sm:$0xf]
  %v101 = vld [vmem:[%s98 + $0x8] sm:$0xf]
  %v102 = vld [vmem:[%s98 + $0xc] sm:$0xf]
  %s103 = scalar_lea.vmem %s4, 1
  %v104 = vld [vmem:[%s103] sm:$0x1]
  %v106 = vlaneseq
  %v107 = vshrl.u32 %v106, 7
  %v108 = vsub.s32 0, %v107
  %v109 = vrot.slane %v104, %v108
  %v113 = vunpack.c.l.b16 %v96
  %v114 = vunpack.c.l.b16 %v97
  %v115 = vpack.c.b16 %v114, %v113
  %v120 = vunpack.c.l.b16 %v99
  %v121 = vunpack.c.l.b16 %v100
  %v122 = vunpack.c.l.b16 %v101
  %v123 = vunpack.c.l.b16 %v102
  %v124 = vpack.c.b16 %v121, %v120
  %v125 = vpack.c.b16 %v123, %v122
  %v129 = vsel %vm51, %v115, 0
  %131 = vmatprep.subr.bf16.mxu0 0
  %132 = vmatpush1.bf16.msra.mxu0 %v124
  %133 = vmatprep.subr.bf16.mxu0 0
  %134 = vmatpush1.bf16.msra.mxu0 %v125
  %135 = vmatprep.subr.bf16.mxu0 0
  %136 = vmatpush1.bf16.msra.mxu0 0
  %137 = vmatprep.subr.bf16.mxu0 0
  %138 = vmatpush1.bf16.msra.mxu0 0
  %139 = vmatprep.subr.bf16.mxu0 0
  %140 = vmatpush1.bf16.msra.mxu0 0
  %141 = vmatprep.subr.bf16.mxu0 0
  %142 = vmatpush1.bf16.msra.mxu0 0
  %143 = vmatprep.subr.bf16.mxu0 0
  %144 = vmatpush1.bf16.msra.mxu0 0
  %145 = vmatprep.subr.bf16.mxu0 0
  %146 = vmatpush1.bf16.msra.mxu0 0
  %147 = vmatprep.subr.bf16.mxu0 0
  %148 = vmatpush1.bf16.msra.mxu0 0
  %149 = vmatprep.subr.bf16.mxu0 0
  %150 = vmatpush1.bf16.msra.mxu0 0
  %151 = vmatprep.subr.bf16.mxu0 0
  %152 = vmatpush1.bf16.msra.mxu0 0
  %153 = vmatprep.subr.bf16.mxu0 0
  %154 = vmatpush1.bf16.msra.mxu0 0
  %155 = vmatprep.subr.bf16.mxu0 0
  %156 = vmatpush1.bf16.msra.mxu0 0
  %157 = vmatprep.subr.bf16.mxu0 0
  %158 = vmatpush1.bf16.msra.mxu0 0
  %159 = vmatprep.subr.bf16.mxu0 0
  %160 = vmatpush1.bf16.msra.mxu0 0
  %161 = vmatprep.subr.bf16.mxu0 0
  %162 = vmatpush1.bf16.msra.mxu0 0
  %163 = vmatprep.mubr.bf16.mxu0 0
  %164 = vmatmul.mubr.bf16.gmra.mrb[0].mxu0 %v129
  %v165 = vpop.f32.mrb[0].mxu0
  %v166 = vadd.f32 %v109, %v165
  %v167 = vpop.f32.mrb[0].mxu0
  %v168 = vpop.f32.mrb[0].mxu0
  %v169 = vadd.f32 %v109, %v168
  %v170 = vpop.f32.mrb[0].mxu0
  %171 = vdwg.mxu0
  %v172 = vld [vmem:[%s3] sm:$0xf]
  %v173 = vld [vmem:[%s3 + $0x4] sm:$0xf]
  %v174 = vld [vmem:[%s3 + $0x8] sm:$0xf]
  %v175 = vld [vmem:[%s3 + $0xc] sm:$0xf]
  %s176 = scalar_lea.vmem %s3, 16
  %v177 = vld [vmem:[%s176] sm:$0xf]
  %v178 = vld [vmem:[%s176 + $0x4] sm:$0xf]
  %v179 = vld [vmem:[%s176 + $0x8] sm:$0xf]
  %v180 = vld [vmem:[%s176 + $0xc] sm:$0xf]
  %v185 = vunpack.c.l.b16 %v172
  %v186 = vunpack.c.l.b16 %v173
  %v187 = vunpack.c.l.b16 %v174
  %v188 = vunpack.c.l.b16 %v175
  %v189 = vpack.c.b16 %v186, %v185
  %v190 = vpack.c.b16 %v188, %v187
  %v194 = vsel %vm51, 0, 0
  %196 = vmatprep.subr.bf16.mxu0 0
  %197 = vmatpush1.bf16.msra.mxu0 %v189
  %198 = vmatprep.subr.bf16.mxu0 0
  %199 = vmatpush1.bf16.msra.mxu0 %v190
  %200 = vmatprep.subr.bf16.mxu0 0
  %201 = vmatpush1.bf16.msra.mxu0 0
  %202 = vmatprep.subr.bf16.mxu0 0
  %203 = vmatpush1.bf16.msra.mxu0 0
  %204 = vmatprep.subr.bf16.mxu0 0
  %205 = vmatpush1.bf16.msra.mxu0 0
  %206 = vmatprep.subr.bf16.mxu0 0
  %207 = vmatpush1.bf16.msra.mxu0 0
  %208 = vmatprep.subr.bf16.mxu0 0
  %209 = vmatpush1.bf16.msra.mxu0 0
  %210 = vmatprep.subr.bf16.mxu0 0
  %211 = vmatpush1.bf16.msra.mxu0 0
  %212 = vmatprep.subr.bf16.mxu0 0
  %213 = vmatpush1.bf16.msra.mxu0 0
  %214 = vmatprep.subr.bf16.mxu0 0
  %215 = vmatpush1.bf16.msra.mxu0 0
  %216 = vmatprep.subr.bf16.mxu0 0
  %217 = vmatpush1.bf16.msra.mxu0 0
  %218 = vmatprep.subr.bf16.mxu0 0
  %219 = vmatpush1.bf16.msra.mxu0 0
  %220 = vmatprep.subr.bf16.mxu0 0
  %221 = vmatpush1.bf16.msra.mxu0 0
  %222 = vmatprep.subr.bf16.mxu0 0
  %223 = vmatpush1.bf16.msra.mxu0 0
  %224 = vmatprep.subr.bf16.mxu0 0
  %225 = vmatpush1.bf16.msra.mxu0 0
  %226 = vmatprep.subr.bf16.mxu0 0
  %227 = vmatpush1.bf16.msra.mxu0 0
  %228 = vmatprep.mubr.bf16.mxu0 0
  %229 = vmatmul.mubr.bf16.gmra.mrb[0].mxu0 %v194
  %v230 = vpop.f32.mrb[0].mxu0
  %v231 = vadd.f32 0.0, %v230
  %v232 = vpop.f32.mrb[0].mxu0
  %v233 = vpop.f32.mrb[0].mxu0
  %v234 = vpop.f32.mrb[0].mxu0
  %235 = vdwg.mxu0
  %v236 = vadd.f32 %v90, %v231
  %v241 = vunpack.c.l.b16 %v177
  %v242 = vunpack.c.l.b16 %v178
  %v243 = vunpack.c.l.b16 %v179
  %v244 = vunpack.c.l.b16 %v180
  %v245 = vpack.c.b16 %v242, %v241
  %v246 = vpack.c.b16 %v244, %v243
  %249 = vmatprep.subr.bf16.mxu0 0
  %250 = vmatpush1.bf16.msra.mxu0 %v245
  %251 = vmatprep.subr.bf16.mxu0 0
  %252 = vmatpush1.bf16.msra.mxu0 %v246
  %253 = vmatprep.subr.bf16.mxu0 0
  %254 = vmatpush1.bf16.msra.mxu0 0
  %255 = vmatprep.subr.bf16.mxu0 0
  %256 = vmatpush1.bf16.msra.mxu0 0
  %257 = vmatprep.subr.bf16.mxu0 0
  %258 = vmatpush1.bf16.msra.mxu0 0
  %259 = vmatprep.subr.bf16.mxu0 0
  %260 = vmatpush1.bf16.msra.mxu0 0
  %261 = vmatprep.subr.bf16.mxu0 0
  %262 = vmatpush1.bf16.msra.mxu0 0
  %263 = vmatprep.subr.bf16.mxu0 0
  %264 = vmatpush1.bf16.msra.mxu0 0
  %265 = vmatprep.subr.bf16.mxu0 0
  %266 = vmatpush1.bf16.msra.mxu0 0
  %267 = vmatprep.subr.bf16.mxu0 0
  %268 = vmatpush1.bf16.msra.mxu0 0
  %269 = vmatprep.subr.bf16.mxu0 0
  %270 = vmatpush1.bf16.msra.mxu0 0
  %271 = vmatprep.subr.bf16.mxu0 0
  %272 = vmatpush1.bf16.msra.mxu0 0
  %273 = vmatprep.subr.bf16.mxu0 0
  %274 = vmatpush1.bf16.msra.mxu0 0
  %275 = vmatprep.subr.bf16.mxu0 0
  %276 = vmatpush1.bf16.msra.mxu0 0
  %277 = vmatprep.subr.bf16.mxu0 0
  %278 = vmatpush1.bf16.msra.mxu0 0
  %279 = vmatprep.subr.bf16.mxu0 0
  %280 = vmatpush1.bf16.msra.mxu0 0
  %281 = vmatprep.mubr.bf16.mxu0 0
  %282 = vmatmul.mubr.bf16.gmra.mrb[0].mxu0 %v194
  %v283 = vpop.f32.mrb[0].mxu0
  %v284 = vadd.f32 0.0, %v283
  %v285 = vpop.f32.mrb[0].mxu0
  %v286 = vpop.f32.mrb[0].mxu0
  %v287 = vpop.f32.mrb[0].mxu0
  %288 = vdwg.mxu0
  %v290 = vrot.slane %v284, 2
  %v292 = vadd.f32 %v169, %v290
  %v293 = vxor.u32 %v236, 2147483648
  %v294 = vmul.f32 %v293, 1.442695
  %v295 = vpow.pop %v294
  %v296 = vadd.f32 %v295, 1.0
  %v297 = vrcp.pop %v296
  %v298 = vmul.f32 1.0, %v297
  %v299 = vtanh.pop %v236
  %v300 = vmul.f32 %v298, 0.0
  %302 = vrot.lane.b32.xlu0 %v299, 64
  %v303 = vpop.permute.xlu0 %302
  %v305 = vmul.f32 %v298, %v303
  %307 = vrot.lane.b32.xlu0 %v305, 32
  %v308 = vpop.permute.xlu0 %307
  %v310 = vadd.f32 %v300, %v308
  %v311 = vtanh.pop %v310
  %313 = vrot.lane.b32.xlu0 %v311, 64
  %v314 = vpop.permute.xlu0 %313
  %v316 = vmul.f32 %v298, %v314
  %v317 = vxor.u32 %v292, 2147483648
  %v318 = vmul.f32 %v317, 1.442695
  %v319 = vpow.pop %v318
  %v320 = vadd.f32 %v319, 1.0
  %v321 = vrcp.pop %v320
  %v322 = vmul.f32 1.0, %v321
  %v323 = vtanh.pop %v292
  %v324 = vmul.f32 %v322, 0.0
  %326 = vrot.lane.b32.xlu0 %v323, 64
  %v327 = vpop.permute.xlu0 %326
  %v329 = vmul.f32 %v322, %v327
  %331 = vrot.lane.b32.xlu0 %v329, 32
  %v332 = vpop.permute.xlu0 %331
  %v334 = vadd.f32 %v324, %v332
  %v335 = vtanh.pop %v334
  %337 = vrot.lane.b32.xlu0 %v335, 64
  %v338 = vpop.permute.xlu0 %337
  %v340 = vmul.f32 %v322, %v338
  %342 = vrot.lane.b32.xlu0 %v316, 32
  %v343 = vpop.permute.xlu0 %342
  %vm345 = vcmask 254976
  %346 = vst.msk [vmem:[%s5] sm:$0x3] %vm345, %v343
  %348 = vrot.lane.b32.xlu0 %v340, 64
  %v349 = vpop.permute.xlu0 %348
  %vm351 = vcmask 523526
  %352 = vst.msk [vmem:[%s5 - $0x6] sm:$0xc0] %vm351, %v349
  %v353 = vpack.c.bf16 %v316, %v316
  %355 = vrot.lane.b32.xlu0 %v353, 32
  %v356 = vpop.permute.xlu0 %355
  %v358 = vsel %vm51, %v356, 0
  %360 = vmatprep.subr.bf16.mxu0 0
  %361 = vmatpush1.bf16.msra.mxu0 %v189
  %362 = vmatprep.subr.bf16.mxu0 0
  %363 = vmatpush1.bf16.msra.mxu0 %v190
  %364 = vmatprep.subr.bf16.mxu0 0
  %365 = vmatpush1.bf16.msra.mxu0 0
  %366 = vmatprep.subr.bf16.mxu0 0
  %367 = vmatpush1.bf16.msra.mxu0 0
  %368 = vmatprep.subr.bf16.mxu0 0
  %369 = vmatpush1.bf16.msra.mxu0 0
  %370 = vmatprep.subr.bf16.mxu0 0
  %371 = vmatpush1.bf16.msra.mxu0 0
  %372 = vmatprep.subr.bf16.mxu0 0
  %373 = vmatpush1.bf16.msra.mxu0 0
  %374 = vmatprep.subr.bf16.mxu0 0
  %375 = vmatpush1.bf16.msra.mxu0 0
  %376 = vmatprep.subr.bf16.mxu0 0
  %377 = vmatpush1.bf16.msra.mxu0 0
  %378 = vmatprep.subr.bf16.mxu0 0
  %379 = vmatpush1.bf16.msra.mxu0 0
  %380 = vmatprep.subr.bf16.mxu0 0
  %381 = vmatpush1.bf16.msra.mxu0 0
  %382 = vmatprep.subr.bf16.mxu0 0
  %383 = vmatpush1.bf16.msra.mxu0 0
  %384 = vmatprep.subr.bf16.mxu0 0
  %385 = vmatpush1.bf16.msra.mxu0 0
  %386 = vmatprep.subr.bf16.mxu0 0
  %387 = vmatpush1.bf16.msra.mxu0 0
  %388 = vmatprep.subr.bf16.mxu0 0
  %389 = vmatpush1.bf16.msra.mxu0 0
  %390 = vmatprep.subr.bf16.mxu0 0
  %391 = vmatpush1.bf16.msra.mxu0 0
  %392 = vmatprep.mubr.bf16.mxu0 0
  %393 = vmatmul.mubr.bf16.gmra.mrb[0].mxu0 %v358
  %v394 = vpop.f32.mrb[0].mxu0
  %v395 = vadd.f32 0.0, %v394
  %v396 = vpop.f32.mrb[0].mxu0
  %v397 = vpop.f32.mrb[0].mxu0
  %v398 = vpop.f32.mrb[0].mxu0
  %399 = vdwg.mxu0
  %v401 = vrot.slane %v395, 6
  %v403 = vadd.f32 %v90, %v401
  %v404 = vpack.c.bf16 %v340, %v340
  %v406 = vrot.slane %v404, 3
  %407 = vrot.lane.b32.xlu0 %v406, 32
  %v408 = vpop.permute.xlu0 %407
  %v410 = vsel %vm51, %v408, 0
  %412 = vmatprep.subr.bf16.mxu0 0
  %413 = vmatpush1.bf16.msra.mxu0 %v245
  %414 = vmatprep.subr.bf16.mxu0 0
  %415 = vmatpush1.bf16.msra.mxu0 %v246
  %416 = vmatprep.subr.bf16.mxu0 0
  %417 = vmatpush1.bf16.msra.mxu0 0
  %418 = vmatprep.subr.bf16.mxu0 0
  %419 = vmatpush1.bf16.msra.mxu0 0
  %420 = vmatprep.subr.bf16.mxu0 0
  %421 = vmatpush1.bf16.msra.mxu0 0
  %422 = vmatprep.subr.bf16.mxu0 0
  %423 = vmatpush1.bf16.msra.mxu0 0
  %424 = vmatprep.subr.bf16.mxu0 0
  %425 = vmatpush1.bf16.msra.mxu0 0
  %426 = vmatprep.subr.bf16.mxu0 0
  %427 = vmatpush1.bf16.msra.mxu0 0
  %428 = vmatprep.subr.bf16.mxu0 0
  %429 = vmatpush1.bf16.msra.mxu0 0
  %430 = vmatprep.subr.bf16.mxu0 0
  %431 = vmatpush1.bf16.msra.mxu0 0
  %432 = vmatprep.subr.bf16.mxu0 0
  %433 = vmatpush1.bf16.msra.mxu0 0
  %434 = vmatprep.subr.bf16.mxu0 0
  %435 = vmatpush1.bf16.msra.mxu0 0
  %436 = vmatprep.subr.bf16.mxu0 0
  %437 = vmatpush1.bf16.msra.mxu0 0
  %438 = vmatprep.subr.bf16.mxu0 0
  %439 = vmatpush1.bf16.msra.mxu0 0
  %440 = vmatprep.subr.bf16.mxu0 0
  %441 = vmatpush1.bf16.msra.mxu0 0
  %442 = vmatprep.subr.bf16.mxu0 0
  %443 = vmatpush1.bf16.msra.mxu0 0
  %444 = vmatprep.mubr.bf16.mxu0 0
  %445 = vmatmul.mubr.bf16.gmra.mrb[0].mxu0 %v410
  %v446 = vpop.f32.mrb[0].mxu0
  %v447 = vadd.f32 0.0, %v446
  %v448 = vpop.f32.mrb[0].mxu0
  %v449 = vpop.f32.mrb[0].mxu0
  %v450 = vpop.f32.mrb[0].mxu0
  %451 = vdwg.mxu0
  %v453 = vrot.slane %v447, 4
  %v455 = vadd.f32 %v169, %v453
  %v456 = vxor.u32 %v403, 2147483648
  %v457 = vmul.f32 %v456, 1.442695
  %v458 = vpow.pop %v457
  %v459 = vadd.f32 %v458, 1.0
  %v460 = vrcp.pop %v459
  %v461 = vmul.f32 1.0, %v460
  %v462 = vtanh.pop %v403
  %v464 = vrot.slane %v310, 6
  %v466 = vmul.f32 %v461, %v464
  %468 = vrot.lane.b32.xlu0 %v462, 64
  %v469 = vpop.permute.xlu0 %468
  %v471 = vmul.f32 %v461, %v469
  %473 = vrot.lane.b32.xlu0 %v471, 32
  %v474 = vpop.permute.xlu0 %473
  %v476 = vadd.f32 %v466, %v474
  %v477 = vtanh.pop %v476
  %479 = vrot.lane.b32.xlu0 %v477, 64
  %v480 = vpop.permute.xlu0 %479
  %v482 = vmul.f32 %v461, %v480
  %v483 = vxor.u32 %v455, 2147483648
  %v484 = vmul.f32 %v483, 1.442695
  %v485 = vpow.pop %v484
  %v486 = vadd.f32 %v485, 1.0
  %v487 = vrcp.pop %v486
  %v488 = vmul.f32 1.0, %v487
  %v489 = vtanh.pop %v455
  %v491 = vrot.slane %v334, 2
  %v493 = vmul.f32 %v488, %v491
  %495 = vrot.lane.b32.xlu0 %v489, 64
  %v496 = vpop.permute.xlu0 %495
  %v498 = vmul.f32 %v488, %v496
  %500 = vrot.lane.b32.xlu0 %v498, 32
  %v501 = vpop.permute.xlu0 %500
  %v503 = vadd.f32 %v493, %v501
  %v504 = vtanh.pop %v503
  %506 = vrot.lane.b32.xlu0 %v504, 64
  %v507 = vpop.permute.xlu0 %506
  %v509 = vmul.f32 %v488, %v507
  %511 = vrot.lane.b32.xlu0 %v482, 32
  %v512 = vpop.permute.xlu0 %511
  %vm514 = vcmask 257026
  %515 = vst.msk [vmem:[%s5] sm:$0xc] %vm514, %v512
  %517 = vrot.lane.b32.xlu0 %v509, 64
  %v518 = vpop.permute.xlu0 %517
  %vm520 = vcmask 521476
  %521 = vst.msk [vmem:[%s5 - $0x2] sm:$0x30] %vm520, %v518
  %v522 = vpack.c.bf16 %v482, %v482
  %v524 = vrot.slane %v522, 1
  %525 = vrot.lane.b32.xlu0 %v524, 32
  %v526 = vpop.permute.xlu0 %525
  %v528 = vsel %vm51, %v526, 0
  %530 = vmatprep.subr.bf16.mxu0 0
  %531 = vmatpush1.bf16.msra.mxu0 %v189
  %532 = vmatprep.subr.bf16.mxu0 0
  %533 = vmatpush1.bf16.msra.mxu0 %v190
  %534 = vmatprep.subr.bf16.mxu0 0
  %535 = vmatpush1.bf16.msra.mxu0 0
  %536 = vmatprep.subr.bf16.mxu0 0
  %537 = vmatpush1.bf16.msra.mxu0 0
  %538 = vmatprep.subr.bf16.mxu0 0
  %539 = vmatpush1.bf16.msra.mxu0 0
  %540 = vmatprep.subr.bf16.mxu0 0
  %541 = vmatpush1.bf16.msra.mxu0 0
  %542 = vmatprep.subr.bf16.mxu0 0
  %543 = vmatpush1.bf16.msra.mxu0 0
  %544 = vmatprep.subr.bf16.mxu0 0
  %545 = vmatpush1.bf16.msra.mxu0 0
  %546 = vmatprep.subr.bf16.mxu0 0
  %547 = vmatpush1.bf16.msra.mxu0 0
  %548 = vmatprep.subr.bf16.mxu0 0
  %549 = vmatpush1.bf16.msra.mxu0 0
  %550 = vmatprep.subr.bf16.mxu0 0
  %551 = vmatpush1.bf16.msra.mxu0 0
  %552 = vmatprep.subr.bf16.mxu0 0
  %553 = vmatpush1.bf16.msra.mxu0 0
  %554 = vmatprep.subr.bf16.mxu0 0
  %555 = vmatpush1.bf16.msra.mxu0 0
  %556 = vmatprep.subr.bf16.mxu0 0
  %557 = vmatpush1.bf16.msra.mxu0 0
  %558 = vmatprep.subr.bf16.mxu0 0
  %559 = vmatpush1.bf16.msra.mxu0 0
  %560 = vmatprep.subr.bf16.mxu0 0
  %561 = vmatpush1.bf16.msra.mxu0 0
  %562 = vmatprep.mubr.bf16.mxu0 0
  %563 = vmatmul.mubr.bf16.gmra.mrb[0].mxu0 %v528
  %v564 = vpop.f32.mrb[0].mxu0
  %v565 = vadd.f32 0.0, %v564
  %v566 = vpop.f32.mrb[0].mxu0
  %v567 = vpop.f32.mrb[0].mxu0
  %v568 = vpop.f32.mrb[0].mxu0
  %569 = vdwg.mxu0
  %v571 = vrot.slane %v565, 4
  %v573 = vadd.f32 %v90, %v571
  %v574 = vpack.c.bf16 %v509, %v509
  %v576 = vrot.slane %v574, 2
  %577 = vrot.lane.b32.xlu0 %v576, 32
  %v578 = vpop.permute.xlu0 %577
  %v580 = vsel %vm51, %v578, 0
  %582 = vmatprep.subr.bf16.mxu0 0
  %583 = vmatpush1.bf16.msra.mxu0 %v245
  %584 = vmatprep.subr.bf16.mxu0 0
  %585 = vmatpush1.bf16.msra.mxu0 %v246
  %586 = vmatprep.subr.bf16.mxu0 0
  %587 = vmatpush1.bf16.msra.mxu0 0
  %588 = vmatprep.subr.bf16.mxu0 0
  %589 = vmatpush1.bf16.msra.mxu0 0
  %590 = vmatprep.subr.bf16.mxu0 0
  %591 = vmatpush1.bf16.msra.mxu0 0
  %592 = vmatprep.subr.bf16.mxu0 0
  %593 = vmatpush1.bf16.msra.mxu0 0
  %594 = vmatprep.subr.bf16.mxu0 0
  %595 = vmatpush1.bf16.msra.mxu0 0
  %596 = vmatprep.subr.bf16.mxu0 0
  %597 = vmatpush1.bf16.msra.mxu0 0
  %598 = vmatprep.subr.bf16.mxu0 0
  %599 = vmatpush1.bf16.msra.mxu0 0
  %600 = vmatprep.subr.bf16.mxu0 0
  %601 = vmatpush1.bf16.msra.mxu0 0
  %602 = vmatprep.subr.bf16.mxu0 0
  %603 = vmatpush1.bf16.msra.mxu0 0
  %604 = vmatprep.subr.bf16.mxu0 0
  %605 = vmatpush1.bf16.msra.mxu0 0
  %606 = vmatprep.subr.bf16.mxu0 0
  %607 = vmatpush1.bf16.msra.mxu0 0
  %608 = vmatprep.subr.bf16.mxu0 0
  %609 = vmatpush1.bf16.msra.mxu0 0
  %610 = vmatprep.subr.bf16.mxu0 0
  %611 = vmatpush1.bf16.msra.mxu0 0
  %612 = vmatprep.subr.bf16.mxu0 0
  %613 = vmatpush1.bf16.msra.mxu0 0
  %614 = vmatprep.mubr.bf16.mxu0 0
  %615 = vmatmul.mubr.bf16.gmra.mrb[0].mxu0 %v580
  %v616 = vpop.f32.mrb[0].mxu0
  %v617 = vadd.f32 0.0, %v616
  %v618 = vpop.f32.mrb[0].mxu0
  %v619 = vpop.f32.mrb[0].mxu0
  %v620 = vpop.f32.mrb[0].mxu0
  %621 = vdwg.mxu0
  %v623 = vrot.slane %v617, 6
  %v625 = vadd.f32 %v169, %v623
  %v626 = vxor.u32 %v573, 2147483648
  %v627 = vmul.f32 %v626, 1.442695
  %v628 = vpow.pop %v627
  %v629 = vadd.f32 %v628, 1.0
  %v630 = vrcp.pop %v629
  %v631 = vmul.f32 1.0, %v630
  %v632 = vtanh.pop %v573
  %v634 = vrot.slane %v476, 6
  %v636 = vmul.f32 %v631, %v634
  %638 = vrot.lane.b32.xlu0 %v632, 64
  %v639 = vpop.permute.xlu0 %638
  %v641 = vmul.f32 %v631, %v639
  %643 = vrot.lane.b32.xlu0 %v641, 32
  %v644 = vpop.permute.xlu0 %643
  %v646 = vadd.f32 %v636, %v644
  %v647 = vtanh.pop %v646
  %649 = vrot.lane.b32.xlu0 %v647, 64
  %v650 = vpop.permute.xlu0 %649
  %v652 = vmul.f32 %v631, %v650
  %v653 = vxor.u32 %v625, 2147483648
  %v654 = vmul.f32 %v653, 1.442695
  %v655 = vpow.pop %v654
  %v656 = vadd.f32 %v655, 1.0
  %v657 = vrcp.pop %v656
  %v658 = vmul.f32 1.0, %v657
  %v659 = vtanh.pop %v625
  %v661 = vrot.slane %v503, 2
  %v663 = vmul.f32 %v658, %v661
  %665 = vrot.lane.b32.xlu0 %v659, 64
  %v666 = vpop.permute.xlu0 %665
  %v668 = vmul.f32 %v658, %v666
  %670 = vrot.lane.b32.xlu0 %v668, 32
  %v671 = vpop.permute.xlu0 %670
  %v673 = vadd.f32 %v663, %v671
  %v674 = vtanh.pop %v673
  %676 = vrot.lane.b32.xlu0 %v674, 64
  %v677 = vpop.permute.xlu0 %676
  %v679 = vmul.f32 %v658, %v677
  %681 = vrot.lane.b32.xlu0 %v652, 32
  %v682 = vpop.permute.xlu0 %681
  %vm684 = vcmask 259076
  %685 = vst.msk [vmem:[%s5] sm:$0x30] %vm684, %v682
  %687 = vrot.lane.b32.xlu0 %v679, 64
  %v688 = vpop.permute.xlu0 %687
  %vm690 = vcmask 519426
  %691 = vst.msk [vmem:[%s5 + $0x2] sm:$0xc] %vm690, %v688
  %v692 = vpack.c.bf16 %v652, %v652
  %v694 = vrot.slane %v692, 2
  %695 = vrot.lane.b32.xlu0 %v694, 32
  %v696 = vpop.permute.xlu0 %695
  %v698 = vsel %vm51, %v696, 0
  %700 = vmatprep.subr.bf16.mxu0 0
  %701 = vmatpush1.bf16.msra.mxu0 %v189
  %702 = vmatprep.subr.bf16.mxu0 0
  %703 = vmatpush1.bf16.msra.mxu0 %v190
  %704 = vmatprep.subr.bf16.mxu0 0
  %705 = vmatpush1.bf16.msra.mxu0 0
  %706 = vmatprep.subr.bf16.mxu0 0
  %707 = vmatpush1.bf16.msra.mxu0 0
  %708 = vmatprep.subr.bf16.mxu0 0
  %709 = vmatpush1.bf16.msra.mxu0 0
  %710 = vmatprep.subr.bf16.mxu0 0
  %711 = vmatpush1.bf16.msra.mxu0 0
  %712 = vmatprep.subr.bf16.mxu0 0
  %713 = vmatpush1.bf16.msra.mxu0 0
  %714 = vmatprep.subr.bf16.mxu0 0
  %715 = vmatpush1.bf16.msra.mxu0 0
  %716 = vmatprep.subr.bf16.mxu0 0
  %717 = vmatpush1.bf16.msra.mxu0 0
  %718 = vmatprep.subr.bf16.mxu0 0
  %719 = vmatpush1.bf16.msra.mxu0 0
  %720 = vmatprep.subr.bf16.mxu0 0
  %721 = vmatpush1.bf16.msra.mxu0 0
  %722 = vmatprep.subr.bf16.mxu0 0
  %723 = vmatpush1.bf16.msra.mxu0 0
  %724 = vmatprep.subr.bf16.mxu0 0
  %725 = vmatpush1.bf16.msra.mxu0 0
  %726 = vmatprep.subr.bf16.mxu0 0
  %727 = vmatpush1.bf16.msra.mxu0 0
  %728 = vmatprep.subr.bf16.mxu0 0
  %729 = vmatpush1.bf16.msra.mxu0 0
  %730 = vmatprep.subr.bf16.mxu0 0
  %731 = vmatpush1.bf16.msra.mxu0 0
  %732 = vmatprep.mubr.bf16.mxu0 0
  %733 = vmatmul.mubr.bf16.gmra.mrb[0].mxu0 %v698
  %v734 = vpop.f32.mrb[0].mxu0
  %v735 = vadd.f32 0.0, %v734
  %v736 = vpop.f32.mrb[0].mxu0
  %v737 = vpop.f32.mrb[0].mxu0
  %v738 = vpop.f32.mrb[0].mxu0
  %739 = vdwg.mxu0
  %v741 = vrot.slane %v735, 2
  %v743 = vadd.f32 %v90, %v741
  %v744 = vpack.c.bf16 %v679, %v679
  %v746 = vrot.slane %v744, 1
  %747 = vrot.lane.b32.xlu0 %v746, 32
  %v748 = vpop.permute.xlu0 %747
  %v750 = vsel %vm51, %v748, 0
  %752 = vmatprep.subr.bf16.mxu0 0
  %753 = vmatpush1.bf16.msra.mxu0 %v245
  %754 = vmatprep.subr.bf16.mxu0 0
  %755 = vmatpush1.bf16.msra.mxu0 %v246
  %756 = vmatprep.subr.bf16.mxu0 0
  %757 = vmatpush1.bf16.msra.mxu0 0
  %758 = vmatprep.subr.bf16.mxu0 0
  %759 = vmatpush1.bf16.msra.mxu0 0
  %760 = vmatprep.subr.bf16.mxu0 0
  %761 = vmatpush1.bf16.msra.mxu0 0
  %762 = vmatprep.subr.bf16.mxu0 0
  %763 = vmatpush1.bf16.msra.mxu0 0
  %764 = vmatprep.subr.bf16.mxu0 0
  %765 = vmatpush1.bf16.msra.mxu0 0
  %766 = vmatprep.subr.bf16.mxu0 0
  %767 = vmatpush1.bf16.msra.mxu0 0
  %768 = vmatprep.subr.bf16.mxu0 0
  %769 = vmatpush1.bf16.msra.mxu0 0
  %770 = vmatprep.subr.bf16.mxu0 0
  %771 = vmatpush1.bf16.msra.mxu0 0
  %772 = vmatprep.subr.bf16.mxu0 0
  %773 = vmatpush1.bf16.msra.mxu0 0
  %774 = vmatprep.subr.bf16.mxu0 0
  %775 = vmatpush1.bf16.msra.mxu0 0
  %776 = vmatprep.subr.bf16.mxu0 0
  %777 = vmatpush1.bf16.msra.mxu0 0
  %778 = vmatprep.subr.bf16.mxu0 0
  %779 = vmatpush1.bf16.msra.mxu0 0
  %780 = vmatprep.subr.bf16.mxu0 0
  %781 = vmatpush1.bf16.msra.mxu0 0
  %782 = vmatprep.subr.bf16.mxu0 0
  %783 = vmatpush1.bf16.msra.mxu0 0
  %784 = vmatprep.mubr.bf16.mxu0 0
  %785 = vmatmul.mubr.bf16.gmra.mrb[0].mxu0 %v750
  %v786 = vpop.f32.mrb[0].mxu0
  %v787 = vadd.f32 0.0, %v786
  %v788 = vpop.f32.mrb[0].mxu0
  %v789 = vpop.f32.mrb[0].mxu0
  %v790 = vpop.f32.mrb[0].mxu0
  %791 = vdwg.mxu0
  %v792 = vadd.f32 %v169, %v787
  %v793 = vxor.u32 %v743, 2147483648
  %v794 = vmul.f32 %v793, 1.442695
  %v795 = vpow.pop %v794
  %v796 = vadd.f32 %v795, 1.0
  %v797 = vrcp.pop %v796
  %v798 = vmul.f32 1.0, %v797
  %v799 = vtanh.pop %v743
  %v801 = vrot.slane %v646, 6
  %v803 = vmul.f32 %v798, %v801
  %805 = vrot.lane.b32.xlu0 %v799, 64
  %v806 = vpop.permute.xlu0 %805
  %v808 = vmul.f32 %v798, %v806
  %810 = vrot.lane.b32.xlu0 %v808, 32
  %v811 = vpop.permute.xlu0 %810
  %v813 = vadd.f32 %v803, %v811
  %v814 = vtanh.pop %v813
  %816 = vrot.lane.b32.xlu0 %v814, 64
  %v817 = vpop.permute.xlu0 %816
  %v819 = vmul.f32 %v798, %v817
  %v820 = vxor.u32 %v792, 2147483648
  %v821 = vmul.f32 %v820, 1.442695
  %v822 = vpow.pop %v821
  %v823 = vadd.f32 %v822, 1.0
  %v824 = vrcp.pop %v823
  %v825 = vmul.f32 1.0, %v824
  %v826 = vtanh.pop %v792
  %v828 = vrot.slane %v673, 2
  %v830 = vmul.f32 %v825, %v828
  %832 = vrot.lane.b32.xlu0 %v826, 64
  %v833 = vpop.permute.xlu0 %832
  %v835 = vmul.f32 %v825, %v833
  %837 = vrot.lane.b32.xlu0 %v835, 32
  %v838 = vpop.permute.xlu0 %837
  %v840 = vadd.f32 %v830, %v838
  %v841 = vtanh.pop %v840
  %843 = vrot.lane.b32.xlu0 %v841, 64
  %v844 = vpop.permute.xlu0 %843
  %v846 = vmul.f32 %v825, %v844
  %848 = vrot.lane.b32.xlu0 %v819, 32
  %v849 = vpop.permute.xlu0 %848
  %vm851 = vcmask 261126
  %852 = vst.msk [vmem:[%s5] sm:$0xc0] %vm851, %v849
  %854 = vrot.lane.b32.xlu0 %v846, 64
  %v855 = vpop.permute.xlu0 %854
  %vm857 = vcmask 517376
  %858 = vst.msk [vmem:[%s5 + $0x6] sm:$0x3] %vm857, %v855
  %v859 = vpack.c.bf16 %v819, %v819
  %v861 = vrot.slane %v859, 3
  %862 = vrot.lane.b32.xlu0 %v861, 32
  %v863 = vpop.permute.xlu0 %862
  %v865 = vsel %vm51, %v863, 0
  %867 = vmatprep.subr.bf16.mxu0 0
  %868 = vmatpush1.bf16.msra.mxu0 %v189
  %869 = vmatprep.subr.bf16.mxu0 0
  %870 = vmatpush1.bf16.msra.mxu0 %v190
  %871 = vmatprep.subr.bf16.mxu0 0
  %872 = vmatpush1.bf16.msra.mxu0 0
  %873 = vmatprep.subr.bf16.mxu0 0
  %874 = vmatpush1.bf16.msra.mxu0 0
  %875 = vmatprep.subr.bf16.mxu0 0
  %876 = vmatpush1.bf16.msra.mxu0 0
  %877 = vmatprep.subr.bf16.mxu0 0
  %878 = vmatpush1.bf16.msra.mxu0 0
  %879 = vmatprep.subr.bf16.mxu0 0
  %880 = vmatpush1.bf16.msra.mxu0 0
  %881 = vmatprep.subr.bf16.mxu0 0
  %882 = vmatpush1.bf16.msra.mxu0 0
  %883 = vmatprep.subr.bf16.mxu0 0
  %884 = vmatpush1.bf16.msra.mxu0 0
  %885 = vmatprep.subr.bf16.mxu0 0
  %886 = vmatpush1.bf16.msra.mxu0 0
  %887 = vmatprep.subr.bf16.mxu0 0
  %888 = vmatpush1.bf16.msra.mxu0 0
  %889 = vmatprep.subr.bf16.mxu0 0
  %890 = vmatpush1.bf16.msra.mxu0 0
  %891 = vmatprep.subr.bf16.mxu0 0
  %892 = vmatpush1.bf16.msra.mxu0 0
  %893 = vmatprep.subr.bf16.mxu0 0
  %894 = vmatpush1.bf16.msra.mxu0 0
  %895 = vmatprep.subr.bf16.mxu0 0
  %896 = vmatpush1.bf16.msra.mxu0 0
  %897 = vmatprep.subr.bf16.mxu0 0
  %898 = vmatpush1.bf16.msra.mxu0 0
  %899 = vmatprep.mubr.bf16.mxu0 0
  %900 = vmatmul.mubr.bf16.gmra.mrb[0].mxu0 %v865
  %v901 = vpop.f32.mrb[0].mxu0
  %v902 = vadd.f32 0.0, %v901
  %v903 = vpop.f32.mrb[0].mxu0
  %v904 = vpop.f32.mrb[0].mxu0
  %v905 = vpop.f32.mrb[0].mxu0
  %906 = vdwg.mxu0
  %v907 = vadd.f32 %v93, %v902
  %v908 = vpack.c.bf16 %v846, %v846
  %910 = vrot.lane.b32.xlu0 %v908, 32
  %v911 = vpop.permute.xlu0 %910
  %v913 = vsel %vm51, %v911, 0
  %915 = vmatprep.subr.bf16.mxu0 0
  %916 = vmatpush1.bf16.msra.mxu0 %v245
  %917 = vmatprep.subr.bf16.mxu0 0
  %918 = vmatpush1.bf16.msra.mxu0 %v246
  %919 = vmatprep.subr.bf16.mxu0 0
  %920 = vmatpush1.bf16.msra.mxu0 0
  %921 = vmatprep.subr.bf16.mxu0 0
  %922 = vmatpush1.bf16.msra.mxu0 0
  %923 = vmatprep.subr.bf16.mxu0 0
  %924 = vmatpush1.bf16.msra.mxu0 0
  %925 = vmatprep.subr.bf16.mxu0 0
  %926 = vmatpush1.bf16.msra.mxu0 0
  %927 = vmatprep.subr.bf16.mxu0 0
  %928 = vmatpush1.bf16.msra.mxu0 0
  %929 = vmatprep.subr.bf16.mxu0 0
  %930 = vmatpush1.bf16.msra.mxu0 0
  %931 = vmatprep.subr.bf16.mxu0 0
  %932 = vmatpush1.bf16.msra.mxu0 0
  %933 = vmatprep.subr.bf16.mxu0 0
  %934 = vmatpush1.bf16.msra.mxu0 0
  %935 = vmatprep.subr.bf16.mxu0 0
  %936 = vmatpush1.bf16.msra.mxu0 0
  %937 = vmatprep.subr.bf16.mxu0 0
  %938 = vmatpush1.bf16.msra.mxu0 0
  %939 = vmatprep.subr.bf16.mxu0 0
  %940 = vmatpush1.bf16.msra.mxu0 0
  %941 = vmatprep.subr.bf16.mxu0 0
  %942 = vmatpush1.bf16.msra.mxu0 0
  %943 = vmatprep.subr.bf16.mxu0 0
  %944 = vmatpush1.bf16.msra.mxu0 0
  %945 = vmatprep.subr.bf16.mxu0 0
  %946 = vmatpush1.bf16.msra.mxu0 0
  %947 = vmatprep.mubr.bf16.mxu0 0
  %948 = vmatmul.mubr.bf16.gmra.mrb[0].mxu0 %v913
  %v949 = vpop.f32.mrb[0].mxu0
  %v950 = vadd.f32 0.0, %v949
  %v951 = vpop.f32.mrb[0].mxu0
  %v952 = vpop.f32.mrb[0].mxu0
  %v953 = vpop.f32.mrb[0].mxu0
  %954 = vdwg.mxu0
  %v956 = vrot.slane %v950, 2
  %v958 = vadd.f32 %v166, %v956
  %v959 = vxor.u32 %v907, 2147483648
  %v960 = vmul.f32 %v959, 1.442695
  %v961 = vpow.pop %v960
  %v962 = vadd.f32 %v961, 1.0
  %v963 = vrcp.pop %v962
  %v964 = vmul.f32 1.0, %v963
  %v965 = vtanh.pop %v907
  %v967 = vrot.slane %v813, 6
  %v969 = vmul.f32 %v964, %v967
  %971 = vrot.lane.b32.xlu0 %v965, 64
  %v972 = vpop.permute.xlu0 %971
  %v974 = vmul.f32 %v964, %v972
  %976 = vrot.lane.b32.xlu0 %v974, 32
  %v977 = vpop.permute.xlu0 %976
  %v979 = vadd.f32 %v969, %v977
  %v980 = vtanh.pop %v979
  %982 = vrot.lane.b32.xlu0 %v980, 64
  %v983 = vpop.permute.xlu0 %982
  %v985 = vmul.f32 %v964, %v983
  %v986 = vxor.u32 %v958, 2147483648
  %v987 = vmul.f32 %v986, 1.442695
  %v988 = vpow.pop %v987
  %v989 = vadd.f32 %v988, 1.0
  %v990 = vrcp.pop %v989
  %v991 = vmul.f32 1.0, %v990
  %v992 = vtanh.pop %v958
  %v994 = vrot.slane %v840, 2
  %v996 = vmul.f32 %v991, %v994
  %998 = vrot.lane.b32.xlu0 %v992, 64
  %v999 = vpop.permute.xlu0 %998
  %v1001 = vmul.f32 %v991, %v999
  %1003 = vrot.lane.b32.xlu0 %v1001, 32
  %v1004 = vpop.permute.xlu0 %1003
  %v1006 = vadd.f32 %v996, %v1004
  %v1007 = vtanh.pop %v1006
  %1009 = vrot.lane.b32.xlu0 %v1007, 64
  %v1010 = vpop.permute.xlu0 %1009
  %v1012 = vmul.f32 %v991, %v1010
  %1014 = vrot.lane.b32.xlu0 %v985, 32
  %v1015 = vpop.permute.xlu0 %1014
  %1017 = vst.msk [vmem:[%s5 + $0x8] sm:$0x3] %vm345, %v1015
  %1019 = vrot.lane.b32.xlu0 %v1012, 64
  %v1020 = vpop.permute.xlu0 %1019
  %1022 = vst.msk [vmem:[%s5 + $0x2] sm:$0xc0] %vm351, %v1020
  %v1023 = vpack.c.bf16 %v985, %v985
  %1025 = vrot.lane.b32.xlu0 %v1023, 32
  %v1026 = vpop.permute.xlu0 %1025
  %v1028 = vsel %vm51, %v1026, 0
  %1030 = vmatprep.subr.bf16.mxu0 0
  %1031 = vmatpush1.bf16.msra.mxu0 %v189
  %1032 = vmatprep.subr.bf16.mxu0 0
  %1033 = vmatpush1.bf16.msra.mxu0 %v190
  %1034 = vmatprep.subr.bf16.mxu0 0
  %1035 = vmatpush1.bf16.msra.mxu0 0
  %1036 = vmatprep.subr.bf16.mxu0 0
  %1037 = vmatpush1.bf16.msra.mxu0 0
  %1038 = vmatprep.subr.bf16.mxu0 0
  %1039 = vmatpush1.bf16.msra.mxu0 0
  %1040 = vmatprep.subr.bf16.mxu0 0
  %1041 = vmatpush1.bf16.msra.mxu0 0
  %1042 = vmatprep.subr.bf16.mxu0 0
  %1043 = vmatpush1.bf16.msra.mxu0 0
  %1044 = vmatprep.subr.bf16.mxu0 0
  %1045 = vmatpush1.bf16.msra.mxu0 0
  %1046 = vmatprep.subr.bf16.mxu0 0
  %1047 = vmatpush1.bf16.msra.mxu0 0
  %1048 = vmatprep.subr.bf16.mxu0 0
  %1049 = vmatpush1.bf16.msra.mxu0 0
  %1050 = vmatprep.subr.bf16.mxu0 0
  %1051 = vmatpush1.bf16.msra.mxu0 0
  %1052 = vmatprep.subr.bf16.mxu0 0
  %1053 = vmatpush1.bf16.msra.mxu0 0
  %1054 = vmatprep.subr.bf16.mxu0 0
  %1055 = vmatpush1.bf16.msra.mxu0 0
  %1056 = vmatprep.subr.bf16.mxu0 0
  %1057 = vmatpush1.bf16.msra.mxu0 0
  %1058 = vmatprep.subr.bf16.mxu0 0
  %1059 = vmatpush1.bf16.msra.mxu0 0
  %1060 = vmatprep.subr.bf16.mxu0 0
  %1061 = vmatpush1.bf16.msra.mxu0 0
  %1062 = vmatprep.mubr.bf16.mxu0 0
  %1063 = vmatmul.mubr.bf16.gmra.mrb[0].mxu0 %v1028
  %v1064 = vpop.f32.mrb[0].mxu0
  %v1065 = vadd.f32 0.0, %v1064
  %v1066 = vpop.f32.mrb[0].mxu0
  %v1067 = vpop.f32.mrb[0].mxu0
  %v1068 = vpop.f32.mrb[0].mxu0
  %1069 = vdwg.mxu0
  %v1071 = vrot.slane %v1065, 6
  %v1073 = vadd.f32 %v93, %v1071
  %v1074 = vpack.c.bf16 %v1012, %v1012
  %v1076 = vrot.slane %v1074, 3
  %1077 = vrot.lane.b32.xlu0 %v1076, 32
  %v1078 = vpop.permute.xlu0 %1077
  %v1080 = vsel %vm51, %v1078, 0
  %1082 = vmatprep.subr.bf16.mxu0 0
  %1083 = vmatpush1.bf16.msra.mxu0 %v245
  %1084 = vmatprep.subr.bf16.mxu0 0
  %1085 = vmatpush1.bf16.msra.mxu0 %v246
  %1086 = vmatprep.subr.bf16.mxu0 0
  %1087 = vmatpush1.bf16.msra.mxu0 0
  %1088 = vmatprep.subr.bf16.mxu0 0
  %1089 = vmatpush1.bf16.msra.mxu0 0
  %1090 = vmatprep.subr.bf16.mxu0 0
  %1091 = vmatpush1.bf16.msra.mxu0 0
  %1092 = vmatprep.subr.bf16.mxu0 0
  %1093 = vmatpush1.bf16.msra.mxu0 0
  %1094 = vmatprep.subr.bf16.mxu0 0
  %1095 = vmatpush1.bf16.msra.mxu0 0
  %1096 = vmatprep.subr.bf16.mxu0 0
  %1097 = vmatpush1.bf16.msra.mxu0 0
  %1098 = vmatprep.subr.bf16.mxu0 0
  %1099 = vmatpush1.bf16.msra.mxu0 0
  %1100 = vmatprep.subr.bf16.mxu0 0
  %1101 = vmatpush1.bf16.msra.mxu0 0
  %1102 = vmatprep.subr.bf16.mxu0 0
  %1103 = vmatpush1.bf16.msra.mxu0 0
  %1104 = vmatprep.subr.bf16.mxu0 0
  %1105 = vmatpush1.bf16.msra.mxu0 0
  %1106 = vmatprep.subr.bf16.mxu0 0
  %1107 = vmatpush1.bf16.msra.mxu0 0
  %1108 = vmatprep.subr.bf16.mxu0 0
  %1109 = vmatpush1.bf16.msra.mxu0 0
  %1110 = vmatprep.subr.bf16.mxu0 0
  %1111 = vmatpush1.bf16.msra.mxu0 0
  %1112 = vmatprep.subr.bf16.mxu0 0
  %1113 = vmatpush1.bf16.msra.mxu0 0
  %1114 = vmatprep.mubr.bf16.mxu0 0
  %1115 = vmatmul.mubr.bf16.gmra.mrb[0].mxu0 %v1080
  %v1116 = vpop.f32.mrb[0].mxu0
  %v1117 = vadd.f32 0.0, %v1116
  %v1118 = vpop.f32.mrb[0].mxu0
  %v1119 = vpop.f32.mrb[0].mxu0
  %v1120 = vpop.f32.mrb[0].mxu0
  %1121 = vdwg.mxu0
  %v1123 = vrot.slane %v1117, 4
  %v1125 = vadd.f32 %v166, %v1123
  %v1126 = vxor.u32 %v1073, 2147483648
  %v1127 = vmul.f32 %v1126, 1.442695
  %v1128 = vpow.pop %v1127
  %v1129 = vadd.f32 %v1128, 1.0
  %v1130 = vrcp.pop %v1129
  %v1131 = vmul.f32 1.0, %v1130
  %v1132 = vtanh.pop %v1073
  %v1134 = vrot.slane %v979, 6
  %v1136 = vmul.f32 %v1131, %v1134
  %1138 = vrot.lane.b32.xlu0 %v1132, 64
  %v1139 = vpop.permute.xlu0 %1138
  %v1141 = vmul.f32 %v1131, %v1139
  %1143 = vrot.lane.b32.xlu0 %v1141, 32
  %v1144 = vpop.permute.xlu0 %1143
  %v1146 = vadd.f32 %v1136, %v1144
  %v1147 = vtanh.pop %v1146
  %1149 = vrot.lane.b32.xlu0 %v1147, 64
  %v1150 = vpop.permute.xlu0 %1149
  %v1152 = vmul.f32 %v1131, %v1150
  %v1153 = vxor.u32 %v1125, 2147483648
  %v1154 = vmul.f32 %v1153, 1.442695
  %v1155 = vpow.pop %v1154
  %v1156 = vadd.f32 %v1155, 1.0
  %v1157 = vrcp.pop %v1156
  %v1158 = vmul.f32 1.0, %v1157
  %v1159 = vtanh.pop %v1125
  %v1161 = vrot.slane %v1006, 2
  %v1163 = vmul.f32 %v1158, %v1161
  %1165 = vrot.lane.b32.xlu0 %v1159, 64
  %v1166 = vpop.permute.xlu0 %1165
  %v1168 = vmul.f32 %v1158, %v1166
  %1170 = vrot.lane.b32.xlu0 %v1168, 32
  %v1171 = vpop.permute.xlu0 %1170
  %v1173 = vadd.f32 %v1163, %v1171
  %v1174 = vtanh.pop %v1173
  %1176 = vrot.lane.b32.xlu0 %v1174, 64
  %v1177 = vpop.permute.xlu0 %1176
  %v1179 = vmul.f32 %v1158, %v1177
  %1181 = vrot.lane.b32.xlu0 %v1152, 32
  %v1182 = vpop.permute.xlu0 %1181
  %1184 = vst.msk [vmem:[%s5 + $0x8] sm:$0xc] %vm514, %v1182
  %1186 = vrot.lane.b32.xlu0 %v1179, 64
  %v1187 = vpop.permute.xlu0 %1186
  %1189 = vst.msk [vmem:[%s5 + $0x6] sm:$0x30] %vm520, %v1187
  %v1190 = vpack.c.bf16 %v1152, %v1152
  %v1192 = vrot.slane %v1190, 1
  %1193 = vrot.lane.b32.xlu0 %v1192, 32
  %v1194 = vpop.permute.xlu0 %1193
  %v1196 = vsel %vm51, %v1194, 0
  %1198 = vmatprep.subr.bf16.mxu0 0
  %1199 = vmatpush1.bf16.msra.mxu0 %v189
  %1200 = vmatprep.subr.bf16.mxu0 0
  %1201 = vmatpush1.bf16.msra.mxu0 %v190
  %1202 = vmatprep.subr.bf16.mxu0 0
  %1203 = vmatpush1.bf16.msra.mxu0 0
  %1204 = vmatprep.subr.bf16.mxu0 0
  %1205 = vmatpush1.bf16.msra.mxu0 0
  %1206 = vmatprep.subr.bf16.mxu0 0
  %1207 = vmatpush1.bf16.msra.mxu0 0
  %1208 = vmatprep.subr.bf16.mxu0 0
  %1209 = vmatpush1.bf16.msra.mxu0 0
  %1210 = vmatprep.subr.bf16.mxu0 0
  %1211 = vmatpush1.bf16.msra.mxu0 0
  %1212 = vmatprep.subr.bf16.mxu0 0
  %1213 = vmatpush1.bf16.msra.mxu0 0
  %1214 = vmatprep.subr.bf16.mxu0 0
  %1215 = vmatpush1.bf16.msra.mxu0 0
  %1216 = vmatprep.subr.bf16.mxu0 0
  %1217 = vmatpush1.bf16.msra.mxu0 0
  %1218 = vmatprep.subr.bf16.mxu0 0
  %1219 = vmatpush1.bf16.msra.mxu0 0
  %1220 = vmatprep.subr.bf16.mxu0 0
  %1221 = vmatpush1.bf16.msra.mxu0 0
  %1222 = vmatprep.subr.bf16.mxu0 0
  %1223 = vmatpush1.bf16.msra.mxu0 0
  %1224 = vmatprep.subr.bf16.mxu0 0
  %1225 = vmatpush1.bf16.msra.mxu0 0
  %1226 = vmatprep.subr.bf16.mxu0 0
  %1227 = vmatpush1.bf16.msra.mxu0 0
  %1228 = vmatprep.subr.bf16.mxu0 0
  %1229 = vmatpush1.bf16.msra.mxu0 0
  %1230 = vmatprep.mubr.bf16.mxu0 0
  %1231 = vmatmul.mubr.bf16.gmra.mrb[0].mxu0 %v1196
  %v1232 = vpop.f32.mrb[0].mxu0
  %v1233 = vadd.f32 0.0, %v1232
  %v1234 = vpop.f32.mrb[0].mxu0
  %v1235 = vpop.f32.mrb[0].mxu0
  %v1236 = vpop.f32.mrb[0].mxu0
  %1237 = vdwg.mxu0
  %v1239 = vrot.slane %v1233, 4
  %v1241 = vadd.f32 %v93, %v1239
  %v1242 = vpack.c.bf16 %v1179, %v1179
  %v1244 = vrot.slane %v1242, 2
  %1245 = vrot.lane.b32.xlu0 %v1244, 32
  %v1246 = vpop.permute.xlu0 %1245
  %v1248 = vsel %vm51, %v1246, 0
  %1250 = vmatprep.subr.bf16.mxu0 0
  %1251 = vmatpush1.bf16.msra.mxu0 %v245
  %1252 = vmatprep.subr.bf16.mxu0 0
  %1253 = vmatpush1.bf16.msra.mxu0 %v246
  %1254 = vmatprep.subr.bf16.mxu0 0
  %1255 = vmatpush1.bf16.msra.mxu0 0
  %1256 = vmatprep.subr.bf16.mxu0 0
  %1257 = vmatpush1.bf16.msra.mxu0 0
  %1258 = vmatprep.subr.bf16.mxu0 0
  %1259 = vmatpush1.bf16.msra.mxu0 0
  %1260 = vmatprep.subr.bf16.mxu0 0
  %1261 = vmatpush1.bf16.msra.mxu0 0
  %1262 = vmatprep.subr.bf16.mxu0 0
  %1263 = vmatpush1.bf16.msra.mxu0 0
  %1264 = vmatprep.subr.bf16.mxu0 0
  %1265 = vmatpush1.bf16.msra.mxu0 0
  %1266 = vmatprep.subr.bf16.mxu0 0
  %1267 = vmatpush1.bf16.msra.mxu0 0
  %1268 = vmatprep.subr.bf16.mxu0 0
  %1269 = vmatpush1.bf16.msra.mxu0 0
  %1270 = vmatprep.subr.bf16.mxu0 0
  %1271 = vmatpush1.bf16.msra.mxu0 0
  %1272 = vmatprep.subr.bf16.mxu0 0
  %1273 = vmatpush1.bf16.msra.mxu0 0
  %1274 = vmatprep.subr.bf16.mxu0 0
  %1275 = vmatpush1.bf16.msra.mxu0 0
  %1276 = vmatprep.subr.bf16.mxu0 0
  %1277 = vmatpush1.bf16.msra.mxu0 0
  %1278 = vmatprep.subr.bf16.mxu0 0
  %1279 = vmatpush1.bf16.msra.mxu0 0
  %1280 = vmatprep.subr.bf16.mxu0 0
  %1281 = vmatpush1.bf16.msra.mxu0 0
  %1282 = vmatprep.mubr.bf16.mxu0 0
  %1283 = vmatmul.mubr.bf16.gmra.mrb[0].mxu0 %v1248
  %v1284 = vpop.f32.mrb[0].mxu0
  %v1285 = vadd.f32 0.0, %v1284
  %v1286 = vpop.f32.mrb[0].mxu0
  %v1287 = vpop.f32.mrb[0].mxu0
  %v1288 = vpop.f32.mrb[0].mxu0
  %1289 = vdwg.mxu0
  %v1291 = vrot.slane %v1285, 6
  %v1293 = vadd.f32 %v166, %v1291
  %v1294 = vxor.u32 %v1241, 2147483648
  %v1295 = vmul.f32 %v1294, 1.442695
  %v1296 = vpow.pop %v1295
  %v1297 = vadd.f32 %v1296, 1.0
  %v1298 = vrcp.pop %v1297
  %v1299 = vmul.f32 1.0, %v1298
  %v1300 = vtanh.pop %v1241
  %v1302 = vrot.slane %v1146, 6
  %v1304 = vmul.f32 %v1299, %v1302
  %1306 = vrot.lane.b32.xlu0 %v1300, 64
  %v1307 = vpop.permute.xlu0 %1306
  %v1309 = vmul.f32 %v1299, %v1307
  %1311 = vrot.lane.b32.xlu0 %v1309, 32
  %v1312 = vpop.permute.xlu0 %1311
  %v1314 = vadd.f32 %v1304, %v1312
  %v1315 = vtanh.pop %v1314
  %1317 = vrot.lane.b32.xlu0 %v1315, 64
  %v1318 = vpop.permute.xlu0 %1317
  %v1320 = vmul.f32 %v1299, %v1318
  %v1321 = vxor.u32 %v1293, 2147483648
  %v1322 = vmul.f32 %v1321, 1.442695
  %v1323 = vpow.pop %v1322
  %v1324 = vadd.f32 %v1323, 1.0
  %v1325 = vrcp.pop %v1324
  %v1326 = vmul.f32 1.0, %v1325
  %v1327 = vtanh.pop %v1293
  %v1329 = vrot.slane %v1173, 2
  %v1331 = vmul.f32 %v1326, %v1329
  %1333 = vrot.lane.b32.xlu0 %v1327, 64
  %v1334 = vpop.permute.xlu0 %1333
  %v1336 = vmul.f32 %v1326, %v1334
  %1338 = vrot.lane.b32.xlu0 %v1336, 32
  %v1339 = vpop.permute.xlu0 %1338
  %v1341 = vadd.f32 %v1331, %v1339
  %v1342 = vtanh.pop %v1341
  %1344 = vrot.lane.b32.xlu0 %v1342, 64
  %v1345 = vpop.permute.xlu0 %1344
  %v1347 = vmul.f32 %v1326, %v1345
  %1349 = vrot.lane.b32.xlu0 %v1320, 32
  %v1350 = vpop.permute.xlu0 %1349
  %1352 = vst.msk [vmem:[%s5 + $0x8] sm:$0x30] %vm684, %v1350
  %1354 = vrot.lane.b32.xlu0 %v1347, 64
  %v1355 = vpop.permute.xlu0 %1354
  %1357 = vst.msk [vmem:[%s5 + $0xa] sm:$0xc] %vm690, %v1355
  %v1358 = vpack.c.bf16 %v1320, %v1320
  %v1360 = vrot.slane %v1358, 2
  %1361 = vrot.lane.b32.xlu0 %v1360, 32
  %v1362 = vpop.permute.xlu0 %1361
  %v1364 = vsel %vm51, %v1362, 0
  %1366 = vmatprep.subr.bf16.mxu0 0
  %1367 = vmatpush1.bf16.msra.mxu0 %v189
  %1368 = vmatprep.subr.bf16.mxu0 0
  %1369 = vmatpush1.bf16.msra.mxu0 %v190
  %1370 = vmatprep.subr.bf16.mxu0 0
  %1371 = vmatpush1.bf16.msra.mxu0 0
  %1372 = vmatprep.subr.bf16.mxu0 0
  %1373 = vmatpush1.bf16.msra.mxu0 0
  %1374 = vmatprep.subr.bf16.mxu0 0
  %1375 = vmatpush1.bf16.msra.mxu0 0
  %1376 = vmatprep.subr.bf16.mxu0 0
  %1377 = vmatpush1.bf16.msra.mxu0 0
  %1378 = vmatprep.subr.bf16.mxu0 0
  %1379 = vmatpush1.bf16.msra.mxu0 0
  %1380 = vmatprep.subr.bf16.mxu0 0
  %1381 = vmatpush1.bf16.msra.mxu0 0
  %1382 = vmatprep.subr.bf16.mxu0 0
  %1383 = vmatpush1.bf16.msra.mxu0 0
  %1384 = vmatprep.subr.bf16.mxu0 0
  %1385 = vmatpush1.bf16.msra.mxu0 0
  %1386 = vmatprep.subr.bf16.mxu0 0
  %1387 = vmatpush1.bf16.msra.mxu0 0
  %1388 = vmatprep.subr.bf16.mxu0 0
  %1389 = vmatpush1.bf16.msra.mxu0 0
  %1390 = vmatprep.subr.bf16.mxu0 0
  %1391 = vmatpush1.bf16.msra.mxu0 0
  %1392 = vmatprep.subr.bf16.mxu0 0
  %1393 = vmatpush1.bf16.msra.mxu0 0
  %1394 = vmatprep.subr.bf16.mxu0 0
  %1395 = vmatpush1.bf16.msra.mxu0 0
  %1396 = vmatprep.subr.bf16.mxu0 0
  %1397 = vmatpush1.bf16.msra.mxu0 0
  %1398 = vmatprep.mubr.bf16.mxu0 0
  %1399 = vmatmul.mubr.bf16.gmra.mrb[0].mxu0 %v1364
  %v1400 = vpop.f32.mrb[0].mxu0
  %v1401 = vadd.f32 0.0, %v1400
  %v1402 = vpop.f32.mrb[0].mxu0
  %v1403 = vpop.f32.mrb[0].mxu0
  %v1404 = vpop.f32.mrb[0].mxu0
  %1405 = vdwg.mxu0
  %v1407 = vrot.slane %v1401, 2
  %v1409 = vadd.f32 %v93, %v1407
  %v1410 = vpack.c.bf16 %v1347, %v1347
  %v1412 = vrot.slane %v1410, 1
  %1413 = vrot.lane.b32.xlu0 %v1412, 32
  %v1414 = vpop.permute.xlu0 %1413
  %v1416 = vsel %vm51, %v1414, 0
  %1418 = vmatprep.subr.bf16.mxu0 0
  %1419 = vmatpush1.bf16.msra.mxu0 %v245
  %1420 = vmatprep.subr.bf16.mxu0 0
  %1421 = vmatpush1.bf16.msra.mxu0 %v246
  %1422 = vmatprep.subr.bf16.mxu0 0
  %1423 = vmatpush1.bf16.msra.mxu0 0
  %1424 = vmatprep.subr.bf16.mxu0 0
  %1425 = vmatpush1.bf16.msra.mxu0 0
  %1426 = vmatprep.subr.bf16.mxu0 0
  %1427 = vmatpush1.bf16.msra.mxu0 0
  %1428 = vmatprep.subr.bf16.mxu0 0
  %1429 = vmatpush1.bf16.msra.mxu0 0
  %1430 = vmatprep.subr.bf16.mxu0 0
  %1431 = vmatpush1.bf16.msra.mxu0 0
  %1432 = vmatprep.subr.bf16.mxu0 0
  %1433 = vmatpush1.bf16.msra.mxu0 0
  %1434 = vmatprep.subr.bf16.mxu0 0
  %1435 = vmatpush1.bf16.msra.mxu0 0
  %1436 = vmatprep.subr.bf16.mxu0 0
  %1437 = vmatpush1.bf16.msra.mxu0 0
  %1438 = vmatprep.subr.bf16.mxu0 0
  %1439 = vmatpush1.bf16.msra.mxu0 0
  %1440 = vmatprep.subr.bf16.mxu0 0
  %1441 = vmatpush1.bf16.msra.mxu0 0
  %1442 = vmatprep.subr.bf16.mxu0 0
  %1443 = vmatpush1.bf16.msra.mxu0 0
  %1444 = vmatprep.subr.bf16.mxu0 0
  %1445 = vmatpush1.bf16.msra.mxu0 0
  %1446 = vmatprep.subr.bf16.mxu0 0
  %1447 = vmatpush1.bf16.msra.mxu0 0
  %1448 = vmatprep.subr.bf16.mxu0 0
  %1449 = vmatpush1.bf16.msra.mxu0 0
  %1450 = vmatprep.mubr.bf16.mxu0 0
  %1451 = vmatmul.mubr.bf16.gmra.mrb[0].mxu0 %v1416
  %v1452 = vpop.f32.mrb[0].mxu0
  %v1453 = vadd.f32 0.0, %v1452
  %v1454 = vpop.f32.mrb[0].mxu0
  %v1455 = vpop.f32.mrb[0].mxu0
  %v1456 = vpop.f32.mrb[0].mxu0
  %1457 = vdwg.mxu0
  %v1458 = vadd.f32 %v166, %v1453
  %v1459 = vxor.u32 %v1409, 2147483648
  %v1460 = vmul.f32 %v1459, 1.442695
  %v1461 = vpow.pop %v1460
  %v1462 = vadd.f32 %v1461, 1.0
  %v1463 = vrcp.pop %v1462
  %v1464 = vmul.f32 1.0, %v1463
  %v1465 = vtanh.pop %v1409
  %v1467 = vrot.slane %v1314, 6
  %v1469 = vmul.f32 %v1464, %v1467
  %1471 = vrot.lane.b32.xlu0 %v1465, 64
  %v1472 = vpop.permute.xlu0 %1471
  %v1474 = vmul.f32 %v1464, %v1472
  %1476 = vrot.lane.b32.xlu0 %v1474, 32
  %v1477 = vpop.permute.xlu0 %1476
  %v1479 = vadd.f32 %v1469, %v1477
  %v1480 = vtanh.pop %v1479
  %1482 = vrot.lane.b32.xlu0 %v1480, 64
  %v1483 = vpop.permute.xlu0 %1482
  %v1485 = vmul.f32 %v1464, %v1483
  %v1486 = vxor.u32 %v1458, 2147483648
  %v1487 = vmul.f32 %v1486, 1.442695
  %v1488 = vpow.pop %v1487
  %v1489 = vadd.f32 %v1488, 1.0
  %v1490 = vrcp.pop %v1489
  %v1491 = vmul.f32 1.0, %v1490
  %v1492 = vtanh.pop %v1458
  %v1494 = vrot.slane %v1341, 2
  %v1496 = vmul.f32 %v1491, %v1494
  %1498 = vrot.lane.b32.xlu0 %v1492, 64
  %v1499 = vpop.permute.xlu0 %1498
  %v1501 = vmul.f32 %v1491, %v1499
  %1503 = vrot.lane.b32.xlu0 %v1501, 32
  %v1504 = vpop.permute.xlu0 %1503
  %v1506 = vadd.f32 %v1496, %v1504
  %v1507 = vtanh.pop %v1506
  %1509 = vrot.lane.b32.xlu0 %v1507, 64
  %v1510 = vpop.permute.xlu0 %1509
  %v1512 = vmul.f32 %v1491, %v1510
  %1514 = vrot.lane.b32.xlu0 %v1485, 32
  %v1515 = vpop.permute.xlu0 %1514
  %1517 = vst.msk [vmem:[%s5 + $0x8] sm:$0xc0] %vm851, %v1515
  %1519 = vrot.lane.b32.xlu0 %v1512, 64
  %v1520 = vpop.permute.xlu0 %1519
  %1522 = vst.msk [vmem:[%s5 + $0xe] sm:$0x3] %vm857, %v1520
  // Predicated region
  $region22: #{_lambda_.3} parent=0 // pred_check
    _
  $region23: #{_lambda_.3} parent=0 // pred_check_branch
    %1524 = sbr.rel (0) target = $region25
  $region24: #{_lambda_.3} parent=0 // pred_region
    _
  $region25: #{_lambda_.3} parent=0 // pred_fallthru
    _
  // Predicated region
  $region26: #{_lambda_.3} parent=0 // pred_check
    _
  $region27: #{_lambda_.3} parent=0 // pred_check_branch
    %1526 = sbr.rel (0) target = $region29
  $region28: #{_lambda_.3} parent=0 // pred_region
    _
  $region29: #{_lambda_.3} parent=0 // pred_fallthru
    _

// kernel: _lambda_.5
$region0: #{_lambda_.5}
  #allocation0 [shape = 'u32[]', space=smem, size = 0x4, offset = 0x4, fixed_abs, tag = 'smem constant byte address 0x4 - core index']
  #allocation1 [shape = 'u32[144,128]{1,0:T(1,128)}', space=vmem, size = 0x12000, scoped, tag = 'internal scratch']
  %s0 = inlined_call_operand.vmem [shape: bf16[16,160], index: 0, kind: input, shape index: {}]
  %s1 = inlined_call_operand.vmem [shape: bf16[160,32], index: 1, kind: input, shape index: {}]
  %s2 = inlined_call_operand.vmem [shape: f32[1,32], index: 2, kind: input, shape index: {}]
  %s3 = inlined_call_operand.vmem [shape: bf16[2,32,128], index: 3, kind: input, shape index: {}]
  %s4 = inlined_call_operand.vmem [shape: bf16[2,32,128], index: 4, kind: input, shape index: {}]
  %s5 = inlined_call_operand.vmem [shape: f32[2,1,128], index: 5, kind: input, shape index: {}]
  %s6 = inlined_call_operand.vmem [shape: f32[64,4], index: 6, kind: input, shape index: {}]
  %s7 = inlined_call_operand.vmem [shape: f32[1,4], index: 7, kind: input, shape index: {}]
  %s8 = inlined_call_operand.hbm [shape: f32[2,4], index: 8, kind: output, shape index: {}]
  %s9 = sld [smem:[#allocation0]]
  $region42: #{_lambda_.5} parent=0
    _
  %s11 = ssub.s32 1, %s9
  %s12 = scalar_select 0, %s11, %s9
  $region1: #{_lambda_.5} parent=0
    #allocation2 [shape = 'u8[1024]{0}', space=vmem, size = 0x400, scoped, tag = 'output window, operand 0, single buffered']
    #allocation3 [shape = 's32[1]{0}', space=sflag, size = 0x4, scoped, tag = 'scoped memory for _lambda_.5']
    %13 = vsyncpa [#allocation3], 0
    // Predicated region
    $region2: #{_lambda_.5} parent=1 // pred_check
      _
    $region3: #{_lambda_.5} parent=1 // pred_check_branch
      %15 = sbr.rel (0) target = $region5
    $region4: #{_lambda_.5} parent=1 // pred_region
      _
    $region5: #{_lambda_.5} parent=1 // pred_fallthru
      _
    // Predicated region
    $region6: #{_lambda_.5} parent=1 // pred_check
      _
    $region7: #{_lambda_.5} parent=1 // pred_check_branch
      %17 = sbr.rel (0) target = $region9
    $region8: #{_lambda_.5} parent=1 // pred_region
      _
    $region9: #{_lambda_.5} parent=1 // pred_fallthru
      _
    // Predicated region
    $region10: #{_lambda_.5} parent=1 // pred_check
      _
    $region11: #{_lambda_.5} parent=1 // pred_check_branch
      %19 = sbr.rel (0) target = $region13
    $region12: #{_lambda_.5} parent=1 // pred_region
      _
    $region13: #{_lambda_.5} parent=1 // pred_fallthru
      _
    // Predicated region
    $region14: #{_lambda_.5} parent=1 // pred_check
      _
    $region15: #{_lambda_.5} parent=1 // pred_check_branch
      %21 = sbr.rel (0) target = $region17
    $region16: #{_lambda_.5} parent=1 // pred_region
      _
    $region17: #{_lambda_.5} parent=1 // pred_fallthru
      _
    // Predicated region
    $region18: #{_lambda_.5} parent=1 // pred_check
      _
    $region19: #{_lambda_.5} parent=1 // pred_check_branch
      %23 = sbr.rel (0) target = $region21
    $region20: #{_lambda_.5} parent=1 // pred_region
      _
    $region21: #{_lambda_.5} parent=1 // pred_fallthru
      _
    // Predicated region
    $region22: #{_lambda_.5} parent=1 // pred_check
      _
    $region23: #{_lambda_.5} parent=1 // pred_check_branch
      %25 = sbr.rel (0) target = $region25
    $region24: #{_lambda_.5} parent=1 // pred_region
      _
    $region25: #{_lambda_.5} parent=1 // pred_fallthru
      _
    // Predicated region
    $region26: #{_lambda_.5} parent=1 // pred_check
      _
    $region27: #{_lambda_.5} parent=1 // pred_check_branch
      %27 = sbr.rel (0) target = $region29
    $region28: #{_lambda_.5} parent=1 // pred_region
      _
    $region29: #{_lambda_.5} parent=1 // pred_fallthru
      _
    // Predicated region
    $region30: #{_lambda_.5} parent=1 // pred_check
      _
    $region31: #{_lambda_.5} parent=1 // pred_check_branch
      %29 = sbr.rel (0) target = $region33
    $region32: #{_lambda_.5} parent=1 // pred_region
      _
    $region33: #{_lambda_.5} parent=1 // pred_fallthru
      _
    %v31 = vld [vmem:[%s0] sm:$0xff]
    %v32 = vld [vmem:[%s0 + $0x8] sm:$0xff]
    %v33 = vld [vmem:[%s1] sm:$0xf]
    %v34 = vld [vmem:[%s1 + $0x4] sm:$0xf]
    %v35 = vld [vmem:[%s1 + $0x8] sm:$0xf]
    %v36 = vld [vmem:[%s1 + $0xc] sm:$0xf]
    %v37 = vld [vmem:[%s1 + $0x10] sm:$0xf]
    %v38 = vld [vmem:[%s1 + $0x14] sm:$0xf]
    %v39 = vld [vmem:[%s1 + $0x18] sm:$0xf]
    %v40 = vld [vmem:[%s1 + $0x1c] sm:$0xf]
    %v41 = vld [vmem:[%s1 + $0x20] sm:$0xf]
    %v42 = vld [vmem:[%s1 + $0x24] sm:$0xf]
    %v43 = vld [vmem:[%s1 + $0x28] sm:$0xf]
    %v44 = vld [vmem:[%s1 + $0x2c] sm:$0xf]
    %v45 = vld [vmem:[%s1 + $0x30] sm:$0xf]
    %v46 = vld [vmem:[%s1 + $0x34] sm:$0xf]
    %v47 = vld [vmem:[%s1 + $0x38] sm:$0xf]
    %v48 = vld [vmem:[%s1 + $0x3c] sm:$0xf]
    %v49 = vld [vmem:[%s1 + $0x40] sm:$0xf]
    %v50 = vld [vmem:[%s1 + $0x44] sm:$0xf]
    %v51 = vld [vmem:[%s1 + $0x48] sm:$0xf]
    %v52 = vld [vmem:[%s1 + $0x4c] sm:$0xf]
    %v53 = vld [vmem:[%s2] sm:$0x1]
    %v55 = vlaneseq
    %v56 = vshrl.u32 %v55, 7
    %v57 = vsub.s32 0, %v56
    %v58 = vrot.slane %v53, %v57
    %v62 = vunpack.c.l.b16 %v31
    %v63 = vunpack.c.h.b16 %v31
    %v64 = vunpack.c.l.b16 %v32
    %v65 = vunpack.c.h.b16 %v32
    %v66 = vpack.c.b16 %v64, %v62
    %v67 = vpack.c.b16 %v65, %v63
    %v89 = vunpack.c.l.b16 %v33
    %v90 = vunpack.c.l.b16 %v34
    %v91 = vunpack.c.l.b16 %v35
    %v92 = vunpack.c.l.b16 %v36
    %v93 = vunpack.c.l.b16 %v37
    %v94 = vunpack.c.l.b16 %v38
    %v95 = vunpack.c.l.b16 %v39
    %v96 = vunpack.c.l.b16 %v40
    %v97 = vunpack.c.l.b16 %v41
    %v98 = vunpack.c.l.b16 %v42
    %v99 = vunpack.c.l.b16 %v43
    %v100 = vunpack.c.l.b16 %v44
    %v101 = vunpack.c.l.b16 %v45
    %v102 = vunpack.c.l.b16 %v46
    %v103 = vunpack.c.l.b16 %v47
    %v104 = vunpack.c.l.b16 %v48
    %v105 = vunpack.c.l.b16 %v49
    %v106 = vunpack.c.l.b16 %v50
    %v107 = vunpack.c.l.b16 %v51
    %v108 = vunpack.c.l.b16 %v52
    %v109 = vpack.c.b16 %v90, %v89
    %v110 = vpack.c.b16 %v92, %v91
    %v111 = vpack.c.b16 %v94, %v93
    %v112 = vpack.c.b16 %v96, %v95
    %v113 = vpack.c.b16 %v98, %v97
    %v114 = vpack.c.b16 %v100, %v99
    %v115 = vpack.c.b16 %v102, %v101
    %v116 = vpack.c.b16 %v104, %v103
    %v117 = vpack.c.b16 %v106, %v105
    %v118 = vpack.c.b16 %v108, %v107
    %vm129 = vcmask 261120
    %v131 = vsel %vm129, %v67, 0
    %133 = vmatprep.subr.bf16.mxu0 0
    %134 = vmatpush1.bf16.msra.mxu0 %v109
    %135 = vmatprep.subr.bf16.mxu0 0
    %136 = vmatpush1.bf16.msra.mxu0 %v110
    %137 = vmatprep.subr.bf16.mxu0 0
    %138 = vmatpush1.bf16.msra.mxu0 %v111
    %139 = vmatprep.subr.bf16.mxu0 0
    %140 = vmatpush1.bf16.msra.mxu0 %v112
    %141 = vmatprep.subr.bf16.mxu0 0
    %142 = vmatpush1.bf16.msra.mxu0 %v113
    %143 = vmatprep.subr.bf16.mxu0 0
    %144 = vmatpush1.bf16.msra.mxu0 %v114
    %145 = vmatprep.subr.bf16.mxu0 0
    %146 = vmatpush1.bf16.msra.mxu0 %v115
    %147 = vmatprep.subr.bf16.mxu0 0
    %148 = vmatpush1.bf16.msra.mxu0 %v116
    %149 = vmatprep.subr.bf16.mxu0 0
    %150 = vmatpush1.bf16.msra.mxu0 %v117
    %151 = vmatprep.subr.bf16.mxu0 0
    %152 = vmatpush1.bf16.msra.mxu0 %v118
    %153 = vmatprep.subr.bf16.mxu0 0
    %154 = vmatpush1.bf16.msra.mxu0 0
    %155 = vmatprep.subr.bf16.mxu0 0
    %156 = vmatpush1.bf16.msra.mxu0 0
    %157 = vmatprep.subr.bf16.mxu0 0
    %158 = vmatpush1.bf16.msra.mxu0 0
    %159 = vmatprep.subr.bf16.mxu0 0
    %160 = vmatpush1.bf16.msra.mxu0 0
    %161 = vmatprep.subr.bf16.mxu0 0
    %162 = vmatpush1.bf16.msra.mxu0 0
    %163 = vmatprep.subr.bf16.mxu0 0
    %164 = vmatpush1.bf16.msra.mxu0 0
    %165 = vmatprep.mubr.bf16.mxu0 %v131
    %166 = vmatmul.mubr.bf16.gmra.mrb[0].mxu0 %v66
    %v167 = vpop.f32.mrb[0].mxu0
    %v168 = vadd.f32 %v58, %v167
    %v169 = vpop.f32.mrb[0].mxu0
    %v170 = vpop.f32.mrb[0].mxu0
    %v171 = vadd.f32 %v58, %v170
    %v172 = vpop.f32.mrb[0].mxu0
    %173 = vdwg.mxu0
    %v174 = vpack.c.bf16 %v171, %v168
    %v175 = vld [vmem:[%s3] sm:$0xf]
    %v176 = vld [vmem:[%s3 + $0x4] sm:$0xf]
    %v177 = vld [vmem:[%s3 + $0x8] sm:$0xf]
    %v178 = vld [vmem:[%s3 + $0xc] sm:$0xf]
    %v179 = vld [vmem:[%s5] sm:$0x1]
    %v181 = vlaneseq
    %v182 = vshrl.u32 %v181, 7
    %v183 = vsub.s32 0, %v182
    %v184 = vrot.slane %v179, %v183
    %v190 = vunpack.c.l.b16 %v175
    %v191 = vunpack.c.l.b16 %v176
    %v192 = vunpack.c.l.b16 %v177
    %v193 = vunpack.c.l.b16 %v178
    %v194 = vpack.c.b16 %v191, %v190
    %v195 = vpack.c.b16 %v193, %v192
    %v199 = vsel %vm129, %v174, 0
    %201 = vmatprep.subr.bf16.mxu0 0
    %202 = vmatpush1.bf16.msra.mxu0 %v194
    %203 = vmatprep.subr.bf16.mxu0 0
    %204 = vmatpush1.bf16.msra.mxu0 %v195
    %205 = vmatprep.subr.bf16.mxu0 0
    %206 = vmatpush1.bf16.msra.mxu0 0
    %207 = vmatprep.subr.bf16.mxu0 0
    %208 = vmatpush1.bf16.msra.mxu0 0
    %209 = vmatprep.subr.bf16.mxu0 0
    %210 = vmatpush1.bf16.msra.mxu0 0
    %211 = vmatprep.subr.bf16.mxu0 0
    %212 = vmatpush1.bf16.msra.mxu0 0
    %213 = vmatprep.subr.bf16.mxu0 0
    %214 = vmatpush1.bf16.msra.mxu0 0
    %215 = vmatprep.subr.bf16.mxu0 0
    %216 = vmatpush1.bf16.msra.mxu0 0
    %217 = vmatprep.subr.bf16.mxu0 0
    %218 = vmatpush1.bf16.msra.mxu0 0
    %219 = vmatprep.subr.bf16.mxu0 0
    %220 = vmatpush1.bf16.msra.mxu0 0
    %221 = vmatprep.subr.bf16.mxu0 0
    %222 = vmatpush1.bf16.msra.mxu0 0
    %223 = vmatprep.subr.bf16.mxu0 0
    %224 = vmatpush1.bf16.msra.mxu0 0
    %225 = vmatprep.subr.bf16.mxu0 0
    %226 = vmatpush1.bf16.msra.mxu0 0
    %227 = vmatprep.subr.bf16.mxu0 0
    %228 = vmatpush1.bf16.msra.mxu0 0
    %229 = vmatprep.subr.bf16.mxu0 0
    %230 = vmatpush1.bf16.msra.mxu0 0
    %231 = vmatprep.subr.bf16.mxu0 0
    %232 = vmatpush1.bf16.msra.mxu0 0
    %233 = vmatprep.mubr.bf16.mxu0 0
    %234 = vmatmul.mubr.bf16.gmra.mrb[0].mxu0 %v199
    %v235 = vpop.f32.mrb[0].mxu0
    %v236 = vadd.f32 %v184, %v235
    %v237 = vpop.f32.mrb[0].mxu0
    %v238 = vpop.f32.mrb[0].mxu0
    %v239 = vadd.f32 %v184, %v238
    %v240 = vpop.f32.mrb[0].mxu0
    %241 = vdwg.mxu0
    %s242 = scalar_lea.vmem %s3, 16
    %v243 = vld [vmem:[%s242] sm:$0xf]
    %v244 = vld [vmem:[%s242 + $0x4] sm:$0xf]
    %v245 = vld [vmem:[%s242 + $0x8] sm:$0xf]
    %v246 = vld [vmem:[%s242 + $0xc] sm:$0xf]
    %s247 = scalar_lea.vmem %s5, 1
    %v248 = vld [vmem:[%s247] sm:$0x1]
    %v250 = vlaneseq
    %v251 = vshrl.u32 %v250, 7
    %v252 = vsub.s32 0, %v251
    %v253 = vrot.slane %v248, %v252
    %v259 = vunpack.c.l.b16 %v243
    %v260 = vunpack.c.l.b16 %v244
    %v261 = vunpack.c.l.b16 %v245
    %v262 = vunpack.c.l.b16 %v246
    %v263 = vpack.c.b16 %v260, %v259
    %v264 = vpack.c.b16 %v262, %v261
    %267 = vmatprep.subr.bf16.mxu0 0
    %268 = vmatpush1.bf16.msra.mxu0 %v263
    %269 = vmatprep.subr.bf16.mxu0 0
    %270 = vmatpush1.bf16.msra.mxu0 %v264
    %271 = vmatprep.subr.bf16.mxu0 0
    %272 = vmatpush1.bf16.msra.mxu0 0
    %273 = vmatprep.subr.bf16.mxu0 0
    %274 = vmatpush1.bf16.msra.mxu0 0
    %275 = vmatprep.subr.bf16.mxu0 0
    %276 = vmatpush1.bf16.msra.mxu0 0
    %277 = vmatprep.subr.bf16.mxu0 0
    %278 = vmatpush1.bf16.msra.mxu0 0
    %279 = vmatprep.subr.bf16.mxu0 0
    %280 = vmatpush1.bf16.msra.mxu0 0
    %281 = vmatprep.subr.bf16.mxu0 0
    %282 = vmatpush1.bf16.msra.mxu0 0
    %283 = vmatprep.subr.bf16.mxu0 0
    %284 = vmatpush1.bf16.msra.mxu0 0
    %285 = vmatprep.subr.bf16.mxu0 0
    %286 = vmatpush1.bf16.msra.mxu0 0
    %287 = vmatprep.subr.bf16.mxu0 0
    %288 = vmatpush1.bf16.msra.mxu0 0
    %289 = vmatprep.subr.bf16.mxu0 0
    %290 = vmatpush1.bf16.msra.mxu0 0
    %291 = vmatprep.subr.bf16.mxu0 0
    %292 = vmatpush1.bf16.msra.mxu0 0
    %293 = vmatprep.subr.bf16.mxu0 0
    %294 = vmatpush1.bf16.msra.mxu0 0
    %295 = vmatprep.subr.bf16.mxu0 0
    %296 = vmatpush1.bf16.msra.mxu0 0
    %297 = vmatprep.subr.bf16.mxu0 0
    %298 = vmatpush1.bf16.msra.mxu0 0
    %299 = vmatprep.mubr.bf16.mxu0 0
    %300 = vmatmul.mubr.bf16.gmra.mrb[0].mxu0 %v199
    %v301 = vpop.f32.mrb[0].mxu0
    %v302 = vadd.f32 %v253, %v301
    %v303 = vpop.f32.mrb[0].mxu0
    %v304 = vpop.f32.mrb[0].mxu0
    %v305 = vadd.f32 %v253, %v304
    %v306 = vpop.f32.mrb[0].mxu0
    %307 = vdwg.mxu0
    %v308 = vld [vmem:[%s4] sm:$0xf]
    %v309 = vld [vmem:[%s4 + $0x4] sm:$0xf]
    %v310 = vld [vmem:[%s4 + $0x8] sm:$0xf]
    %v311 = vld [vmem:[%s4 + $0xc] sm:$0xf]
    %s312 = scalar_lea.vmem %s4, 16
    %v313 = vld [vmem:[%s312] sm:$0xf]
    %v314 = vld [vmem:[%s312 + $0x4] sm:$0xf]
    %v315 = vld [vmem:[%s312 + $0x8] sm:$0xf]
    %v316 = vld [vmem:[%s312 + $0xc] sm:$0xf]
    %v321 = vunpack.c.l.b16 %v308
    %v322 = vunpack.c.l.b16 %v309
    %v323 = vunpack.c.l.b16 %v310
    %v324 = vunpack.c.l.b16 %v311
    %v325 = vpack.c.b16 %v322, %v321
    %v326 = vpack.c.b16 %v324, %v323
    %v330 = vsel %vm129, 0, 0
    %332 = vmatprep.subr.bf16.mxu0 0
    %333 = vmatpush1.bf16.msra.mxu0 %v325
    %334 = vmatprep.subr.bf16.mxu0 0
    %335 = vmatpush1.bf16.msra.mxu0 %v326
    %336 = vmatprep.subr.bf16.mxu0 0
    %337 = vmatpush1.bf16.msra.mxu0 0
    %338 = vmatprep.subr.bf16.mxu0 0
    %339 = vmatpush1.bf16.msra.mxu0 0
    %340 = vmatprep.subr.bf16.mxu0 0
    %341 = vmatpush1.bf16.msra.mxu0 0
    %342 = vmatprep.subr.bf16.mxu0 0
    %343 = vmatpush1.bf16.msra.mxu0 0
    %344 = vmatprep.subr.bf16.mxu0 0
    %345 = vmatpush1.bf16.msra.mxu0 0
    %346 = vmatprep.subr.bf16.mxu0 0
    %347 = vmatpush1.bf16.msra.mxu0 0
    %348 = vmatprep.subr.bf16.mxu0 0
    %349 = vmatpush1.bf16.msra.mxu0 0
    %350 = vmatprep.subr.bf16.mxu0 0
    %351 = vmatpush1.bf16.msra.mxu0 0
    %352 = vmatprep.subr.bf16.mxu0 0
    %353 = vmatpush1.bf16.msra.mxu0 0
    %354 = vmatprep.subr.bf16.mxu0 0
    %355 = vmatpush1.bf16.msra.mxu0 0
    %356 = vmatprep.subr.bf16.mxu0 0
    %357 = vmatpush1.bf16.msra.mxu0 0
    %358 = vmatprep.subr.bf16.mxu0 0
    %359 = vmatpush1.bf16.msra.mxu0 0
    %360 = vmatprep.subr.bf16.mxu0 0
    %361 = vmatpush1.bf16.msra.mxu0 0
    %362 = vmatprep.subr.bf16.mxu0 0
    %363 = vmatpush1.bf16.msra.mxu0 0
    %364 = vmatprep.mubr.bf16.mxu0 0
    %365 = vmatmul.mubr.bf16.gmra.mrb[0].mxu0 %v330
    %v366 = vpop.f32.mrb[0].mxu0
    %v367 = vadd.f32 0.0, %v366
    %v368 = vpop.f32.mrb[0].mxu0
    %v369 = vpop.f32.mrb[0].mxu0
    %v370 = vpop.f32.mrb[0].mxu0
    %371 = vdwg.mxu0
    %v372 = vadd.f32 %v236, %v367
    %v377 = vunpack.c.l.b16 %v313
    %v378 = vunpack.c.l.b16 %v314
    %v379 = vunpack.c.l.b16 %v315
    %v380 = vunpack.c.l.b16 %v316
    %v381 = vpack.c.b16 %v378, %v377
    %v382 = vpack.c.b16 %v380, %v379
    %385 = vmatprep.subr.bf16.mxu0 0
    %386 = vmatpush1.bf16.msra.mxu0 %v381
    %387 = vmatprep.subr.bf16.mxu0 0
    %388 = vmatpush1.bf16.msra.mxu0 %v382
    %389 = vmatprep.subr.bf16.mxu0 0
    %390 = vmatpush1.bf16.msra.mxu0 0
    %391 = vmatprep.subr.bf16.mxu0 0
    %392 = vmatpush1.bf16.msra.mxu0 0
    %393 = vmatprep.subr.bf16.mxu0 0
    %394 = vmatpush1.bf16.msra.mxu0 0
    %395 = vmatprep.subr.bf16.mxu0 0
    %396 = vmatpush1.bf16.msra.mxu0 0
    %397 = vmatprep.subr.bf16.mxu0 0
    %398 = vmatpush1.bf16.msra.mxu0 0
    %399 = vmatprep.subr.bf16.mxu0 0
    %400 = vmatpush1.bf16.msra.mxu0 0
    %401 = vmatprep.subr.bf16.mxu0 0
    %402 = vmatpush1.bf16.msra.mxu0 0
    %403 = vmatprep.subr.bf16.mxu0 0
    %404 = vmatpush1.bf16.msra.mxu0 0
    %405 = vmatprep.subr.bf16.mxu0 0
    %406 = vmatpush1.bf16.msra.mxu0 0
    %407 = vmatprep.subr.bf16.mxu0 0
    %408 = vmatpush1.bf16.msra.mxu0 0
    %409 = vmatprep.subr.bf16.mxu0 0
    %410 = vmatpush1.bf16.msra.mxu0 0
    %411 = vmatprep.subr.bf16.mxu0 0
    %412 = vmatpush1.bf16.msra.mxu0 0
    %413 = vmatprep.subr.bf16.mxu0 0
    %414 = vmatpush1.bf16.msra.mxu0 0
    %415 = vmatprep.subr.bf16.mxu0 0
    %416 = vmatpush1.bf16.msra.mxu0 0
    %417 = vmatprep.mubr.bf16.mxu0 0
    %418 = vmatmul.mubr.bf16.gmra.mrb[0].mxu0 %v330
    %v419 = vpop.f32.mrb[0].mxu0
    %v420 = vadd.f32 0.0, %v419
    %v421 = vpop.f32.mrb[0].mxu0
    %v422 = vpop.f32.mrb[0].mxu0
    %v423 = vpop.f32.mrb[0].mxu0
    %424 = vdwg.mxu0
    %v426 = vrot.slane %v420, 2
    %v428 = vadd.f32 %v305, %v426
    %v429 = vxor.u32 %v372, 2147483648
    %v430 = vmul.f32 %v429, 1.442695
    %v431 = vpow.pop %v430
    %v432 = vadd.f32 %v431, 1.0
    %v433 = vrcp.pop %v432
    %v434 = vmul.f32 1.0, %v433
    %v435 = vtanh.pop %v372
    %v436 = vmul.f32 %v434, 0.0
    %438 = vrot.lane.b32.xlu0 %v435, 64
    %v439 = vpop.permute.xlu0 %438
    %v441 = vmul.f32 %v434, %v439
    %443 = vrot.lane.b32.xlu0 %v441, 32
    %v444 = vpop.permute.xlu0 %443
    %v446 = vadd.f32 %v436, %v444
    %v447 = vtanh.pop %v446
    %449 = vrot.lane.b32.xlu0 %v447, 64
    %v450 = vpop.permute.xlu0 %449
    %v452 = vmul.f32 %v434, %v450
    %v453 = vxor.u32 %v428, 2147483648
    %v454 = vmul.f32 %v453, 1.442695
    %v455 = vpow.pop %v454
    %v456 = vadd.f32 %v455, 1.0
    %v457 = vrcp.pop %v456
    %v458 = vmul.f32 1.0, %v457
    %v459 = vtanh.pop %v428
    %v460 = vmul.f32 %v458, 0.0
    %462 = vrot.lane.b32.xlu0 %v459, 64
    %v463 = vpop.permute.xlu0 %462
    %v465 = vmul.f32 %v458, %v463
    %467 = vrot.lane.b32.xlu0 %v465, 32
    %v468 = vpop.permute.xlu0 %467
    %v470 = vadd.f32 %v460, %v468
    %v471 = vtanh.pop %v470
    %473 = vrot.lane.b32.xlu0 %v471, 64
    %v474 = vpop.permute.xlu0 %473
    %v476 = vmul.f32 %v458, %v474
    %v477 = vpack.c.bf16 %v452, %v452
    %479 = vrot.lane.b32.xlu0 %v477, 32
    %v480 = vpop.permute.xlu0 %479
    %v482 = vsel %vm129, %v480, 0
    %484 = vmatprep.subr.bf16.mxu0 0
    %485 = vmatpush1.bf16.msra.mxu0 %v325
    %486 = vmatprep.subr.bf16.mxu0 0
    %487 = vmatpush1.bf16.msra.mxu0 %v326
    %488 = vmatprep.subr.bf16.mxu0 0
    %489 = vmatpush1.bf16.msra.mxu0 0
    %490 = vmatprep.subr.bf16.mxu0 0
    %491 = vmatpush1.bf16.msra.mxu0 0
    %492 = vmatprep.subr.bf16.mxu0 0
    %493 = vmatpush1.bf16.msra.mxu0 0
    %494 = vmatprep.subr.bf16.mxu0 0
    %495 = vmatpush1.bf16.msra.mxu0 0
    %496 = vmatprep.subr.bf16.mxu0 0
    %497 = vmatpush1.bf16.msra.mxu0 0
    %498 = vmatprep.subr.bf16.mxu0 0
    %499 = vmatpush1.bf16.msra.mxu0 0
    %500 = vmatprep.subr.bf16.mxu0 0
    %501 = vmatpush1.bf16.msra.mxu0 0
    %502 = vmatprep.subr.bf16.mxu0 0
    %503 = vmatpush1.bf16.msra.mxu0 0
    %504 = vmatprep.subr.bf16.mxu0 0
    %505 = vmatpush1.bf16.msra.mxu0 0
    %506 = vmatprep.subr.bf16.mxu0 0
    %507 = vmatpush1.bf16.msra.mxu0 0
    %508 = vmatprep.subr.bf16.mxu0 0
    %509 = vmatpush1.bf16.msra.mxu0 0
    %510 = vmatprep.subr.bf16.mxu0 0
    %511 = vmatpush1.bf16.msra.mxu0 0
    %512 = vmatprep.subr.bf16.mxu0 0
    %513 = vmatpush1.bf16.msra.mxu0 0
    %514 = vmatprep.subr.bf16.mxu0 0
    %515 = vmatpush1.bf16.msra.mxu0 0
    %516 = vmatprep.mubr.bf16.mxu0 0
    %517 = vmatmul.mubr.bf16.gmra.mrb[0].mxu0 %v482
    %v518 = vpop.f32.mrb[0].mxu0
    %v519 = vadd.f32 0.0, %v518
    %v520 = vpop.f32.mrb[0].mxu0
    %v521 = vpop.f32.mrb[0].mxu0
    %v522 = vpop.f32.mrb[0].mxu0
    %523 = vdwg.mxu0
    %v525 = vrot.slane %v519, 6
    %v527 = vadd.f32 %v236, %v525
    %v528 = vpack.c.bf16 %v476, %v476
    %v530 = vrot.slane %v528, 3
    %531 = vrot.lane.b32.xlu0 %v530, 32
    %v532 = vpop.permute.xlu0 %531
    %v534 = vsel %vm129, %v532, 0
    %536 = vmatprep.subr.bf16.mxu0 0
    %537 = vmatpush1.bf16.msra.mxu0 %v381
    %538 = vmatprep.subr.bf16.mxu0 0
    %539 = vmatpush1.bf16.msra.mxu0 %v382
    %540 = vmatprep.subr.bf16.mxu0 0
    %541 = vmatpush1.bf16.msra.mxu0 0
    %542 = vmatprep.subr.bf16.mxu0 0
    %543 = vmatpush1.bf16.msra.mxu0 0
    %544 = vmatprep.subr.bf16.mxu0 0
    %545 = vmatpush1.bf16.msra.mxu0 0
    %546 = vmatprep.subr.bf16.mxu0 0
    %547 = vmatpush1.bf16.msra.mxu0 0
    %548 = vmatprep.subr.bf16.mxu0 0
    %549 = vmatpush1.bf16.msra.mxu0 0
    %550 = vmatprep.subr.bf16.mxu0 0
    %551 = vmatpush1.bf16.msra.mxu0 0
    %552 = vmatprep.subr.bf16.mxu0 0
    %553 = vmatpush1.bf16.msra.mxu0 0
    %554 = vmatprep.subr.bf16.mxu0 0
    %555 = vmatpush1.bf16.msra.mxu0 0
    %556 = vmatprep.subr.bf16.mxu0 0
    %557 = vmatpush1.bf16.msra.mxu0 0
    %558 = vmatprep.subr.bf16.mxu0 0
    %559 = vmatpush1.bf16.msra.mxu0 0
    %560 = vmatprep.subr.bf16.mxu0 0
    %561 = vmatpush1.bf16.msra.mxu0 0
    %562 = vmatprep.subr.bf16.mxu0 0
    %563 = vmatpush1.bf16.msra.mxu0 0
    %564 = vmatprep.subr.bf16.mxu0 0
    %565 = vmatpush1.bf16.msra.mxu0 0
    %566 = vmatprep.subr.bf16.mxu0 0
    %567 = vmatpush1.bf16.msra.mxu0 0
    %568 = vmatprep.mubr.bf16.mxu0 0
    %569 = vmatmul.mubr.bf16.gmra.mrb[0].mxu0 %v534
    %v570 = vpop.f32.mrb[0].mxu0
    %v571 = vadd.f32 0.0, %v570
    %v572 = vpop.f32.mrb[0].mxu0
    %v573 = vpop.f32.mrb[0].mxu0
    %v574 = vpop.f32.mrb[0].mxu0
    %575 = vdwg.mxu0
    %v577 = vrot.slane %v571, 4
    %v579 = vadd.f32 %v305, %v577
    %v580 = vxor.u32 %v527, 2147483648
    %v581 = vmul.f32 %v580, 1.442695
    %v582 = vpow.pop %v581
    %v583 = vadd.f32 %v582, 1.0
    %v584 = vrcp.pop %v583
    %v585 = vmul.f32 1.0, %v584
    %v586 = vtanh.pop %v527
    %v588 = vrot.slane %v446, 6
    %v590 = vmul.f32 %v585, %v588
    %592 = vrot.lane.b32.xlu0 %v586, 64
    %v593 = vpop.permute.xlu0 %592
    %v595 = vmul.f32 %v585, %v593
    %597 = vrot.lane.b32.xlu0 %v595, 32
    %v598 = vpop.permute.xlu0 %597
    %v600 = vadd.f32 %v590, %v598
    %v601 = vtanh.pop %v600
    %603 = vrot.lane.b32.xlu0 %v601, 64
    %v604 = vpop.permute.xlu0 %603
    %v606 = vmul.f32 %v585, %v604
    %v607 = vxor.u32 %v579, 2147483648
    %v608 = vmul.f32 %v607, 1.442695
    %v609 = vpow.pop %v608
    %v610 = vadd.f32 %v609, 1.0
    %v611 = vrcp.pop %v610
    %v612 = vmul.f32 1.0, %v611
    %v613 = vtanh.pop %v579
    %v615 = vrot.slane %v470, 2
    %v617 = vmul.f32 %v612, %v615
    %619 = vrot.lane.b32.xlu0 %v613, 64
    %v620 = vpop.permute.xlu0 %619
    %v622 = vmul.f32 %v612, %v620
    %624 = vrot.lane.b32.xlu0 %v622, 32
    %v625 = vpop.permute.xlu0 %624
    %v627 = vadd.f32 %v617, %v625
    %v628 = vtanh.pop %v627
    %630 = vrot.lane.b32.xlu0 %v628, 64
    %v631 = vpop.permute.xlu0 %630
    %v633 = vmul.f32 %v612, %v631
    %v634 = vpack.c.bf16 %v606, %v606
    %v636 = vrot.slane %v634, 1
    %637 = vrot.lane.b32.xlu0 %v636, 32
    %v638 = vpop.permute.xlu0 %637
    %v640 = vsel %vm129, %v638, 0
    %642 = vmatprep.subr.bf16.mxu0 0
    %643 = vmatpush1.bf16.msra.mxu0 %v325
    %644 = vmatprep.subr.bf16.mxu0 0
    %645 = vmatpush1.bf16.msra.mxu0 %v326
    %646 = vmatprep.subr.bf16.mxu0 0
    %647 = vmatpush1.bf16.msra.mxu0 0
    %648 = vmatprep.subr.bf16.mxu0 0
    %649 = vmatpush1.bf16.msra.mxu0 0
    %650 = vmatprep.subr.bf16.mxu0 0
    %651 = vmatpush1.bf16.msra.mxu0 0
    %652 = vmatprep.subr.bf16.mxu0 0
    %653 = vmatpush1.bf16.msra.mxu0 0
    %654 = vmatprep.subr.bf16.mxu0 0
    %655 = vmatpush1.bf16.msra.mxu0 0
    %656 = vmatprep.subr.bf16.mxu0 0
    %657 = vmatpush1.bf16.msra.mxu0 0
    %658 = vmatprep.subr.bf16.mxu0 0
    %659 = vmatpush1.bf16.msra.mxu0 0
    %660 = vmatprep.subr.bf16.mxu0 0
    %661 = vmatpush1.bf16.msra.mxu0 0
    %662 = vmatprep.subr.bf16.mxu0 0
    %663 = vmatpush1.bf16.msra.mxu0 0
    %664 = vmatprep.subr.bf16.mxu0 0
    %665 = vmatpush1.bf16.msra.mxu0 0
    %666 = vmatprep.subr.bf16.mxu0 0
    %667 = vmatpush1.bf16.msra.mxu0 0
    %668 = vmatprep.subr.bf16.mxu0 0
    %669 = vmatpush1.bf16.msra.mxu0 0
    %670 = vmatprep.subr.bf16.mxu0 0
    %671 = vmatpush1.bf16.msra.mxu0 0
    %672 = vmatprep.subr.bf16.mxu0 0
    %673 = vmatpush1.bf16.msra.mxu0 0
    %674 = vmatprep.mubr.bf16.mxu0 0
    %675 = vmatmul.mubr.bf16.gmra.mrb[0].mxu0 %v640
    %v676 = vpop.f32.mrb[0].mxu0
    %v677 = vadd.f32 0.0, %v676
    %v678 = vpop.f32.mrb[0].mxu0
    %v679 = vpop.f32.mrb[0].mxu0
    %v680 = vpop.f32.mrb[0].mxu0
    %681 = vdwg.mxu0
    %v683 = vrot.slane %v677, 4
    %v685 = vadd.f32 %v236, %v683
    %v686 = vpack.c.bf16 %v633, %v633
    %v688 = vrot.slane %v686, 2
    %689 = vrot.lane.b32.xlu0 %v688, 32
    %v690 = vpop.permute.xlu0 %689
    %v692 = vsel %vm129, %v690, 0
    %694 = vmatprep.subr.bf16.mxu0 0
    %695 = vmatpush1.bf16.msra.mxu0 %v381
    %696 = vmatprep.subr.bf16.mxu0 0
    %697 = vmatpush1.bf16.msra.mxu0 %v382
    %698 = vmatprep.subr.bf16.mxu0 0
    %699 = vmatpush1.bf16.msra.mxu0 0
    %700 = vmatprep.subr.bf16.mxu0 0
    %701 = vmatpush1.bf16.msra.mxu0 0
    %702 = vmatprep.subr.bf16.mxu0 0
    %703 = vmatpush1.bf16.msra.mxu0 0
    %704 = vmatprep.subr.bf16.mxu0 0
    %705 = vmatpush1.bf16.msra.mxu0 0
    %706 = vmatprep.subr.bf16.mxu0 0
    %707 = vmatpush1.bf16.msra.mxu0 0
    %708 = vmatprep.subr.bf16.mxu0 0
    %709 = vmatpush1.bf16.msra.mxu0 0
    %710 = vmatprep.subr.bf16.mxu0 0
    %711 = vmatpush1.bf16.msra.mxu0 0
    %712 = vmatprep.subr.bf16.mxu0 0
    %713 = vmatpush1.bf16.msra.mxu0 0
    %714 = vmatprep.subr.bf16.mxu0 0
    %715 = vmatpush1.bf16.msra.mxu0 0
    %716 = vmatprep.subr.bf16.mxu0 0
    %717 = vmatpush1.bf16.msra.mxu0 0
    %718 = vmatprep.subr.bf16.mxu0 0
    %719 = vmatpush1.bf16.msra.mxu0 0
    %720 = vmatprep.subr.bf16.mxu0 0
    %721 = vmatpush1.bf16.msra.mxu0 0
    %722 = vmatprep.subr.bf16.mxu0 0
    %723 = vmatpush1.bf16.msra.mxu0 0
    %724 = vmatprep.subr.bf16.mxu0 0
    %725 = vmatpush1.bf16.msra.mxu0 0
    %726 = vmatprep.mubr.bf16.mxu0 0
    %727 = vmatmul.mubr.bf16.gmra.mrb[0].mxu0 %v692
    %v728 = vpop.f32.mrb[0].mxu0
    %v729 = vadd.f32 0.0, %v728
    %v730 = vpop.f32.mrb[0].mxu0
    %v731 = vpop.f32.mrb[0].mxu0
    %v732 = vpop.f32.mrb[0].mxu0
    %733 = vdwg.mxu0
    %v735 = vrot.slane %v729, 6
    %v737 = vadd.f32 %v305, %v735
    %v738 = vxor.u32 %v685, 2147483648
    %v739 = vmul.f32 %v738, 1.442695
    %v740 = vpow.pop %v739
    %v741 = vadd.f32 %v740, 1.0
    %v742 = vrcp.pop %v741
    %v743 = vmul.f32 1.0, %v742
    %v744 = vtanh.pop %v685
    %v746 = vrot.slane %v600, 6
    %v748 = vmul.f32 %v743, %v746
    %750 = vrot.lane.b32.xlu0 %v744, 64
    %v751 = vpop.permute.xlu0 %750
    %v753 = vmul.f32 %v743, %v751
    %755 = vrot.lane.b32.xlu0 %v753, 32
    %v756 = vpop.permute.xlu0 %755
    %v758 = vadd.f32 %v748, %v756
    %v759 = vtanh.pop %v758
    %761 = vrot.lane.b32.xlu0 %v759, 64
    %v762 = vpop.permute.xlu0 %761
    %v764 = vmul.f32 %v743, %v762
    %v765 = vxor.u32 %v737, 2147483648
    %v766 = vmul.f32 %v765, 1.442695
    %v767 = vpow.pop %v766
    %v768 = vadd.f32 %v767, 1.0
    %v769 = vrcp.pop %v768
    %v770 = vmul.f32 1.0, %v769
    %v771 = vtanh.pop %v737
    %v773 = vrot.slane %v627, 2
    %v775 = vmul.f32 %v770, %v773
    %777 = vrot.lane.b32.xlu0 %v771, 64
    %v778 = vpop.permute.xlu0 %777
    %v780 = vmul.f32 %v770, %v778
    %782 = vrot.lane.b32.xlu0 %v780, 32
    %v783 = vpop.permute.xlu0 %782
    %v785 = vadd.f32 %v775, %v783
    %v786 = vtanh.pop %v785
    %788 = vrot.lane.b32.xlu0 %v786, 64
    %v789 = vpop.permute.xlu0 %788
    %v791 = vmul.f32 %v770, %v789
    %v792 = vpack.c.bf16 %v764, %v764
    %v794 = vrot.slane %v792, 2
    %795 = vrot.lane.b32.xlu0 %v794, 32
    %v796 = vpop.permute.xlu0 %795
    %v798 = vsel %vm129, %v796, 0
    %800 = vmatprep.subr.bf16.mxu0 0
    %801 = vmatpush1.bf16.msra.mxu0 %v325
    %802 = vmatprep.subr.bf16.mxu0 0
    %803 = vmatpush1.bf16.msra.mxu0 %v326
    %804 = vmatprep.subr.bf16.mxu0 0
    %805 = vmatpush1.bf16.msra.mxu0 0
    %806 = vmatprep.subr.bf16.mxu0 0
    %807 = vmatpush1.bf16.msra.mxu0 0
    %808 = vmatprep.subr.bf16.mxu0 0
    %809 = vmatpush1.bf16.msra.mxu0 0
    %810 = vmatprep.subr.bf16.mxu0 0
    %811 = vmatpush1.bf16.msra.mxu0 0
    %812 = vmatprep.subr.bf16.mxu0 0
    %813 = vmatpush1.bf16.msra.mxu0 0
    %814 = vmatprep.subr.bf16.mxu0 0
    %815 = vmatpush1.bf16.msra.mxu0 0
    %816 = vmatprep.subr.bf16.mxu0 0
    %817 = vmatpush1.bf16.msra.mxu0 0
    %818 = vmatprep.subr.bf16.mxu0 0
    %819 = vmatpush1.bf16.msra.mxu0 0
    %820 = vmatprep.subr.bf16.mxu0 0
    %821 = vmatpush1.bf16.msra.mxu0 0
    %822 = vmatprep.subr.bf16.mxu0 0
    %823 = vmatpush1.bf16.msra.mxu0 0
    %824 = vmatprep.subr.bf16.mxu0 0
    %825 = vmatpush1.bf16.msra.mxu0 0
    %826 = vmatprep.subr.bf16.mxu0 0
    %827 = vmatpush1.bf16.msra.mxu0 0
    %828 = vmatprep.subr.bf16.mxu0 0
    %829 = vmatpush1.bf16.msra.mxu0 0
    %830 = vmatprep.subr.bf16.mxu0 0
    %831 = vmatpush1.bf16.msra.mxu0 0
    %832 = vmatprep.mubr.bf16.mxu0 0
    %833 = vmatmul.mubr.bf16.gmra.mrb[0].mxu0 %v798
    %v834 = vpop.f32.mrb[0].mxu0
    %v835 = vadd.f32 0.0, %v834
    %v836 = vpop.f32.mrb[0].mxu0
    %v837 = vpop.f32.mrb[0].mxu0
    %v838 = vpop.f32.mrb[0].mxu0
    %839 = vdwg.mxu0
    %v841 = vrot.slane %v835, 2
    %v843 = vadd.f32 %v236, %v841
    %v844 = vpack.c.bf16 %v791, %v791
    %v846 = vrot.slane %v844, 1
    %847 = vrot.lane.b32.xlu0 %v846, 32
    %v848 = vpop.permute.xlu0 %847
    %v850 = vsel %vm129, %v848, 0
    %852 = vmatprep.subr.bf16.mxu0 0
    %853 = vmatpush1.bf16.msra.mxu0 %v381
    %854 = vmatprep.subr.bf16.mxu0 0
    %855 = vmatpush1.bf16.msra.mxu0 %v382
    %856 = vmatprep.subr.bf16.mxu0 0
    %857 = vmatpush1.bf16.msra.mxu0 0
    %858 = vmatprep.subr.bf16.mxu0 0
    %859 = vmatpush1.bf16.msra.mxu0 0
    %860 = vmatprep.subr.bf16.mxu0 0
    %861 = vmatpush1.bf16.msra.mxu0 0
    %862 = vmatprep.subr.bf16.mxu0 0
    %863 = vmatpush1.bf16.msra.mxu0 0
    %864 = vmatprep.subr.bf16.mxu0 0
    %865 = vmatpush1.bf16.msra.mxu0 0
    %866 = vmatprep.subr.bf16.mxu0 0
    %867 = vmatpush1.bf16.msra.mxu0 0
    %868 = vmatprep.subr.bf16.mxu0 0
    %869 = vmatpush1.bf16.msra.mxu0 0
    %870 = vmatprep.subr.bf16.mxu0 0
    %871 = vmatpush1.bf16.msra.mxu0 0
    %872 = vmatprep.subr.bf16.mxu0 0
    %873 = vmatpush1.bf16.msra.mxu0 0
    %874 = vmatprep.subr.bf16.mxu0 0
    %875 = vmatpush1.bf16.msra.mxu0 0
    %876 = vmatprep.subr.bf16.mxu0 0
    %877 = vmatpush1.bf16.msra.mxu0 0
    %878 = vmatprep.subr.bf16.mxu0 0
    %879 = vmatpush1.bf16.msra.mxu0 0
    %880 = vmatprep.subr.bf16.mxu0 0
    %881 = vmatpush1.bf16.msra.mxu0 0
    %882 = vmatprep.subr.bf16.mxu0 0
    %883 = vmatpush1.bf16.msra.mxu0 0
    %884 = vmatprep.mubr.bf16.mxu0 0
    %885 = vmatmul.mubr.bf16.gmra.mrb[0].mxu0 %v850
    %v886 = vpop.f32.mrb[0].mxu0
    %v887 = vadd.f32 0.0, %v886
    %v888 = vpop.f32.mrb[0].mxu0
    %v889 = vpop.f32.mrb[0].mxu0
    %v890 = vpop.f32.mrb[0].mxu0
    %891 = vdwg.mxu0
    %v892 = vadd.f32 %v305, %v887
    %v893 = vxor.u32 %v843, 2147483648
    %v894 = vmul.f32 %v893, 1.442695
    %v895 = vpow.pop %v894
    %v896 = vadd.f32 %v895, 1.0
    %v897 = vrcp.pop %v896
    %v898 = vmul.f32 1.0, %v897
    %v899 = vtanh.pop %v843
    %v901 = vrot.slane %v758, 6
    %v903 = vmul.f32 %v898, %v901
    %905 = vrot.lane.b32.xlu0 %v899, 64
    %v906 = vpop.permute.xlu0 %905
    %v908 = vmul.f32 %v898, %v906
    %910 = vrot.lane.b32.xlu0 %v908, 32
    %v911 = vpop.permute.xlu0 %910
    %v913 = vadd.f32 %v903, %v911
    %v914 = vtanh.pop %v913
    %916 = vrot.lane.b32.xlu0 %v914, 64
    %v917 = vpop.permute.xlu0 %916
    %v919 = vmul.f32 %v898, %v917
    %v920 = vxor.u32 %v892, 2147483648
    %v921 = vmul.f32 %v920, 1.442695
    %v922 = vpow.pop %v921
    %v923 = vadd.f32 %v922, 1.0
    %v924 = vrcp.pop %v923
    %v925 = vmul.f32 1.0, %v924
    %v926 = vtanh.pop %v892
    %v928 = vrot.slane %v785, 2
    %v930 = vmul.f32 %v925, %v928
    %932 = vrot.lane.b32.xlu0 %v926, 64
    %v933 = vpop.permute.xlu0 %932
    %v935 = vmul.f32 %v925, %v933
    %937 = vrot.lane.b32.xlu0 %v935, 32
    %v938 = vpop.permute.xlu0 %937
    %v940 = vadd.f32 %v930, %v938
    %v941 = vtanh.pop %v940
    %943 = vrot.lane.b32.xlu0 %v941, 64
    %v944 = vpop.permute.xlu0 %943
    %v946 = vmul.f32 %v925, %v944
    %v947 = vpack.c.bf16 %v919, %v919
    %v949 = vrot.slane %v947, 3
    %950 = vrot.lane.b32.xlu0 %v949, 32
    %v951 = vpop.permute.xlu0 %950
    %v953 = vsel %vm129, %v951, 0
    %955 = vmatprep.subr.bf16.mxu0 0
    %956 = vmatpush1.bf16.msra.mxu0 %v325
    %957 = vmatprep.subr.bf16.mxu0 0
    %958 = vmatpush1.bf16.msra.mxu0 %v326
    %959 = vmatprep.subr.bf16.mxu0 0
    %960 = vmatpush1.bf16.msra.mxu0 0
    %961 = vmatprep.subr.bf16.mxu0 0
    %962 = vmatpush1.bf16.msra.mxu0 0
    %963 = vmatprep.subr.bf16.mxu0 0
    %964 = vmatpush1.bf16.msra.mxu0 0
    %965 = vmatprep.subr.bf16.mxu0 0
    %966 = vmatpush1.bf16.msra.mxu0 0
    %967 = vmatprep.subr.bf16.mxu0 0
    %968 = vmatpush1.bf16.msra.mxu0 0
    %969 = vmatprep.subr.bf16.mxu0 0
    %970 = vmatpush1.bf16.msra.mxu0 0
    %971 = vmatprep.subr.bf16.mxu0 0
    %972 = vmatpush1.bf16.msra.mxu0 0
    %973 = vmatprep.subr.bf16.mxu0 0
    %974 = vmatpush1.bf16.msra.mxu0 0
    %975 = vmatprep.subr.bf16.mxu0 0
    %976 = vmatpush1.bf16.msra.mxu0 0
    %977 = vmatprep.subr.bf16.mxu0 0
    %978 = vmatpush1.bf16.msra.mxu0 0
    %979 = vmatprep.subr.bf16.mxu0 0
    %980 = vmatpush1.bf16.msra.mxu0 0
    %981 = vmatprep.subr.bf16.mxu0 0
    %982 = vmatpush1.bf16.msra.mxu0 0
    %983 = vmatprep.subr.bf16.mxu0 0
    %984 = vmatpush1.bf16.msra.mxu0 0
    %985 = vmatprep.subr.bf16.mxu0 0
    %986 = vmatpush1.bf16.msra.mxu0 0
    %987 = vmatprep.mubr.bf16.mxu0 0
    %988 = vmatmul.mubr.bf16.gmra.mrb[0].mxu0 %v953
    %v989 = vpop.f32.mrb[0].mxu0
    %v990 = vadd.f32 0.0, %v989
    %v991 = vpop.f32.mrb[0].mxu0
    %v992 = vpop.f32.mrb[0].mxu0
    %v993 = vpop.f32.mrb[0].mxu0
    %994 = vdwg.mxu0
    %v995 = vadd.f32 %v239, %v990
    %v996 = vpack.c.bf16 %v946, %v946
    %998 = vrot.lane.b32.xlu0 %v996, 32
    %v999 = vpop.permute.xlu0 %998
    %v1001 = vsel %vm129, %v999, 0
    %1003 = vmatprep.subr.bf16.mxu0 0
    %1004 = vmatpush1.bf16.msra.mxu0 %v381
    %1005 = vmatprep.subr.bf16.mxu0 0
    %1006 = vmatpush1.bf16.msra.mxu0 %v382
    %1007 = vmatprep.subr.bf16.mxu0 0
    %1008 = vmatpush1.bf16.msra.mxu0 0
    %1009 = vmatprep.subr.bf16.mxu0 0
    %1010 = vmatpush1.bf16.msra.mxu0 0
    %1011 = vmatprep.subr.bf16.mxu0 0
    %1012 = vmatpush1.bf16.msra.mxu0 0
    %1013 = vmatprep.subr.bf16.mxu0 0
    %1014 = vmatpush1.bf16.msra.mxu0 0
    %1015 = vmatprep.subr.bf16.mxu0 0
    %1016 = vmatpush1.bf16.msra.mxu0 0
    %1017 = vmatprep.subr.bf16.mxu0 0
    %1018 = vmatpush1.bf16.msra.mxu0 0
    %1019 = vmatprep.subr.bf16.mxu0 0
    %1020 = vmatpush1.bf16.msra.mxu0 0
    %1021 = vmatprep.subr.bf16.mxu0 0
    %1022 = vmatpush1.bf16.msra.mxu0 0
    %1023 = vmatprep.subr.bf16.mxu0 0
    %1024 = vmatpush1.bf16.msra.mxu0 0
    %1025 = vmatprep.subr.bf16.mxu0 0
    %1026 = vmatpush1.bf16.msra.mxu0 0
    %1027 = vmatprep.subr.bf16.mxu0 0
    %1028 = vmatpush1.bf16.msra.mxu0 0
    %1029 = vmatprep.subr.bf16.mxu0 0
    %1030 = vmatpush1.bf16.msra.mxu0 0
    %1031 = vmatprep.subr.bf16.mxu0 0
    %1032 = vmatpush1.bf16.msra.mxu0 0
    %1033 = vmatprep.subr.bf16.mxu0 0
    %1034 = vmatpush1.bf16.msra.mxu0 0
    %1035 = vmatprep.mubr.bf16.mxu0 0
    %1036 = vmatmul.mubr.bf16.gmra.mrb[0].mxu0 %v1001
    %v1037 = vpop.f32.mrb[0].mxu0
    %v1038 = vadd.f32 0.0, %v1037
    %v1039 = vpop.f32.mrb[0].mxu0
    %v1040 = vpop.f32.mrb[0].mxu0
    %v1041 = vpop.f32.mrb[0].mxu0
    %1042 = vdwg.mxu0
    %v1044 = vrot.slane %v1038, 2
    %v1046 = vadd.f32 %v302, %v1044
    %v1047 = vxor.u32 %v995, 2147483648
    %v1048 = vmul.f32 %v1047, 1.442695
    %v1049 = vpow.pop %v1048
    %v1050 = vadd.f32 %v1049, 1.0
    %v1051 = vrcp.pop %v1050
    %v1052 = vmul.f32 1.0, %v1051
    %v1053 = vtanh.pop %v995
    %v1055 = vrot.slane %v913, 6
    %v1057 = vmul.f32 %v1052, %v1055
    %1059 = vrot.lane.b32.xlu0 %v1053, 64
    %v1060 = vpop.permute.xlu0 %1059
    %v1062 = vmul.f32 %v1052, %v1060
    %1064 = vrot.lane.b32.xlu0 %v1062, 32
    %v1065 = vpop.permute.xlu0 %1064
    %v1067 = vadd.f32 %v1057, %v1065
    %v1068 = vtanh.pop %v1067
    %1070 = vrot.lane.b32.xlu0 %v1068, 64
    %v1071 = vpop.permute.xlu0 %1070
    %v1073 = vmul.f32 %v1052, %v1071
    %v1074 = vxor.u32 %v1046, 2147483648
    %v1075 = vmul.f32 %v1074, 1.442695
    %v1076 = vpow.pop %v1075
    %v1077 = vadd.f32 %v1076, 1.0
    %v1078 = vrcp.pop %v1077
    %v1079 = vmul.f32 1.0, %v1078
    %v1080 = vtanh.pop %v1046
    %v1082 = vrot.slane %v940, 2
    %v1084 = vmul.f32 %v1079, %v1082
    %1086 = vrot.lane.b32.xlu0 %v1080, 64
    %v1087 = vpop.permute.xlu0 %1086
    %v1089 = vmul.f32 %v1079, %v1087
    %1091 = vrot.lane.b32.xlu0 %v1089, 32
    %v1092 = vpop.permute.xlu0 %1091
    %v1094 = vadd.f32 %v1084, %v1092
    %v1095 = vtanh.pop %v1094
    %1097 = vrot.lane.b32.xlu0 %v1095, 64
    %v1098 = vpop.permute.xlu0 %1097
    %v1100 = vmul.f32 %v1079, %v1098
    %v1101 = vpack.c.bf16 %v1073, %v1073
    %1103 = vrot.lane.b32.xlu0 %v1101, 32
    %v1104 = vpop.permute.xlu0 %1103
    %v1106 = vsel %vm129, %v1104, 0
    %1108 = vmatprep.subr.bf16.mxu0 0
    %1109 = vmatpush1.bf16.msra.mxu0 %v325
    %1110 = vmatprep.subr.bf16.mxu0 0
    %1111 = vmatpush1.bf16.msra.mxu0 %v326
    %1112 = vmatprep.subr.bf16.mxu0 0
    %1113 = vmatpush1.bf16.msra.mxu0 0
    %1114 = vmatprep.subr.bf16.mxu0 0
    %1115 = vmatpush1.bf16.msra.mxu0 0
    %1116 = vmatprep.subr.bf16.mxu0 0
    %1117 = vmatpush1.bf16.msra.mxu0 0
    %1118 = vmatprep.subr.bf16.mxu0 0
    %1119 = vmatpush1.bf16.msra.mxu0 0
    %1120 = vmatprep.subr.bf16.mxu0 0
    %1121 = vmatpush1.bf16.msra.mxu0 0
    %1122 = vmatprep.subr.bf16.mxu0 0
    %1123 = vmatpush1.bf16.msra.mxu0 0
    %1124 = vmatprep.subr.bf16.mxu0 0
    %1125 = vmatpush1.bf16.msra.mxu0 0
    %1126 = vmatprep.subr.bf16.mxu0 0
    %1127 = vmatpush1.bf16.msra.mxu0 0
    %1128 = vmatprep.subr.bf16.mxu0 0
    %1129 = vmatpush1.bf16.msra.mxu0 0
    %1130 = vmatprep.subr.bf16.mxu0 0
    %1131 = vmatpush1.bf16.msra.mxu0 0
    %1132 = vmatprep.subr.bf16.mxu0 0
    %1133 = vmatpush1.bf16.msra.mxu0 0
    %1134 = vmatprep.subr.bf16.mxu0 0
    %1135 = vmatpush1.bf16.msra.mxu0 0
    %1136 = vmatprep.subr.bf16.mxu0 0
    %1137 = vmatpush1.bf16.msra.mxu0 0
    %1138 = vmatprep.subr.bf16.mxu0 0
    %1139 = vmatpush1.bf16.msra.mxu0 0
    %1140 = vmatprep.mubr.bf16.mxu0 0
    %1141 = vmatmul.mubr.bf16.gmra.mrb[0].mxu0 %v1106
    %v1142 = vpop.f32.mrb[0].mxu0
    %v1143 = vadd.f32 0.0, %v1142
    %v1144 = vpop.f32.mrb[0].mxu0
    %v1145 = vpop.f32.mrb[0].mxu0
    %v1146 = vpop.f32.mrb[0].mxu0
    %1147 = vdwg.mxu0
    %v1149 = vrot.slane %v1143, 6
    %v1151 = vadd.f32 %v239, %v1149
    %v1152 = vpack.c.bf16 %v1100, %v1100
    %v1154 = vrot.slane %v1152, 3
    %1155 = vrot.lane.b32.xlu0 %v1154, 32
    %v1156 = vpop.permute.xlu0 %1155
    %v1158 = vsel %vm129, %v1156, 0
    %1160 = vmatprep.subr.bf16.mxu0 0
    %1161 = vmatpush1.bf16.msra.mxu0 %v381
    %1162 = vmatprep.subr.bf16.mxu0 0
    %1163 = vmatpush1.bf16.msra.mxu0 %v382
    %1164 = vmatprep.subr.bf16.mxu0 0
    %1165 = vmatpush1.bf16.msra.mxu0 0
    %1166 = vmatprep.subr.bf16.mxu0 0
    %1167 = vmatpush1.bf16.msra.mxu0 0
    %1168 = vmatprep.subr.bf16.mxu0 0
    %1169 = vmatpush1.bf16.msra.mxu0 0
    %1170 = vmatprep.subr.bf16.mxu0 0
    %1171 = vmatpush1.bf16.msra.mxu0 0
    %1172 = vmatprep.subr.bf16.mxu0 0
    %1173 = vmatpush1.bf16.msra.mxu0 0
    %1174 = vmatprep.subr.bf16.mxu0 0
    %1175 = vmatpush1.bf16.msra.mxu0 0
    %1176 = vmatprep.subr.bf16.mxu0 0
    %1177 = vmatpush1.bf16.msra.mxu0 0
    %1178 = vmatprep.subr.bf16.mxu0 0
    %1179 = vmatpush1.bf16.msra.mxu0 0
    %1180 = vmatprep.subr.bf16.mxu0 0
    %1181 = vmatpush1.bf16.msra.mxu0 0
    %1182 = vmatprep.subr.bf16.mxu0 0
    %1183 = vmatpush1.bf16.msra.mxu0 0
    %1184 = vmatprep.subr.bf16.mxu0 0
    %1185 = vmatpush1.bf16.msra.mxu0 0
    %1186 = vmatprep.subr.bf16.mxu0 0
    %1187 = vmatpush1.bf16.msra.mxu0 0
    %1188 = vmatprep.subr.bf16.mxu0 0
    %1189 = vmatpush1.bf16.msra.mxu0 0
    %1190 = vmatprep.subr.bf16.mxu0 0
    %1191 = vmatpush1.bf16.msra.mxu0 0
    %1192 = vmatprep.mubr.bf16.mxu0 0
    %1193 = vmatmul.mubr.bf16.gmra.mrb[0].mxu0 %v1158
    %v1194 = vpop.f32.mrb[0].mxu0
    %v1195 = vadd.f32 0.0, %v1194
    %v1196 = vpop.f32.mrb[0].mxu0
    %v1197 = vpop.f32.mrb[0].mxu0
    %v1198 = vpop.f32.mrb[0].mxu0
    %1199 = vdwg.mxu0
    %v1201 = vrot.slane %v1195, 4
    %v1203 = vadd.f32 %v302, %v1201
    %v1204 = vxor.u32 %v1151, 2147483648
    %v1205 = vmul.f32 %v1204, 1.442695
    %v1206 = vpow.pop %v1205
    %v1207 = vadd.f32 %v1206, 1.0
    %v1208 = vrcp.pop %v1207
    %v1209 = vmul.f32 1.0, %v1208
    %v1210 = vtanh.pop %v1151
    %v1212 = vrot.slane %v1067, 6
    %v1214 = vmul.f32 %v1209, %v1212
    %1216 = vrot.lane.b32.xlu0 %v1210, 64
    %v1217 = vpop.permute.xlu0 %1216
    %v1219 = vmul.f32 %v1209, %v1217
    %1221 = vrot.lane.b32.xlu0 %v1219, 32
    %v1222 = vpop.permute.xlu0 %1221
    %v1224 = vadd.f32 %v1214, %v1222
    %v1225 = vtanh.pop %v1224
    %1227 = vrot.lane.b32.xlu0 %v1225, 64
    %v1228 = vpop.permute.xlu0 %1227
    %v1230 = vmul.f32 %v1209, %v1228
    %v1231 = vxor.u32 %v1203, 2147483648
    %v1232 = vmul.f32 %v1231, 1.442695
    %v1233 = vpow.pop %v1232
    %v1234 = vadd.f32 %v1233, 1.0
    %v1235 = vrcp.pop %v1234
    %v1236 = vmul.f32 1.0, %v1235
    %v1237 = vtanh.pop %v1203
    %v1239 = vrot.slane %v1094, 2
    %v1241 = vmul.f32 %v1236, %v1239
    %1243 = vrot.lane.b32.xlu0 %v1237, 64
    %v1244 = vpop.permute.xlu0 %1243
    %v1246 = vmul.f32 %v1236, %v1244
    %1248 = vrot.lane.b32.xlu0 %v1246, 32
    %v1249 = vpop.permute.xlu0 %1248
    %v1251 = vadd.f32 %v1241, %v1249
    %v1252 = vtanh.pop %v1251
    %1254 = vrot.lane.b32.xlu0 %v1252, 64
    %v1255 = vpop.permute.xlu0 %1254
    %v1257 = vmul.f32 %v1236, %v1255
    %v1258 = vpack.c.bf16 %v1230, %v1230
    %v1260 = vrot.slane %v1258, 1
    %1261 = vrot.lane.b32.xlu0 %v1260, 32
    %v1262 = vpop.permute.xlu0 %1261
    %v1264 = vsel %vm129, %v1262, 0
    %1266 = vmatprep.subr.bf16.mxu0 0
    %1267 = vmatpush1.bf16.msra.mxu0 %v325
    %1268 = vmatprep.subr.bf16.mxu0 0
    %1269 = vmatpush1.bf16.msra.mxu0 %v326
    %1270 = vmatprep.subr.bf16.mxu0 0
    %1271 = vmatpush1.bf16.msra.mxu0 0
    %1272 = vmatprep.subr.bf16.mxu0 0
    %1273 = vmatpush1.bf16.msra.mxu0 0
    %1274 = vmatprep.subr.bf16.mxu0 0
    %1275 = vmatpush1.bf16.msra.mxu0 0
    %1276 = vmatprep.subr.bf16.mxu0 0
    %1277 = vmatpush1.bf16.msra.mxu0 0
    %1278 = vmatprep.subr.bf16.mxu0 0
    %1279 = vmatpush1.bf16.msra.mxu0 0
    %1280 = vmatprep.subr.bf16.mxu0 0
    %1281 = vmatpush1.bf16.msra.mxu0 0
    %1282 = vmatprep.subr.bf16.mxu0 0
    %1283 = vmatpush1.bf16.msra.mxu0 0
    %1284 = vmatprep.subr.bf16.mxu0 0
    %1285 = vmatpush1.bf16.msra.mxu0 0
    %1286 = vmatprep.subr.bf16.mxu0 0
    %1287 = vmatpush1.bf16.msra.mxu0 0
    %1288 = vmatprep.subr.bf16.mxu0 0
    %1289 = vmatpush1.bf16.msra.mxu0 0
    %1290 = vmatprep.subr.bf16.mxu0 0
    %1291 = vmatpush1.bf16.msra.mxu0 0
    %1292 = vmatprep.subr.bf16.mxu0 0
    %1293 = vmatpush1.bf16.msra.mxu0 0
    %1294 = vmatprep.subr.bf16.mxu0 0
    %1295 = vmatpush1.bf16.msra.mxu0 0
    %1296 = vmatprep.subr.bf16.mxu0 0
    %1297 = vmatpush1.bf16.msra.mxu0 0
    %1298 = vmatprep.mubr.bf16.mxu0 0
    %1299 = vmatmul.mubr.bf16.gmra.mrb[0].mxu0 %v1264
    %v1300 = vpop.f32.mrb[0].mxu0
    %v1301 = vadd.f32 0.0, %v1300
    %v1302 = vpop.f32.mrb[0].mxu0
    %v1303 = vpop.f32.mrb[0].mxu0
    %v1304 = vpop.f32.mrb[0].mxu0
    %1305 = vdwg.mxu0
    %v1307 = vrot.slane %v1301, 4
    %v1309 = vadd.f32 %v239, %v1307
    %v1310 = vpack.c.bf16 %v1257, %v1257
    %v1312 = vrot.slane %v1310, 2
    %1313 = vrot.lane.b32.xlu0 %v1312, 32
    %v1314 = vpop.permute.xlu0 %1313
    %v1316 = vsel %vm129, %v1314, 0
    %1318 = vmatprep.subr.bf16.mxu0 0
    %1319 = vmatpush1.bf16.msra.mxu0 %v381
    %1320 = vmatprep.subr.bf16.mxu0 0
    %1321 = vmatpush1.bf16.msra.mxu0 %v382
    %1322 = vmatprep.subr.bf16.mxu0 0
    %1323 = vmatpush1.bf16.msra.mxu0 0
    %1324 = vmatprep.subr.bf16.mxu0 0
    %1325 = vmatpush1.bf16.msra.mxu0 0
    %1326 = vmatprep.subr.bf16.mxu0 0
    %1327 = vmatpush1.bf16.msra.mxu0 0
    %1328 = vmatprep.subr.bf16.mxu0 0
    %1329 = vmatpush1.bf16.msra.mxu0 0
    %1330 = vmatprep.subr.bf16.mxu0 0
    %1331 = vmatpush1.bf16.msra.mxu0 0
    %1332 = vmatprep.subr.bf16.mxu0 0
    %1333 = vmatpush1.bf16.msra.mxu0 0
    %1334 = vmatprep.subr.bf16.mxu0 0
    %1335 = vmatpush1.bf16.msra.mxu0 0
    %1336 = vmatprep.subr.bf16.mxu0 0
    %1337 = vmatpush1.bf16.msra.mxu0 0
    %1338 = vmatprep.subr.bf16.mxu0 0
    %1339 = vmatpush1.bf16.msra.mxu0 0
    %1340 = vmatprep.subr.bf16.mxu0 0
    %1341 = vmatpush1.bf16.msra.mxu0 0
    %1342 = vmatprep.subr.bf16.mxu0 0
    %1343 = vmatpush1.bf16.msra.mxu0 0
    %1344 = vmatprep.subr.bf16.mxu0 0
    %1345 = vmatpush1.bf16.msra.mxu0 0
    %1346 = vmatprep.subr.bf16.mxu0 0
    %1347 = vmatpush1.bf16.msra.mxu0 0
    %1348 = vmatprep.subr.bf16.mxu0 0
    %1349 = vmatpush1.bf16.msra.mxu0 0
    %1350 = vmatprep.mubr.bf16.mxu0 0
    %1351 = vmatmul.mubr.bf16.gmra.mrb[0].mxu0 %v1316
    %v1352 = vpop.f32.mrb[0].mxu0
    %v1353 = vadd.f32 0.0, %v1352
    %v1354 = vpop.f32.mrb[0].mxu0
    %v1355 = vpop.f32.mrb[0].mxu0
    %v1356 = vpop.f32.mrb[0].mxu0
    %1357 = vdwg.mxu0
    %v1359 = vrot.slane %v1353, 6
    %v1361 = vadd.f32 %v302, %v1359
    %v1362 = vxor.u32 %v1309, 2147483648
    %v1363 = vmul.f32 %v1362, 1.442695
    %v1364 = vpow.pop %v1363
    %v1365 = vadd.f32 %v1364, 1.0
    %v1366 = vrcp.pop %v1365
    %v1367 = vmul.f32 1.0, %v1366
    %v1368 = vtanh.pop %v1309
    %v1370 = vrot.slane %v1224, 6
    %v1372 = vmul.f32 %v1367, %v1370
    %1374 = vrot.lane.b32.xlu0 %v1368, 64
    %v1375 = vpop.permute.xlu0 %1374
    %v1377 = vmul.f32 %v1367, %v1375
    %1379 = vrot.lane.b32.xlu0 %v1377, 32
    %v1380 = vpop.permute.xlu0 %1379
    %v1382 = vadd.f32 %v1372, %v1380
    %v1383 = vtanh.pop %v1382
    %1385 = vrot.lane.b32.xlu0 %v1383, 64
    %v1386 = vpop.permute.xlu0 %1385
    %v1388 = vmul.f32 %v1367, %v1386
    %v1389 = vxor.u32 %v1361, 2147483648
    %v1390 = vmul.f32 %v1389, 1.442695
    %v1391 = vpow.pop %v1390
    %v1392 = vadd.f32 %v1391, 1.0
    %v1393 = vrcp.pop %v1392
    %v1394 = vmul.f32 1.0, %v1393
    %v1395 = vtanh.pop %v1361
    %v1397 = vrot.slane %v1251, 2
    %v1399 = vmul.f32 %v1394, %v1397
    %1401 = vrot.lane.b32.xlu0 %v1395, 64
    %v1402 = vpop.permute.xlu0 %1401
    %v1404 = vmul.f32 %v1394, %v1402
    %1406 = vrot.lane.b32.xlu0 %v1404, 32
    %v1407 = vpop.permute.xlu0 %1406
    %v1409 = vadd.f32 %v1399, %v1407
    %v1410 = vtanh.pop %v1409
    %1412 = vrot.lane.b32.xlu0 %v1410, 64
    %v1413 = vpop.permute.xlu0 %1412
    %v1415 = vmul.f32 %v1394, %v1413
    %v1416 = vpack.c.bf16 %v1388, %v1388
    %v1418 = vrot.slane %v1416, 2
    %1419 = vrot.lane.b32.xlu0 %v1418, 32
    %v1420 = vpop.permute.xlu0 %1419
    %v1422 = vsel %vm129, %v1420, 0
    %1424 = vmatprep.subr.bf16.mxu0 0
    %1425 = vmatpush1.bf16.msra.mxu0 %v325
    %1426 = vmatprep.subr.bf16.mxu0 0
    %1427 = vmatpush1.bf16.msra.mxu0 %v326
    %1428 = vmatprep.subr.bf16.mxu0 0
    %1429 = vmatpush1.bf16.msra.mxu0 0
    %1430 = vmatprep.subr.bf16.mxu0 0
    %1431 = vmatpush1.bf16.msra.mxu0 0
    %1432 = vmatprep.subr.bf16.mxu0 0
    %1433 = vmatpush1.bf16.msra.mxu0 0
    %1434 = vmatprep.subr.bf16.mxu0 0
    %1435 = vmatpush1.bf16.msra.mxu0 0
    %1436 = vmatprep.subr.bf16.mxu0 0
    %1437 = vmatpush1.bf16.msra.mxu0 0
    %1438 = vmatprep.subr.bf16.mxu0 0
    %1439 = vmatpush1.bf16.msra.mxu0 0
    %1440 = vmatprep.subr.bf16.mxu0 0
    %1441 = vmatpush1.bf16.msra.mxu0 0
    %1442 = vmatprep.subr.bf16.mxu0 0
    %1443 = vmatpush1.bf16.msra.mxu0 0
    %1444 = vmatprep.subr.bf16.mxu0 0
    %1445 = vmatpush1.bf16.msra.mxu0 0
    %1446 = vmatprep.subr.bf16.mxu0 0
    %1447 = vmatpush1.bf16.msra.mxu0 0
    %1448 = vmatprep.subr.bf16.mxu0 0
    %1449 = vmatpush1.bf16.msra.mxu0 0
    %1450 = vmatprep.subr.bf16.mxu0 0
    %1451 = vmatpush1.bf16.msra.mxu0 0
    %1452 = vmatprep.subr.bf16.mxu0 0
    %1453 = vmatpush1.bf16.msra.mxu0 0
    %1454 = vmatprep.subr.bf16.mxu0 0
    %1455 = vmatpush1.bf16.msra.mxu0 0
    %1456 = vmatprep.mubr.bf16.mxu0 0
    %1457 = vmatmul.mubr.bf16.gmra.mrb[0].mxu0 %v1422
    %v1458 = vpop.f32.mrb[0].mxu0
    %v1459 = vadd.f32 0.0, %v1458
    %v1460 = vpop.f32.mrb[0].mxu0
    %v1461 = vpop.f32.mrb[0].mxu0
    %v1462 = vpop.f32.mrb[0].mxu0
    %1463 = vdwg.mxu0
    %v1465 = vrot.slane %v1459, 2
    %v1467 = vadd.f32 %v239, %v1465
    %v1468 = vpack.c.bf16 %v1415, %v1415
    %v1470 = vrot.slane %v1468, 1
    %1471 = vrot.lane.b32.xlu0 %v1470, 32
    %v1472 = vpop.permute.xlu0 %1471
    %v1474 = vsel %vm129, %v1472, 0
    %1476 = vmatprep.subr.bf16.mxu0 0
    %1477 = vmatpush1.bf16.msra.mxu0 %v381
    %1478 = vmatprep.subr.bf16.mxu0 0
    %1479 = vmatpush1.bf16.msra.mxu0 %v382
    %1480 = vmatprep.subr.bf16.mxu0 0
    %1481 = vmatpush1.bf16.msra.mxu0 0
    %1482 = vmatprep.subr.bf16.mxu0 0
    %1483 = vmatpush1.bf16.msra.mxu0 0
    %1484 = vmatprep.subr.bf16.mxu0 0
    %1485 = vmatpush1.bf16.msra.mxu0 0
    %1486 = vmatprep.subr.bf16.mxu0 0
    %1487 = vmatpush1.bf16.msra.mxu0 0
    %1488 = vmatprep.subr.bf16.mxu0 0
    %1489 = vmatpush1.bf16.msra.mxu0 0
    %1490 = vmatprep.subr.bf16.mxu0 0
    %1491 = vmatpush1.bf16.msra.mxu0 0
    %1492 = vmatprep.subr.bf16.mxu0 0
    %1493 = vmatpush1.bf16.msra.mxu0 0
    %1494 = vmatprep.subr.bf16.mxu0 0
    %1495 = vmatpush1.bf16.msra.mxu0 0
    %1496 = vmatprep.subr.bf16.mxu0 0
    %1497 = vmatpush1.bf16.msra.mxu0 0
    %1498 = vmatprep.subr.bf16.mxu0 0
    %1499 = vmatpush1.bf16.msra.mxu0 0
    %1500 = vmatprep.subr.bf16.mxu0 0
    %1501 = vmatpush1.bf16.msra.mxu0 0
    %1502 = vmatprep.subr.bf16.mxu0 0
    %1503 = vmatpush1.bf16.msra.mxu0 0
    %1504 = vmatprep.subr.bf16.mxu0 0
    %1505 = vmatpush1.bf16.msra.mxu0 0
    %1506 = vmatprep.subr.bf16.mxu0 0
    %1507 = vmatpush1.bf16.msra.mxu0 0
    %1508 = vmatprep.mubr.bf16.mxu0 0
    %1509 = vmatmul.mubr.bf16.gmra.mrb[0].mxu0 %v1474
    %v1510 = vpop.f32.mrb[0].mxu0
    %v1511 = vadd.f32 0.0, %v1510
    %v1512 = vpop.f32.mrb[0].mxu0
    %v1513 = vpop.f32.mrb[0].mxu0
    %v1514 = vpop.f32.mrb[0].mxu0
    %1515 = vdwg.mxu0
    %v1516 = vadd.f32 %v302, %v1511
    %v1517 = vxor.u32 %v1467, 2147483648
    %v1518 = vmul.f32 %v1517, 1.442695
    %v1519 = vpow.pop %v1518
    %v1520 = vadd.f32 %v1519, 1.0
    %v1521 = vrcp.pop %v1520
    %v1522 = vmul.f32 1.0, %v1521
    %v1523 = vtanh.pop %v1467
    %v1525 = vrot.slane %v1382, 6
    %v1527 = vmul.f32 %v1522, %v1525
    %1529 = vrot.lane.b32.xlu0 %v1523, 64
    %v1530 = vpop.permute.xlu0 %1529
    %v1532 = vmul.f32 %v1522, %v1530
    %1534 = vrot.lane.b32.xlu0 %v1532, 32
    %v1535 = vpop.permute.xlu0 %1534
    %v1537 = vadd.f32 %v1527, %v1535
    %v1538 = vtanh.pop %v1537
    %1540 = vrot.lane.b32.xlu0 %v1538, 64
    %v1541 = vpop.permute.xlu0 %1540
    %v1543 = vmul.f32 %v1522, %v1541
    %v1544 = vxor.u32 %v1516, 2147483648
    %v1545 = vmul.f32 %v1544, 1.442695
    %v1546 = vpow.pop %v1545
    %v1547 = vadd.f32 %v1546, 1.0
    %v1548 = vrcp.pop %v1547
    %v1549 = vmul.f32 1.0, %v1548
    %v1550 = vtanh.pop %v1516
    %v1552 = vrot.slane %v1409, 2
    %v1554 = vmul.f32 %v1549, %v1552
    %1556 = vrot.lane.b32.xlu0 %v1550, 64
    %v1557 = vpop.permute.xlu0 %1556
    %v1559 = vmul.f32 %v1549, %v1557
    %1561 = vrot.lane.b32.xlu0 %v1559, 32
    %v1562 = vpop.permute.xlu0 %1561
    %v1564 = vadd.f32 %v1554, %v1562
    %v1565 = vtanh.pop %v1564
    %1567 = vrot.lane.b32.xlu0 %v1565, 64
    %v1568 = vpop.permute.xlu0 %1567
    %v1570 = vmul.f32 %v1549, %v1568
    %v1571 = vld [vmem:[%s6] sm:$0xff]
    %v1572 = vld [vmem:[%s6 + $0x8] sm:$0xff]
    %v1573 = vld [vmem:[%s6 + $0x10] sm:$0xff]
    %v1574 = vld [vmem:[%s6 + $0x18] sm:$0xff]
    %v1575 = vld [vmem:[%s6 + $0x20] sm:$0xff]
    %v1576 = vld [vmem:[%s6 + $0x28] sm:$0xff]
    %v1577 = vld [vmem:[%s6 + $0x30] sm:$0xff]
    %v1578 = vld [vmem:[%s6 + $0x38] sm:$0xff]
    %1580 = vrot.lane.b32.xlu0 %v1570, 32
    %v1581 = vpop.permute.xlu0 %1580
    %v1582 = vsel %vm129, %v1581, 0
    %1584 = vmatprep.subr.mxu0 0.0
    %1585 = vmatpush1.msra.mxu0 %v1575
    %1586 = vmatprep.subr.mxu0 0.0
    %1587 = vmatpush1.msra.mxu0 %v1576
    %1588 = vmatprep.subr.mxu0 0.0
    %1589 = vmatpush1.msra.mxu0 %v1577
    %1590 = vmatprep.subr.mxu0 0.0
    %1591 = vmatpush1.msra.mxu0 %v1578
    %1592 = vmatprep.subr.mxu0 0.0
    %1593 = vmatpush1.msra.mxu0 0.0
    %1594 = vmatprep.subr.mxu0 0.0
    %1595 = vmatpush1.msra.mxu0 0.0
    %1596 = vmatprep.subr.mxu0 0.0
    %1597 = vmatpush1.msra.mxu0 0.0
    %1598 = vmatprep.subr.mxu0 0.0
    %1599 = vmatpush1.msra.mxu0 0.0
    %1600 = vmatprep.subr.mxu0 0.0
    %1601 = vmatpush1.msra.mxu0 0.0
    %1602 = vmatprep.subr.mxu0 0.0
    %1603 = vmatpush1.msra.mxu0 0.0
    %1604 = vmatprep.subr.mxu0 0.0
    %1605 = vmatpush1.msra.mxu0 0.0
    %1606 = vmatprep.subr.mxu0 0.0
    %1607 = vmatpush1.msra.mxu0 0.0
    %1608 = vmatprep.subr.mxu0 0.0
    %1609 = vmatpush1.msra.mxu0 0.0
    %1610 = vmatprep.subr.mxu0 0.0
    %1611 = vmatpush1.msra.mxu0 0.0
    %1612 = vmatprep.subr.mxu0 0.0
    %1613 = vmatpush1.msra.mxu0 0.0
    %1614 = vmatprep.subr.mxu0 0.0
    %1615 = vmatpush1.msra.mxu0 0.0
    %1616 = vmatprep.subr.mxu0 0.0
    %1617 = vmatpush1.msra.mxu0 0.0
    %1618 = vmatprep.subr.mxu0 0.0
    %1619 = vmatpush1.msra.mxu0 0.0
    %1620 = vmatprep.subr.mxu0 0.0
    %1621 = vmatpush1.msra.mxu0 0.0
    %1622 = vmatprep.subr.mxu0 0.0
    %1623 = vmatpush1.msra.mxu0 0.0
    %1624 = vmatprep.subr.mxu0 0.0
    %1625 = vmatpush1.msra.mxu0 0.0
    %1626 = vmatprep.subr.mxu0 0.0
    %1627 = vmatpush1.msra.mxu0 0.0
    %1628 = vmatprep.subr.mxu0 0.0
    %1629 = vmatpush1.msra.mxu0 0.0
    %1630 = vmatprep.subr.mxu0 0.0
    %1631 = vmatpush1.msra.mxu0 0.0
    %1632 = vmatprep.subr.mxu0 0.0
    %1633 = vmatpush1.msra.mxu0 0.0
    %1634 = vmatprep.subr.mxu0 0.0
    %1635 = vmatpush1.msra.mxu0 0.0
    %1636 = vmatprep.subr.mxu0 0.0
    %1637 = vmatpush1.msra.mxu0 0.0
    %1638 = vmatprep.subr.mxu0 0.0
    %1639 = vmatpush1.msra.mxu0 0.0
    %1640 = vmatprep.subr.mxu0 0.0
    %1641 = vmatpush1.msra.mxu0 0.0
    %1642 = vmatprep.subr.mxu0 0.0
    %1643 = vmatpush1.msra.mxu0 0.0
    %1644 = vmatprep.subr.mxu0 0.0
    %1645 = vmatpush1.msra.mxu0 0.0
    %1646 = vmatprep.subr.mxu0 0.0
    %1647 = vmatpush1.msra.mxu0 0.0
    %1648 = vmatprep.mubr.f32.mxu0 0.0
    %1649 = vmatmul.mubr.f32.gmra.mrb[0].mxu0 %v1582
    %v1650 = vpop.f32.mrb[0].mxu0
    %v1651 = vadd.f32 0.0, %v1650
    %v1652 = vpop.f32.mrb[0].mxu0
    %1653 = vdwg.mxu0
    %v1655 = vrot.slane %v1543, 6
    %1656 = vrot.lane.b32.xlu0 %v1655, 32
    %v1657 = vpop.permute.xlu0 %1656
    %v1658 = vsel %vm129, %v1657, 0
    %1660 = vmatprep.subr.mxu0 0.0
    %1661 = vmatpush1.msra.mxu0 %v1571
    %1662 = vmatprep.subr.mxu0 0.0
    %1663 = vmatpush1.msra.mxu0 %v1572
    %1664 = vmatprep.subr.mxu0 0.0
    %1665 = vmatpush1.msra.mxu0 %v1573
    %1666 = vmatprep.subr.mxu0 0.0
    %1667 = vmatpush1.msra.mxu0 %v1574
    %1668 = vmatprep.subr.mxu0 0.0
    %1669 = vmatpush1.msra.mxu0 0.0
    %1670 = vmatprep.subr.mxu0 0.0
    %1671 = vmatpush1.msra.mxu0 0.0
    %1672 = vmatprep.subr.mxu0 0.0
    %1673 = vmatpush1.msra.mxu0 0.0
    %1674 = vmatprep.subr.mxu0 0.0
    %1675 = vmatpush1.msra.mxu0 0.0
    %1676 = vmatprep.subr.mxu0 0.0
    %1677 = vmatpush1.msra.mxu0 0.0
    %1678 = vmatprep.subr.mxu0 0.0
    %1679 = vmatpush1.msra.mxu0 0.0
    %1680 = vmatprep.subr.mxu0 0.0
    %1681 = vmatpush1.msra.mxu0 0.0
    %1682 = vmatprep.subr.mxu0 0.0
    %1683 = vmatpush1.msra.mxu0 0.0
    %1684 = vmatprep.subr.mxu0 0.0
    %1685 = vmatpush1.msra.mxu0 0.0
    %1686 = vmatprep.subr.mxu0 0.0
    %1687 = vmatpush1.msra.mxu0 0.0
    %1688 = vmatprep.subr.mxu0 0.0
    %1689 = vmatpush1.msra.mxu0 0.0
    %1690 = vmatprep.subr.mxu0 0.0
    %1691 = vmatpush1.msra.mxu0 0.0
    %1692 = vmatprep.subr.mxu0 0.0
    %1693 = vmatpush1.msra.mxu0 0.0
    %1694 = vmatprep.subr.mxu0 0.0
    %1695 = vmatpush1.msra.mxu0 0.0
    %1696 = vmatprep.subr.mxu0 0.0
    %1697 = vmatpush1.msra.mxu0 0.0
    %1698 = vmatprep.subr.mxu0 0.0
    %1699 = vmatpush1.msra.mxu0 0.0
    %1700 = vmatprep.subr.mxu0 0.0
    %1701 = vmatpush1.msra.mxu0 0.0
    %1702 = vmatprep.subr.mxu0 0.0
    %1703 = vmatpush1.msra.mxu0 0.0
    %1704 = vmatprep.subr.mxu0 0.0
    %1705 = vmatpush1.msra.mxu0 0.0
    %1706 = vmatprep.subr.mxu0 0.0
    %1707 = vmatpush1.msra.mxu0 0.0
    %1708 = vmatprep.subr.mxu0 0.0
    %1709 = vmatpush1.msra.mxu0 0.0
    %1710 = vmatprep.subr.mxu0 0.0
    %1711 = vmatpush1.msra.mxu0 0.0
    %1712 = vmatprep.subr.mxu0 0.0
    %1713 = vmatpush1.msra.mxu0 0.0
    %1714 = vmatprep.subr.mxu0 0.0
    %1715 = vmatpush1.msra.mxu0 0.0
    %1716 = vmatprep.subr.mxu0 0.0
    %1717 = vmatpush1.msra.mxu0 0.0
    %1718 = vmatprep.subr.mxu0 0.0
    %1719 = vmatpush1.msra.mxu0 0.0
    %1720 = vmatprep.subr.mxu0 0.0
    %1721 = vmatpush1.msra.mxu0 0.0
    %1722 = vmatprep.subr.mxu0 0.0
    %1723 = vmatpush1.msra.mxu0 0.0
    %1724 = vmatprep.mubr.f32.mxu0 0.0
    %1725 = vmatmul.mubr.f32.gmra.mrb[0].mxu0 %v1658
    %v1726 = vpop.f32.mrb[0].mxu0
    %v1727 = vadd.f32 %v1651, %v1726
    %v1728 = vpop.f32.mrb[0].mxu0
    %1729 = vdwg.mxu0
    %v1730 = vld [vmem:[%s7] sm:$0x1]
    %v1732 = vlaneseq
    %v1733 = vshrl.u32 %v1732, 7
    %v1734 = vsub.s32 0, %v1733
    %v1735 = vrot.slane %v1730, %v1734
    %v1737 = vadd.f32 %v1727, %v1735
    %vm1738 = vcmask 25600
    %1739 = vst.msk [vmem:[#allocation2] sm:$0x3] %vm1738, %v1737
    // Predicated region
    $region34: #{_lambda_.5} parent=1 // pred_check
      _
    $region35: #{_lambda_.5} parent=1 // pred_check_branch
      %1741 = sbr.rel (0) target = $region37
    $region36: #{_lambda_.5} parent=1 // pred_region
      %s1743 = ssub.s32 32, 32
      %1744 = vsyncadd [#allocation3], %s1743
      %s1746 = sshll.u32 [#allocation2], 4
      %s1747 = int_to_ptr.vmem [resolvable:$true] %s1746
      %1749 = dma.vmem_to_hbm [thread:$0]  %s1747, 32, %s8, [#allocation3]
    $region37: #{_lambda_.5} parent=1 // pred_fallthru
      _
    // Predicated region
    $region38: #{_lambda_.5} parent=1 // pred_check
      _
    $region39: #{_lambda_.5} parent=1 // pred_check_branch
      %1751 = sbr.rel (0) target = $region41
    $region40: #{_lambda_.5} parent=1 // pred_region
      %1752 = dma.done [#allocation3], 32
    $region41: #{_lambda_.5} parent=1 // pred_fallthru
      _
    %1753 = vsyncpa [#allocation3], 1

</llo_original>
